<compile_context>
chip_gen: v5e
topology: v5e:2x2
jax: 0.10.0
libtpu: 0.0.40
codegen_flags: <defaults>
</compile_context>

<pallas_src>
import functools
import math

import jax
import jax.numpy as jnp
from jax import lax
from jax.experimental import pallas as pl
from jax.experimental.pallas import tpu as pltpu


# ----------------------------------------------------------------------------
# small in-kernel helpers (pure jnp, traced inside Pallas bodies)
# ----------------------------------------------------------------------------
def _bdot(a, w):
    """bf16 MXU matmul with f32 accumulation (w is already bf16)."""
    return jnp.dot(a.astype(jnp.bfloat16), w, preferred_element_type=jnp.float32)


def _fdot(a, b):
    return jnp.dot(a, b, preferred_element_type=jnp.float32)


def _silu(v):
    # sigmoid denominator reciprocal on the EUP slot (off the VALU path)
    return v * pl.reciprocal(1.0 + jnp.exp(-v), approx=True)


def _ln(x, g, b, eps):
    mu = jnp.mean(x, axis=-1, keepdims=True)
    var = jnp.mean((x - mu) * (x - mu), axis=-1, keepdims=True)
    return (x - mu) * lax.rsqrt(var + eps) * g + b


# ----------------------------------------------------------------------------
# Pallas kernels
# ----------------------------------------------------------------------------
def _embed_kernel(p_ref, w_ref, b_ref, add_ref, xo_ref, *, n_tok):
    """PatchEmbed matmul + cls-token prepend + pos_embed add, one batch row."""
    f32 = jnp.float32
    tok = _bdot(p_ref[...], w_ref[...]) + b_ref[...]          # (N, D)
    L = n_tok + 1
    ei = lax.broadcasted_iota(jnp.int32, (L, n_tok), 0)
    ej = lax.broadcasted_iota(jnp.int32, (L, n_tok), 1)
    put = (ei == ej + 1).astype(f32)                          # row 0 left for cls
    # add_ref row 0 already holds cls_token + pos_embed[0]
    xo_ref[...] = _fdot(put, tok) + add_ref[...]


def _mamba_block_kernel(x_ref, res_ref, ng_ref, nb_ref,
                        wxf_ref, wxb_ref, wzf_ref, wzb_ref,
                        cw_ref, cb_ref,
                        wdt_ref, wB_ref, wC_ref,
                        wdtp_ref, bdtp_ref,
                        At_ref, Dpk_ref, wout_ref,
                        rep_ref, smf_ref, smb_ref,
                        xo_ref, ro_ref, y_sc,
                        *, L, d_state, d_inner, d_conv, eps):
    """One full bidirectional Mamba block for one batch element."""
    f32 = jnp.float32
    S = d_state
    DI2 = 2 * d_inner                                         # lane-packed width

    # ---- residual add + LayerNorm -------------------------------------
    res = x_ref[...] + res_ref[...]                           # (L, D)
    h = _ln(res, ng_ref[...], nb_ref[...], eps)

    # ---- time-reversal matrix (L, L): rev @ v flips a sequence --------
    ri = lax.broadcasted_iota(jnp.int32, (L, L), 0)
    rj = lax.broadcasted_iota(jnp.int32, (L, L), 1)
    rev = (ri + rj == L - 1).astype(f32)
    hrev = _fdot(rev, h)                                      # flipped tokens

    # ---- in_proj, fwd/bwd lane-packed to 2*d_inner lanes --------------
    # lanes [0:d_inner] = forward stream, [d_inner:2*d_inner] = flipped stream
    xs = _bdot(h, wxf_ref[...]) + _bdot(hrev, wxb_ref[...])   # (L, DI2)
    z = _bdot(h, wzf_ref[...]) + _bdot(hrev, wzb_ref[...])    # (L, DI2)

    # ---- depthwise causal conv (shift-matrix form, no padding) + SiLU -
    cw = cw_ref[...]                                          # (K, DI2)
    acc = jnp.zeros((L, DI2), f32)
    for k in range(d_conv):
        off = k - (d_conv - 1)                                # <= 0 (causal)
        sh = (rj == ri + off).astype(f32)                     # (L, L) shift
        acc = acc + _fdot(sh, xs) * cw[k:k + 1, :]
    u = _silu(acc + cb_ref[...])                              # (L, DI2)

    # ---- x_proj / dt_proj (block-diagonal packed weights) -------------
    dt_in = _bdot(u, wdt_ref[...])                            # (L, 2*dt_rank)
    Bp = _bdot(u, wB_ref[...])                                # (L, 2*d_state)
    Cp = _bdot(u, wC_ref[...])                                # (L, 2*d_state)
    dt_raw = _fdot(dt_in, wdtp_ref[...]) + bdtp_ref[...]      # (L, DI2)
    dt = jnp.maximum(dt_raw, 0.0) + jnp.log(1.0 + jnp.exp(-jnp.abs(dt_raw)))

    # ---- hoisted scan precompute (all vectorised over L) --------------
    rep = rep_ref[...]                                        # (L*S, L) 0/1
    lane = lax.broadcasted_iota(jnp.int32, (1, DI2), 1)
    lane_f = (lane < d_inner).astype(f32)
    lane_b = 1.0 - lane_f

    dt_rep = _fdot(rep, dt)                                   # (L*S, DI2)
    dtu_rep = _fdot(rep, dt * u)
    dA = jnp.exp(dt_rep * At_ref[...])                        # (L*S, DI2)

    Brep = _fdot(rep, Bp)                                     # (L*S, 2S)
    Crep = _fdot(rep, Cp)
    smf = smf_ref[...]
    smb = smb_ref[...]
    b_f = jnp.sum(Brep * smf, axis=-1, keepdims=True)         # (L*S, 1)
    b_b = jnp.sum(Brep * smb, axis=-1, keepdims=True)
    c_f = jnp.sum(Crep * smf, axis=-1, keepdims=True)
    c_b = jnp.sum(Crep * smb, axis=-1, keepdims=True)
    Bb = b_f * lane_f + b_b * lane_b                          # (L*S, DI2)
    Cb = c_f * lane_f + c_b * lane_b
    dBu = dtu_rep * Bb

    # ---- serial selective scan: body = h = dA*h + dBu, plus C-reduce --
    hstate = jnp.zeros((S, DI2), f32)
    for t in range(L):                                        # static unroll
        lo = t * S
        hstate = dA[lo:lo + S, :] * hstate + dBu[lo:lo + S, :]
        y_sc[pl.ds(t, 1), :] = jnp.sum(hstate * Cb[lo:lo + S, :],
                                       axis=0, keepdims=True)

    y = (y_sc[...] + Dpk_ref[...] * u) * _silu(z)             # (L, DI2)

    # ---- combine directions (bimamba v2, /2) + out_proj ----------------
    t_fwd = _bdot(y * lane_f, wout_ref[...])                  # (L, D)
    t_bwd = _bdot(y * lane_b, wout_ref[...])                  # (L, D), flipped t
    xo_ref[...] = 0.5 * (t_fwd + _fdot(rev, t_bwd))
    ro_ref[...] = res


def _head_first_kernel(xc_ref, rc_ref, nfg_ref, nfb_ref, l0g_ref, l0b_ref,
                       w1_ref, b1_ref, o_ref):
    """final residual add + backbone norm_f + classifier LN0 + Linear1."""
    r = xc_ref[...] + rc_ref[...]
    feat = _ln(r, nfg_ref[...], nfb_ref[...], 1e-5)
    c = _ln(feat, l0g_ref[...], l0b_ref[...], 1e-6)
    o_ref[...] = _fdot(c, w1_ref[...]) + b1_ref[...]


def _ln_linear_kernel(x_ref, g_ref, b_ref, w_ref, bias_ref, o_ref):
    c = _ln(x_ref[...], g_ref[...], b_ref[...], 1e-6)
    o_ref[...] = _fdot(c, w_ref[...]) + bias_ref[...]


# ----------------------------------------------------------------------------
# pallas_call wrappers
# ----------------------------------------------------------------------------
def _bs2(shape):
    return pl.BlockSpec(shape, lambda b: (0, 0))


def patch_embed(patches, pk, cfg):
    B, N, PP = patches.shape
    D = cfg["embed_dim"]
    L = N + 1
    return pl.pallas_call(
        functools.partial(_embed_kernel, n_tok=N),
        out_shape=jax.ShapeDtypeStruct((B, L, D), jnp.float32),
        grid=(B,),
        in_specs=[
            pl.BlockSpec((None, N, PP), lambda b: (b, 0, 0)),
            _bs2((PP, D)), _bs2((1, D)), _bs2((L, D)),
        ],
        out_specs=pl.BlockSpec((None, L, D), lambda b: (b, 0, 0)),
        compiler_params=pltpu.CompilerParams(dimension_semantics=("parallel",)),
    )(patches, pk["patch_w"], pk["patch_b"], pk["embed_add"])


def mamba_block_call(x, res, blk, pk, cfg):
    B, L, D = x.shape
    d_inner, d_state = cfg["d_inner"], cfg["d_state"]
    dt_rank, d_conv = cfg["dt_rank"], cfg["d_conv"]
    DI2 = 2 * d_inner
    kern = functools.partial(_mamba_block_kernel, L=L, d_state=d_state,
                             d_inner=d_inner, d_conv=d_conv, eps=1e-5)
    tok_spec = pl.BlockSpec((None, L, D), lambda b: (b, 0, 0))
    in_specs = [
        tok_spec, tok_spec,
        _bs2((1, D)), _bs2((1, D)),
        _bs2((D, DI2)), _bs2((D, DI2)), _bs2((D, DI2)), _bs2((D, DI2)),
        _bs2((d_conv, DI2)), _bs2((1, DI2)),
        _bs2((DI2, 2 * dt_rank)), _bs2((DI2, 2 * d_state)), _bs2((DI2, 2 * d_state)),
        _bs2((2 * dt_rank, DI2)), _bs2((1, DI2)),
        _bs2((L * d_state, DI2)), _bs2((1, DI2)),
        _bs2((DI2, D)),
        _bs2((L * d_state, L)),
        _bs2((L * d_state, 2 * d_state)), _bs2((L * d_state, 2 * d_state)),
    ]
    out_shape = (jax.ShapeDtypeStruct((B, L, D), jnp.float32),
                 jax.ShapeDtypeStruct((B, L, D), jnp.float32))
    return pl.pallas_call(
        kern,
        out_shape=out_shape,
        grid=(B,),
        in_specs=in_specs,
        out_specs=(tok_spec, tok_spec),
        scratch_shapes=[pltpu.VMEM((L, DI2), jnp.float32)],
        compiler_params=pltpu.CompilerParams(dimension_semantics=("parallel",)),
    )(x, res,
      blk["norm_g"], blk["norm_b"],
      blk["wx_f"], blk["wx_b"], blk["wz_f"], blk["wz_b"],
      blk["conv_w"], blk["conv_b"],
      blk["w_dt"], blk["w_B"], blk["w_C"],
      blk["w_dtp"], blk["b_dtp"],
      blk["A_tiled"], blk["D"],
      blk["w_out"],
      pk["rep"], pk["smask_f"], pk["smask_b"])


def head_first(xc, rc, pk):
    B, D = xc.shape
    hid = pk["c_w1"].shape[1]
    return pl.pallas_call(
        _head_first_kernel,
        out_shape=jax.ShapeDtypeStruct((B, hid), jnp.float32),
        grid=(1,),
        in_specs=[_bs2((B, D)), _bs2((B, D)),
                  _bs2((1, D)), _bs2((1, D)), _bs2((1, D)), _bs2((1, D)),
                  _bs2((D, hid)), _bs2((1, hid))],
        out_specs=_bs2((B, hid)),
        compiler_params=pltpu.CompilerParams(dimension_semantics=("arbitrary",)),
    )(xc, rc, pk["norm_f_g"], pk["norm_f_b"], pk["c_ln0_g"], pk["c_ln0_b"],
      pk["c_w1"], pk["c_b1"])


def ln_linear(x, g, b, w, bias):
    B, Din = x.shape
    Dout = w.shape[1]
    return pl.pallas_call(
        _ln_linear_kernel,
        out_shape=jax.ShapeDtypeStruct((B, Dout), jnp.float32),
        grid=(1,),
        in_specs=[_bs2((B, Din)), _bs2((1, Din)), _bs2((1, Din)),
                  _bs2((Din, Dout)), _bs2((1, Dout))],
        out_specs=_bs2((B, Dout)),
        compiler_params=pltpu.CompilerParams(dimension_semantics=("arbitrary",)),
    )(x, g, b, w, bias)


# ----------------------------------------------------------------------------
# Model forward (thin JAX glue around the fused kernels)
# ----------------------------------------------------------------------------
def model_forward(x, pk, cfg):
    B, C, H, W = x.shape
    P = cfg["patch"]
    Hp, Wp = H // P, W // P
    # PatchEmbed Conv2d(kernel=stride=patch) == im2col + matmul
    patches = (x.reshape(B, C, Hp, P, Wp, P)
                 .transpose(0, 2, 4, 1, 3, 5)
                 .reshape(B, Hp * Wp, C * P * P))
    h = patch_embed(patches, pk, cfg)                 # (B, L, D) cls+pos added
    res = jnp.zeros_like(h)                           # residual starts at 0

    for blk in pk["blocks"]:
        h, res = mamba_block_call(h, res, blk, pk, cfg)

    xc, rc = h[:, 0, :], res[:, 0, :]                 # cls-token row only
    c = head_first(xc, rc, pk)                        # add + norm_f + LN0 + Lin1
    # TODO(synk): exact-erf nn.GELU kept in JAX glue on tiny (B, 16) tensors;
    # erf has no guaranteed Mosaic lowering.  Matmuls / LN remain in Pallas.
    c = jax.nn.gelu(c, approximate=False)
    c = ln_linear(c, pk["c_ln1_g"], pk["c_ln1_b"], pk["c_w2"], pk["c_b2"])
    c = jax.nn.gelu(c, approximate=False)
    c = ln_linear(c, pk["c_ln2_g"], pk["c_ln2_b"], pk["c_w3"], pk["c_b3"])
    return c[:, 0]                                    # squeeze(-1) -> (B,)


# ----------------------------------------------------------------------------
# One-time parameter packing (A = -exp(A_log), fwd/bwd lane packing, bf16)
# ----------------------------------------------------------------------------
def prepare_params(params, cfg):
    f32, bf16 = jnp.float32, jnp.bfloat16
    D = cfg["embed_dim"]
    d_inner, d_state, dt_rank = cfg["d_inner"], cfg["d_state"], cfg["dt_rank"]
    S = d_state
    L = (cfg["img"] // cfg["patch"]) ** 2 + 1

    pk = {
        "patch_w": params["patch_w"].astype(bf16),
        "patch_b": params["patch_b"].reshape(1, -1),
        "embed_add": jnp.concatenate(
            [params["cls_token"][0] + params["pos_embed"][0, :1],
             params["pos_embed"][0, 1:]], axis=0),
        "norm_f_g": params["norm_f_g"].reshape(1, -1),
        "norm_f_b": params["norm_f_b"].reshape(1, -1),
        "c_ln0_g": params["c_ln0_g"].reshape(1, -1),
        "c_ln0_b": params["c_ln0_b"].reshape(1, -1),
        "c_w1": params["c_w1"], "c_b1": params["c_b1"].reshape(1, -1),
        "c_ln1_g": params["c_ln1_g"].reshape(1, -1),
        "c_ln1_b": params["c_ln1_b"].reshape(1, -1),
        "c_w2": params["c_w2"], "c_b2": params["c_b2"].reshape(1, -1),
        "c_ln2_g": params["c_ln2_g"].reshape(1, -1),
        "c_ln2_b": params["c_ln2_b"].reshape(1, -1),
        "c_w3": params["c_w3"], "c_b3": params["c_b3"].reshape(1, -1),
    }
    # scan selector constants (0/1 matrices, depend only on L and d_state)
    row = jnp.arange(L * S)
    pk["rep"] = (row[:, None] // S == jnp.arange(L)[None, :]).astype(f32)
    pk["smask_f"] = ((row % S)[:, None] == jnp.arange(2 * S)[None, :]).astype(f32)
    pk["smask_b"] = ((row % S + S)[:, None] == jnp.arange(2 * S)[None, :]).astype(f32)

    def col_pack(fw, bw):
        zf, zb = jnp.zeros_like(fw), jnp.zeros_like(bw)
        return jnp.concatenate(
            [jnp.concatenate([fw, zb], axis=1),
             jnp.concatenate([zf, bw], axis=1)], axis=0)

    blocks = []
    for blk in params["blocks"]:
        wx = blk["in_proj_w"][:, :d_inner]
        wz = blk["in_proj_w"][:, d_inner:]
        zdd = jnp.zeros((D, d_inner), f32)
        fx, bx = blk["f_x_proj_w"], blk["b_x_proj_w"]
        A_pk = jnp.concatenate([-jnp.exp(blk["f_A_log"]),
                                -jnp.exp(blk["b_A_log"])], axis=1)   # (S, 2*di)
        b = {
            "norm_g": blk["norm_g"].reshape(1, -1),
            "norm_b": blk["norm_b"].reshape(1, -1),
            "wx_f": jnp.concatenate([wx, zdd], axis=1).astype(bf16),
            "wx_b": jnp.concatenate([zdd, wx], axis=1).astype(bf16),
            "wz_f": jnp.concatenate([wz, zdd], axis=1).astype(bf16),
            "wz_b": jnp.concatenate([zdd, wz], axis=1).astype(bf16),
            "conv_w": jnp.concatenate([blk["f_conv_w"], blk["b_conv_w"]], axis=1),
            "conv_b": jnp.concatenate([blk["f_conv_b"],
                                       blk["b_conv_b"]]).reshape(1, -1),
            "w_dt": col_pack(fx[:, :dt_rank], bx[:, :dt_rank]).astype(bf16),
            "w_B": col_pack(fx[:, dt_rank:dt_rank + S],
                            bx[:, dt_rank:dt_rank + S]).astype(bf16),
            "w_C": col_pack(fx[:, dt_rank + S:], bx[:, dt_rank + S:]).astype(bf16),
            "w_dtp": col_pack(blk["f_dt_proj_w"], blk["b_dt_proj_w"]),   # f32
            "b_dtp": jnp.concatenate([blk["f_dt_proj_b"],
                                      blk["b_dt_proj_b"]]).reshape(1, -1),
            "A_tiled": jnp.tile(A_pk, (L, 1)),                            # (L*S, 2*di)
            "D": jnp.concatenate([blk["f_D"], blk["b_D"]]).reshape(1, -1),
            "w_out": jnp.concatenate([blk["out_proj_w"],
                                      blk["out_proj_w"]], axis=0).astype(bf16),
        }
        blocks.append(b)
    pk["blocks"] = blocks
    return pk


# ----------------------------------------------------------------------------
# Deterministic parameter init (synthetic; mirrors the module's init recipe)
# ----------------------------------------------------------------------------
def init_params(key, cfg):
    D = cfg["embed_dim"]
    d_inner, d_state, dt_rank, d_conv = (
        cfg["d_inner"], cfg["d_state"], cfg["dt_rank"], cfg["d_conv"]
    )
    n_patch = (cfg["img"] // cfg["patch"]) ** 2
    in_pix = cfg["in_chans"] * cfg["patch"] * cfg["patch"]
    keys = iter(jax.random.split(key, 512))

    def nrm(shape, std):
        return jax.random.normal(next(keys), shape, jnp.float32) * std

    def kaiming(shape, fan):
        return nrm(shape, (2.0 / fan) ** 0.5)

    def unif1d(shape):
        return jax.random.uniform(next(keys), shape, jnp.float32, -0.1, 0.1)

    p = {
        "patch_w": kaiming((in_pix, D), in_pix),
        "patch_b": jnp.zeros((D,), jnp.float32),
        "cls_token": nrm((1, 1, D), 0.02),
        "pos_embed": nrm((1, n_patch + 1, D), 0.02),
        "norm_f_g": unif1d((D,)),
        "norm_f_b": jnp.zeros((D,), jnp.float32),
    }
    x_proj_out = dt_rank + 2 * d_state
    blocks = []
    for _ in range(cfg["depth"]):
        blk = {
            "norm_g": unif1d((D,)),
            "norm_b": jnp.zeros((D,), jnp.float32),
            "in_proj_w": kaiming((D, 2 * d_inner), 2 * d_inner),
            "out_proj_w": kaiming((d_inner, D), D),
        }
        for pfx in ("f_", "b_"):
            blk[pfx + "conv_w"] = kaiming((d_conv, d_inner), d_conv)
            blk[pfx + "conv_b"] = jnp.zeros((d_inner,), jnp.float32)
            blk[pfx + "x_proj_w"] = kaiming((d_inner, x_proj_out), x_proj_out)
            blk[pfx + "dt_proj_w"] = kaiming((dt_rank, d_inner), d_inner)
            blk[pfx + "dt_proj_b"] = jnp.zeros((d_inner,), jnp.float32)
            # Mamba default S4D-real init (untouched by _init_backbone_weights)
            blk[pfx + "A_log"] = jnp.log(jnp.broadcast_to(
                jnp.arange(1, d_state + 1, dtype=jnp.float32)[:, None],
                (d_state, d_inner)))
            blk[pfx + "D"] = jnp.ones((d_inner,), jnp.float32)
        blocks.append(blk)
    p["blocks"] = blocks

    hid = D // 2
    p["c_ln0_g"] = jnp.ones((D,), jnp.float32); p["c_ln0_b"] = jnp.zeros((D,), jnp.float32)
    p["c_w1"] = kaiming((D, hid), D) * 0.1;      p["c_b1"] = jnp.zeros((hid,), jnp.float32)
    p["c_ln1_g"] = jnp.ones((hid,), jnp.float32); p["c_ln1_b"] = jnp.zeros((hid,), jnp.float32)
    p["c_w2"] = kaiming((hid, hid // 2), hid) * 0.1
    p["c_b2"] = jnp.zeros((hid // 2,), jnp.float32)
    p["c_ln2_g"] = jnp.ones((hid // 2,), jnp.float32)
    p["c_ln2_b"] = jnp.zeros((hid // 2,), jnp.float32)
    p["c_w3"] = kaiming((hid // 2, 1), hid // 2) * 0.1
    p["c_b3"] = jnp.zeros((1,), jnp.float32)
    return p


# ----------------------------------------------------------------------------
if __name__ == "__main__":
    cfg = dict(
        embed_dim=32, depth=2, patch=8, img=16, in_chans=1,
        d_state=8, d_conv=4, d_inner=64, dt_rank=math.ceil(32 / 16),
    )
    key = jax.random.PRNGKey(0)
    kx, kp = jax.random.split(key)
    x = jax.random.normal(kx, (2, 1, 16, 16), jnp.float32)   # NCHW spectrogram
    params = init_params(kp, cfg)
    packed = prepare_params(params, cfg)   # one-time weight packing / bf16 cast

    fwd = jax.jit(lambda xx, pp: model_forward(xx, pp, cfg))
    out = fwd(x, packed)
    out = jax.block_until_ready(out)
    assert out.shape == (2,)
    assert bool(jnp.all(jnp.isfinite(out)))
    print("KERNEL_OK")
</pallas_src>

<mosaic_0001>
module attributes {stable_mosaic.version = 11 : i64} {
  func.func @_embed_kernel(%arg0: i32, %arg1: memref<1x4x64xf32, #tpu.memory_space<vmem>>, %arg2: memref<64x32xbf16, #tpu.memory_space<vmem>>, %arg3: memref<1x32xf32, #tpu.memory_space<vmem>>, %arg4: memref<5x32xf32, #tpu.memory_space<vmem>>, %arg5: memref<1x5x32xf32, #tpu.memory_space<vmem>>) attributes {dimension_semantics = [#tpu.dimension_semantics<parallel>], iteration_bounds = array<i64: 2>, scalar_prefetch = 0 : i64, scratch_operands = 0 : i64, tpu.core_type = #tpu.core_type<tc>, window_params = [{transform_indices = @transform_0, window_bounds = array<i64: 1, 4, 64>}, {pipeline_mode = #tpu.pipeline_mode<synchronous>, transform_indices = @transform_1, window_bounds = array<i64: 64, 32>}, {pipeline_mode = #tpu.pipeline_mode<synchronous>, transform_indices = @transform_2, window_bounds = array<i64: 1, 32>}, {pipeline_mode = #tpu.pipeline_mode<synchronous>, transform_indices = @transform_3, window_bounds = array<i64: 5, 32>}, {transform_indices = @transform_4, window_bounds = array<i64: 1, 5, 32>}]} {
    %c0 = arith.constant 0 : index
    %c0_0 = arith.constant 0 : index
    %c0_1 = arith.constant 0 : index
    %0 = vector.load %arg1[%c0, %c0_0, %c0_1] : memref<1x4x64xf32, #tpu.memory_space<vmem>>, vector<1x4x64xf32>
    %1 = vector.shape_cast %0 : vector<1x4x64xf32> to vector<4x64xf32>
    %c0_2 = arith.constant 0 : index
    %c0_3 = arith.constant 0 : index
    %2 = vector.load %arg2[%c0_2, %c0_3] : memref<64x32xbf16, #tpu.memory_space<vmem>>, vector<64x32xbf16>
    %3 = arith.truncf %1 : vector<4x64xf32> to vector<4x64xbf16>
    %cst = arith.constant dense<0.000000e+00> : vector<4x32xf32>
    %4 = tpu.matmul %3, %2, %cst {dimension_numbers = #tpu.dot_dimension_numbers<[1], [0], [0], [1], [0, 0, 1, 1], [], []>} : vector<4x64xbf16>, vector<64x32xbf16>, vector<4x32xf32> -> vector<4x32xf32>
    %c0_4 = arith.constant 0 : index
    %c0_5 = arith.constant 0 : index
    %5 = vector.load %arg3[%c0_4, %c0_5] : memref<1x32xf32, #tpu.memory_space<vmem>>, vector<1x32xf32>
    %6 = vector.broadcast %5 : vector<1x32xf32> to vector<4x32xf32>
    %7 = arith.addf %4, %6 : vector<4x32xf32>
    %8 = tpu.iota {dimensions = array<i32: 0>} : vector<5x4xi32>
    %9 = tpu.iota {dimensions = array<i32: 1>} : vector<5x4xi32>
    %c1_i32 = arith.constant 1 : i32
    %10 = vector.broadcast %c1_i32 : i32 to vector<5x4xi32>
    %11 = arith.addi %9, %10 : vector<5x4xi32>
    %12 = arith.cmpi eq, %8, %11 : vector<5x4xi32>
    %13 = arith.extui %12 : vector<5x4xi1> to vector<5x4xi32>
    %14 = arith.sitofp %13 : vector<5x4xi32> to vector<5x4xf32>
    %cst_6 = arith.constant dense<0.000000e+00> : vector<5x32xf32>
    %15 = tpu.matmul %14, %7, %cst_6 {dimension_numbers = #tpu.dot_dimension_numbers<[1], [0], [0], [1], [0, 0, 1, 1], [], []>} : vector<5x4xf32>, vector<4x32xf32>, vector<5x32xf32> -> vector<5x32xf32>
    %c0_7 = arith.constant 0 : index
    %c0_8 = arith.constant 0 : index
    %16 = vector.load %arg4[%c0_7, %c0_8] : memref<5x32xf32, #tpu.memory_space<vmem>>, vector<5x32xf32>
    %17 = arith.addf %15, %16 : vector<5x32xf32>
    %c0_9 = arith.constant 0 : index
    %c0_10 = arith.constant 0 : index
    %c0_11 = arith.constant 0 : index
    %18 = vector.load %arg5[%c0_9, %c0_10, %c0_11] : memref<1x5x32xf32, #tpu.memory_space<vmem>>, vector<1x5x32xf32>
    %19 = vector.shape_cast %18 : vector<1x5x32xf32> to vector<5x32xf32>
    %20 = vector.shape_cast %17 : vector<5x32xf32> to vector<1x5x32xf32>
    tpu.vector_store %arg5[%c0_9, %c0_10, %c0_11], %20 {strides = array<i32>} : memref<1x5x32xf32, #tpu.memory_space<vmem>>, vector<1x5x32xf32>,
    return
  }
  func.func @transform_0(%arg0: i32) -> (i32, i32, i32) {
    %c0_i32 = arith.constant 0 : i32
    %c0_i32_0 = arith.constant 0 : i32
    %c0_i32_1 = arith.constant 0 : i32
    return %arg0, %c0_i32, %c0_i32_0 : i32, i32, i32
  }
  func.func @transform_1(%arg0: i32) -> (i32, i32) {
    %c0_i32 = arith.constant 0 : i32
    %c0_i32_0 = arith.constant 0 : i32
    %c0_i32_1 = arith.constant 0 : i32
    return %c0_i32, %c0_i32_0 : i32, i32
  }
  func.func @transform_2(%arg0: i32) -> (i32, i32) {
    %c0_i32 = arith.constant 0 : i32
    %c0_i32_0 = arith.constant 0 : i32
    %c0_i32_1 = arith.constant 0 : i32
    return %c0_i32, %c0_i32_0 : i32, i32
  }
  func.func @transform_3(%arg0: i32) -> (i32, i32) {
    %c0_i32 = arith.constant 0 : i32
    %c0_i32_0 = arith.constant 0 : i32
    %c0_i32_1 = arith.constant 0 : i32
    return %c0_i32, %c0_i32_0 : i32, i32
  }
  func.func @transform_4(%arg0: i32) -> (i32, i32, i32) {
    %c0_i32 = arith.constant 0 : i32
    %c0_i32_0 = arith.constant 0 : i32
    %c0_i32_1 = arith.constant 0 : i32
    return %arg0, %c0_i32, %c0_i32_0 : i32, i32, i32
  }
}

module attributes {stable_mosaic.version = 11 : i64} {
  func.func @_head_first_kernel(%arg0: i32, %arg1: memref<2x32xf32, #tpu.memory_space<vmem>>, %arg2: memref<2x32xf32, #tpu.memory_space<vmem>>, %arg3: memref<1x32xf32, #tpu.memory_space<vmem>>, %arg4: memref<1x32xf32, #tpu.memory_space<vmem>>, %arg5: memref<1x32xf32, #tpu.memory_space<vmem>>, %arg6: memref<1x32xf32, #tpu.memory_space<vmem>>, %arg7: memref<32x16xf32, #tpu.memory_space<vmem>>, %arg8: memref<1x16xf32, #tpu.memory_space<vmem>>, %arg9: memref<2x16xf32, #tpu.memory_space<vmem>>) attributes {dimension_semantics = [#tpu.dimension_semantics<arbitrary>], iteration_bounds = array<i64: 1>, scalar_prefetch = 0 : i64, scratch_operands = 0 : i64, tpu.core_type = #tpu.core_type<tc>, window_params = [{pipeline_mode = #tpu.pipeline_mode<synchronous>, transform_indices = @transform_0, window_bounds = array<i64: 2, 32>}, {pipeline_mode = #tpu.pipeline_mode<synchronous>, transform_indices = @transform_1, window_bounds = array<i64: 2, 32>}, {pipeline_mode = #tpu.pipeline_mode<synchronous>, transform_indices = @transform_2, window_bounds = array<i64: 1, 32>}, {pipeline_mode = #tpu.pipeline_mode<synchronous>, transform_indices = @transform_3, window_bounds = array<i64: 1, 32>}, {pipeline_mode = #tpu.pipeline_mode<synchronous>, transform_indices = @transform_4, window_bounds = array<i64: 1, 32>}, {pipeline_mode = #tpu.pipeline_mode<synchronous>, transform_indices = @transform_5, window_bounds = array<i64: 1, 32>}, {pipeline_mode = #tpu.pipeline_mode<synchronous>, transform_indices = @transform_6, window_bounds = array<i64: 32, 16>}, {pipeline_mode = #tpu.pipeline_mode<synchronous>, transform_indices = @transform_7, window_bounds = array<i64: 1, 16>}, {pipeline_mode = #tpu.pipeline_mode<synchronous>, transform_indices = @transform_8, window_bounds = array<i64: 2, 16>}]} {
    %c0 = arith.constant 0 : index
    %c0_0 = arith.constant 0 : index
    %0 = vector.load %arg1[%c0, %c0_0] : memref<2x32xf32, #tpu.memory_space<vmem>>, vector<2x32xf32>
    %c0_1 = arith.constant 0 : index
    %c0_2 = arith.constant 0 : index
    %1 = vector.load %arg2[%c0_1, %c0_2] : memref<2x32xf32, #tpu.memory_space<vmem>>, vector<2x32xf32>
    %2 = arith.addf %0, %1 : vector<2x32xf32>
    %c0_3 = arith.constant 0 : index
    %c0_4 = arith.constant 0 : index
    %3 = vector.load %arg3[%c0_3, %c0_4] : memref<1x32xf32, #tpu.memory_space<vmem>>, vector<1x32xf32>
    %c0_5 = arith.constant 0 : index
    %c0_6 = arith.constant 0 : index
    %4 = vector.load %arg4[%c0_5, %c0_6] : memref<1x32xf32, #tpu.memory_space<vmem>>, vector<1x32xf32>
    %cst = arith.constant dense<0.000000e+00> : vector<2xf32>
    %5 = vector.multi_reduction <add>, %2, %cst [1] : vector<2x32xf32> to vector<2xf32>
    %6 = vector.shape_cast %5 : vector<2xf32> to vector<2x1xf32>
    %cst_7 = arith.constant 3.200000e+01 : f32
    %7 = vector.broadcast %cst_7 : f32 to vector<2x1xf32>
    %8 = arith.divf %6, %7 : vector<2x1xf32>
    %9 = vector.broadcast %8 : vector<2x1xf32> to vector<2x32xf32>
    %10 = arith.subf %2, %9 : vector<2x32xf32>
    %11 = vector.broadcast %8 : vector<2x1xf32> to vector<2x32xf32>
    %12 = arith.subf %2, %11 : vector<2x32xf32>
    %13 = arith.mulf %10, %12 : vector<2x32xf32>
    %cst_8 = arith.constant dense<0.000000e+00> : vector<2xf32>
    %14 = vector.multi_reduction <add>, %13, %cst_8 [1] : vector<2x32xf32> to vector<2xf32>
    %15 = vector.shape_cast %14 : vector<2xf32> to vector<2x1xf32>
    %cst_9 = arith.constant 3.200000e+01 : f32
    %16 = vector.broadcast %cst_9 : f32 to vector<2x1xf32>
    %17 = arith.divf %15, %16 : vector<2x1xf32>
    %18 = vector.broadcast %8 : vector<2x1xf32> to vector<2x32xf32>
    %19 = arith.subf %2, %18 : vector<2x32xf32>
    %cst_10 = arith.constant 9.99999974E-6 : f32
    %20 = vector.broadcast %cst_10 : f32 to vector<2x1xf32>
    %21 = arith.addf %17, %20 : vector<2x1xf32>
    %22 = math.rsqrt %21 : vector<2x1xf32>
    %23 = vector.broadcast %22 : vector<2x1xf32> to vector<2x32xf32>
    %24 = arith.mulf %19, %23 : vector<2x32xf32>
    %25 = vector.broadcast %3 : vector<1x32xf32> to vector<2x32xf32>
    %26 = arith.mulf %24, %25 : vector<2x32xf32>
    %27 = vector.broadcast %4 : vector<1x32xf32> to vector<2x32xf32>
    %28 = arith.addf %26, %27 : vector<2x32xf32>
    %c0_11 = arith.constant 0 : index
    %c0_12 = arith.constant 0 : index
    %29 = vector.load %arg5[%c0_11, %c0_12] : memref<1x32xf32, #tpu.memory_space<vmem>>, vector<1x32xf32>
    %c0_13 = arith.constant 0 : index
    %c0_14 = arith.constant 0 : index
    %30 = vector.load %arg6[%c0_13, %c0_14] : memref<1x32xf32, #tpu.memory_space<vmem>>, vector<1x32xf32>
    %cst_15 = arith.constant dense<0.000000e+00> : vector<2xf32>
    %31 = vector.multi_reduction <add>, %28, %cst_15 [1] : vector<2x32xf32> to vector<2xf32>
    %32 = vector.shape_cast %31 : vector<2xf32> to vector<2x1xf32>
    %cst_16 = arith.constant 3.200000e+01 : f32
    %33 = vector.broadcast %cst_16 : f32 to vector<2x1xf32>
    %34 = arith.divf %32, %33 : vector<2x1xf32>
    %35 = vector.broadcast %34 : vector<2x1xf32> to vector<2x32xf32>
    %36 = arith.subf %28, %35 : vector<2x32xf32>
    %37 = vector.broadcast %34 : vector<2x1xf32> to vector<2x32xf32>
    %38 = arith.subf %28, %37 : vector<2x32xf32>
    %39 = arith.mulf %36, %38 : vector<2x32xf32>
    %cst_17 = arith.constant dense<0.000000e+00> : vector<2xf32>
    %40 = vector.multi_reduction <add>, %39, %cst_17 [1] : vector<2x32xf32> to vector<2xf32>
    %41 = vector.shape_cast %40 : vector<2xf32> to vector<2x1xf32>
    %cst_18 = arith.constant 3.200000e+01 : f32
    %42 = vector.broadcast %cst_18 : f32 to vector<2x1xf32>
    %43 = arith.divf %41, %42 : vector<2x1xf32>
    %44 = vector.broadcast %34 : vector<2x1xf32> to vector<2x32xf32>
    %45 = arith.subf %28, %44 : vector<2x32xf32>
    %cst_19 = arith.constant 9.99999997E-7 : f32
    %46 = vector.broadcast %cst_19 : f32 to vector<2x1xf32>
    %47 = arith.addf %43, %46 : vector<2x1xf32>
    %48 = math.rsqrt %47 : vector<2x1xf32>
    %49 = vector.broadcast %48 : vector<2x1xf32> to vector<2x32xf32>
    %50 = arith.mulf %45, %49 : vector<2x32xf32>
    %51 = vector.broadcast %29 : vector<1x32xf32> to vector<2x32xf32>
    %52 = arith.mulf %50, %51 : vector<2x32xf32>
    %53 = vector.broadcast %30 : vector<1x32xf32> to vector<2x32xf32>
    %54 = arith.addf %52, %53 : vector<2x32xf32>
    %c0_20 = arith.constant 0 : index
    %c0_21 = arith.constant 0 : index
    %55 = vector.load %arg7[%c0_20, %c0_21] : memref<32x16xf32, #tpu.memory_space<vmem>>, vector<32x16xf32>
    %cst_22 = arith.constant dense<0.000000e+00> : vector<2x16xf32>
    %56 = tpu.matmul %54, %55, %cst_22 {dimension_numbers = #tpu.dot_dimension_numbers<[1], [0], [0], [1], [0, 0, 1, 1], [], []>} : vector<2x32xf32>, vector<32x16xf32>, vector<2x16xf32> -> vector<2x16xf32>
    %c0_23 = arith.constant 0 : index
    %c0_24 = arith.constant 0 : index
    %57 = vector.load %arg8[%c0_23, %c0_24] : memref<1x16xf32, #tpu.memory_space<vmem>>, vector<1x16xf32>
    %58 = vector.broadcast %57 : vector<1x16xf32> to vector<2x16xf32>
    %59 = arith.addf %56, %58 : vector<2x16xf32>
    %c0_25 = arith.constant 0 : index
    %c0_26 = arith.constant 0 : index
    %60 = vector.load %arg9[%c0_25, %c0_26] : memref<2x16xf32, #tpu.memory_space<vmem>>, vector<2x16xf32>
    tpu.vector_store %arg9[%c0_25, %c0_26], %59 {strides = array<i32>} : memref<2x16xf32, #tpu.memory_space<vmem>>, vector<2x16xf32>,
    return
  }
  func.func @transform_0(%arg0: i32) -> (i32, i32) {
    %c0_i32 = arith.constant 0 : i32
    %c0_i32_0 = arith.constant 0 : i32
    %c0_i32_1 = arith.constant 0 : i32
    return %c0_i32, %c0_i32_0 : i32, i32
  }
  func.func @transform_1(%arg0: i32) -> (i32, i32) {
    %c0_i32 = arith.constant 0 : i32
    %c0_i32_0 = arith.constant 0 : i32
    %c0_i32_1 = arith.constant 0 : i32
    return %c0_i32, %c0_i32_0 : i32, i32
  }
  func.func @transform_2(%arg0: i32) -> (i32, i32) {
    %c0_i32 = arith.constant 0 : i32
    %c0_i32_0 = arith.constant 0 : i32
    %c0_i32_1 = arith.constant 0 : i32
    return %c0_i32, %c0_i32_0 : i32, i32
  }
  func.func @transform_3(%arg0: i32) -> (i32, i32) {
    %c0_i32 = arith.constant 0 : i32
    %c0_i32_0 = arith.constant 0 : i32
    %c0_i32_1 = arith.constant 0 : i32
    return %c0_i32, %c0_i32_0 : i32, i32
  }
  func.func @transform_4(%arg0: i32) -> (i32, i32) {
    %c0_i32 = arith.constant 0 : i32
    %c0_i32_0 = arith.constant 0 : i32
    %c0_i32_1 = arith.constant 0 : i32
    return %c0_i32, %c0_i32_0 : i32, i32
  }
  func.func @transform_5(%arg0: i32) -> (i32, i32) {
    %c0_i32 = arith.constant 0 : i32
    %c0_i32_0 = arith.constant 0 : i32
    %c0_i32_1 = arith.constant 0 : i32
    return %c0_i32, %c0_i32_0 : i32, i32
  }
  func.func @transform_6(%arg0: i32) -> (i32, i32) {
    %c0_i32 = arith.constant 0 : i32
    %c0_i32_0 = arith.constant 0 : i32
    %c0_i32_1 = arith.constant 0 : i32
    return %c0_i32, %c0_i32_0 : i32, i32
  }
  func.func @transform_7(%arg0: i32) -> (i32, i32) {
    %c0_i32 = arith.constant 0 : i32
    %c0_i32_0 = arith.constant 0 : i32
    %c0_i32_1 = arith.constant 0 : i32
    return %c0_i32, %c0_i32_0 : i32, i32
  }
  func.func @transform_8(%arg0: i32) -> (i32, i32) {
    %c0_i32 = arith.constant 0 : i32
    %c0_i32_0 = arith.constant 0 : i32
    %c0_i32_1 = arith.constant 0 : i32
    return %c0_i32, %c0_i32_0 : i32, i32
  }
}

module attributes {stable_mosaic.version = 11 : i64} {
  func.func @_mamba_block_kernel(%arg0: i32, %arg1: memref<1x5x32xf32, #tpu.memory_space<vmem>>, %arg2: memref<1x5x32xf32, #tpu.memory_space<vmem>>, %arg3: memref<1x32xf32, #tpu.memory_space<vmem>>, %arg4: memref<1x32xf32, #tpu.memory_space<vmem>>, %arg5: memref<32x128xbf16, #tpu.memory_space<vmem>>, %arg6: memref<32x128xbf16, #tpu.memory_space<vmem>>, %arg7: memref<32x128xbf16, #tpu.memory_space<vmem>>, %arg8: memref<32x128xbf16, #tpu.memory_space<vmem>>, %arg9: memref<4x128xf32, #tpu.memory_space<vmem>>, %arg10: memref<1x128xf32, #tpu.memory_space<vmem>>, %arg11: memref<128x4xbf16, #tpu.memory_space<vmem>>, %arg12: memref<128x16xbf16, #tpu.memory_space<vmem>>, %arg13: memref<128x16xbf16, #tpu.memory_space<vmem>>, %arg14: memref<4x128xf32, #tpu.memory_space<vmem>>, %arg15: memref<1x128xf32, #tpu.memory_space<vmem>>, %arg16: memref<40x128xf32, #tpu.memory_space<vmem>>, %arg17: memref<1x128xf32, #tpu.memory_space<vmem>>, %arg18: memref<128x32xbf16, #tpu.memory_space<vmem>>, %arg19: memref<40x5xf32, #tpu.memory_space<vmem>>, %arg20: memref<40x16xf32, #tpu.memory_space<vmem>>, %arg21: memref<40x16xf32, #tpu.memory_space<vmem>>, %arg22: memref<1x5x32xf32, #tpu.memory_space<vmem>>, %arg23: memref<1x5x32xf32, #tpu.memory_space<vmem>>, %arg24: memref<5x128xf32, #tpu.memory_space<vmem>>) attributes {dimension_semantics = [#tpu.dimension_semantics<parallel>], iteration_bounds = array<i64: 2>, scalar_prefetch = 0 : i64, scratch_operands = 1 : i64, tpu.core_type = #tpu.core_type<tc>, window_params = [{transform_indices = @transform_0, window_bounds = array<i64: 1, 5, 32>}, {transform_indices = @transform_1, window_bounds = array<i64: 1, 5, 32>}, {pipeline_mode = #tpu.pipeline_mode<synchronous>, transform_indices = @transform_2, window_bounds = array<i64: 1, 32>}, {pipeline_mode = #tpu.pipeline_mode<synchronous>, transform_indices = @transform_3, window_bounds = array<i64: 1, 32>}, {pipeline_mode = #tpu.pipeline_mode<synchronous>, transform_indices = @transform_4, window_bounds = array<i64: 32, 128>}, {pipeline_mode = #tpu.pipeline_mode<synchronous>, transform_indices = @transform_5, window_bounds = array<i64: 32, 128>}, {pipeline_mode = #tpu.pipeline_mode<synchronous>, transform_indices = @transform_6, window_bounds = array<i64: 32, 128>}, {pipeline_mode = #tpu.pipeline_mode<synchronous>, transform_indices = @transform_7, window_bounds = array<i64: 32, 128>}, {pipeline_mode = #tpu.pipeline_mode<synchronous>, transform_indices = @transform_8, window_bounds = array<i64: 4, 128>}, {pipeline_mode = #tpu.pipeline_mode<synchronous>, transform_indices = @transform_9, window_bounds = array<i64: 1, 128>}, {pipeline_mode = #tpu.pipeline_mode<synchronous>, transform_indices = @transform_10, window_bounds = array<i64: 128, 4>}, {pipeline_mode = #tpu.pipeline_mode<synchronous>, transform_indices = @transform_11, window_bounds = array<i64: 128, 16>}, {pipeline_mode = #tpu.pipeline_mode<synchronous>, transform_indices = @transform_12, window_bounds = array<i64: 128, 16>}, {pipeline_mode = #tpu.pipeline_mode<synchronous>, transform_indices = @transform_13, window_bounds = array<i64: 4, 128>}, {pipeline_mode = #tpu.pipeline_mode<synchronous>, transform_indices = @transform_14, window_bounds = array<i64: 1, 128>}, {pipeline_mode = #tpu.pipeline_mode<synchronous>, transform_indices = @transform_15, window_bounds = array<i64: 40, 128>}, {pipeline_mode = #tpu.pipeline_mode<synchronous>, transform_indices = @transform_16, window_bounds = array<i64: 1, 128>}, {pipeline_mode = #tpu.pipeline_mode<synchronous>, transform_indices = @transform_17, window_bounds = array<i64: 128, 32>}, {pipeline_mode = #tpu.pipeline_mode<synchronous>, transform_indices = @transform_18, window_bounds = array<i64: 40, 5>}, {pipeline_mode = #tpu.pipeline_mode<synchronous>, transform_indices = @transform_19, window_bounds = array<i64: 40, 16>}, {pipeline_mode = #tpu.pipeline_mode<synchronous>, transform_indices = @transform_20, window_bounds = array<i64: 40, 16>}, {transform_indices = @transform_21, window_bounds = array<i64: 1, 5, 32>}, {transform_indices = @transform_22, window_bounds = array<i64: 1, 5, 32>}]} {
    %c0 = arith.constant 0 : index
    %c0_0 = arith.constant 0 : index
    %c0_1 = arith.constant 0 : index
    %0 = vector.load %arg1[%c0, %c0_0, %c0_1] : memref<1x5x32xf32, #tpu.memory_space<vmem>>, vector<1x5x32xf32>
    %1 = vector.shape_cast %0 : vector<1x5x32xf32> to vector<5x32xf32>
    %c0_2 = arith.constant 0 : index
    %c0_3 = arith.constant 0 : index
    %c0_4 = arith.constant 0 : index
    %2 = vector.load %arg2[%c0_2, %c0_3, %c0_4] : memref<1x5x32xf32, #tpu.memory_space<vmem>>, vector<1x5x32xf32>
    %3 = vector.shape_cast %2 : vector<1x5x32xf32> to vector<5x32xf32>
    %4 = arith.addf %1, %3 : vector<5x32xf32>
    %c0_5 = arith.constant 0 : index
    %c0_6 = arith.constant 0 : index
    %5 = vector.load %arg3[%c0_5, %c0_6] : memref<1x32xf32, #tpu.memory_space<vmem>>, vector<1x32xf32>
    %c0_7 = arith.constant 0 : index
    %c0_8 = arith.constant 0 : index
    %6 = vector.load %arg4[%c0_7, %c0_8] : memref<1x32xf32, #tpu.memory_space<vmem>>, vector<1x32xf32>
    %cst = arith.constant dense<0.000000e+00> : vector<5xf32>
    %7 = vector.multi_reduction <add>, %4, %cst [1] : vector<5x32xf32> to vector<5xf32>
    %8 = vector.shape_cast %7 : vector<5xf32> to vector<5x1xf32>
    %cst_9 = arith.constant 3.200000e+01 : f32
    %9 = vector.broadcast %cst_9 : f32 to vector<5x1xf32>
    %10 = arith.divf %8, %9 : vector<5x1xf32>
    %11 = vector.broadcast %10 : vector<5x1xf32> to vector<5x32xf32>
    %12 = arith.subf %4, %11 : vector<5x32xf32>
    %13 = vector.broadcast %10 : vector<5x1xf32> to vector<5x32xf32>
    %14 = arith.subf %4, %13 : vector<5x32xf32>
    %15 = arith.mulf %12, %14 : vector<5x32xf32>
    %cst_10 = arith.constant dense<0.000000e+00> : vector<5xf32>
    %16 = vector.multi_reduction <add>, %15, %cst_10 [1] : vector<5x32xf32> to vector<5xf32>
    %17 = vector.shape_cast %16 : vector<5xf32> to vector<5x1xf32>
    %cst_11 = arith.constant 3.200000e+01 : f32
    %18 = vector.broadcast %cst_11 : f32 to vector<5x1xf32>
    %19 = arith.divf %17, %18 : vector<5x1xf32>
    %20 = vector.broadcast %10 : vector<5x1xf32> to vector<5x32xf32>
    %21 = arith.subf %4, %20 : vector<5x32xf32>
    %cst_12 = arith.constant 9.99999974E-6 : f32
    %22 = vector.broadcast %cst_12 : f32 to vector<5x1xf32>
    %23 = arith.addf %19, %22 : vector<5x1xf32>
    %24 = math.rsqrt %23 : vector<5x1xf32>
    %25 = vector.broadcast %24 : vector<5x1xf32> to vector<5x32xf32>
    %26 = arith.mulf %21, %25 : vector<5x32xf32>
    %27 = vector.broadcast %5 : vector<1x32xf32> to vector<5x32xf32>
    %28 = arith.mulf %26, %27 : vector<5x32xf32>
    %29 = vector.broadcast %6 : vector<1x32xf32> to vector<5x32xf32>
    %30 = arith.addf %28, %29 : vector<5x32xf32>
    %31 = tpu.iota {dimensions = array<i32: 0>} : vector<5x5xi32>
    %32 = tpu.iota {dimensions = array<i32: 1>} : vector<5x5xi32>
    %33 = arith.addi %31, %32 : vector<5x5xi32>
    %c4_i32 = arith.constant 4 : i32
    %34 = vector.broadcast %c4_i32 : i32 to vector<5x5xi32>
    %35 = arith.cmpi eq, %33, %34 : vector<5x5xi32>
    %36 = arith.extui %35 : vector<5x5xi1> to vector<5x5xi32>
    %37 = arith.sitofp %36 : vector<5x5xi32> to vector<5x5xf32>
    %cst_13 = arith.constant dense<0.000000e+00> : vector<5x32xf32>
    %38 = tpu.matmul %37, %30, %cst_13 {dimension_numbers = #tpu.dot_dimension_numbers<[1], [0], [0], [1], [0, 0, 1, 1], [], []>} : vector<5x5xf32>, vector<5x32xf32>, vector<5x32xf32> -> vector<5x32xf32>
    %c0_14 = arith.constant 0 : index
    %c0_15 = arith.constant 0 : index
    %39 = vector.load %arg5[%c0_14, %c0_15] : memref<32x128xbf16, #tpu.memory_space<vmem>>, vector<32x128xbf16>
    %40 = arith.truncf %30 : vector<5x32xf32> to vector<5x32xbf16>
    %cst_16 = arith.constant dense<0.000000e+00> : vector<5x128xf32>
    %41 = tpu.matmul %40, %39, %cst_16 {dimension_numbers = #tpu.dot_dimension_numbers<[1], [0], [0], [1], [0, 0, 1, 1], [], []>} : vector<5x32xbf16>, vector<32x128xbf16>, vector<5x128xf32> -> vector<5x128xf32>
    %c0_17 = arith.constant 0 : index
    %c0_18 = arith.constant 0 : index
    %42 = vector.load %arg6[%c0_17, %c0_18] : memref<32x128xbf16, #tpu.memory_space<vmem>>, vector<32x128xbf16>
    %43 = arith.truncf %38 : vector<5x32xf32> to vector<5x32xbf16>
    %cst_19 = arith.constant dense<0.000000e+00> : vector<5x128xf32>
    %44 = tpu.matmul %43, %42, %cst_19 {dimension_numbers = #tpu.dot_dimension_numbers<[1], [0], [0], [1], [0, 0, 1, 1], [], []>} : vector<5x32xbf16>, vector<32x128xbf16>, vector<5x128xf32> -> vector<5x128xf32>
    %45 = arith.addf %41, %44 : vector<5x128xf32>
    %c0_20 = arith.constant 0 : index
    %c0_21 = arith.constant 0 : index
    %46 = vector.load %arg7[%c0_20, %c0_21] : memref<32x128xbf16, #tpu.memory_space<vmem>>, vector<32x128xbf16>
    %47 = arith.truncf %30 : vector<5x32xf32> to vector<5x32xbf16>
    %cst_22 = arith.constant dense<0.000000e+00> : vector<5x128xf32>
    %48 = tpu.matmul %47, %46, %cst_22 {dimension_numbers = #tpu.dot_dimension_numbers<[1], [0], [0], [1], [0, 0, 1, 1], [], []>} : vector<5x32xbf16>, vector<32x128xbf16>, vector<5x128xf32> -> vector<5x128xf32>
    %c0_23 = arith.constant 0 : index
    %c0_24 = arith.constant 0 : index
    %49 = vector.load %arg8[%c0_23, %c0_24] : memref<32x128xbf16, #tpu.memory_space<vmem>>, vector<32x128xbf16>
    %50 = arith.truncf %38 : vector<5x32xf32> to vector<5x32xbf16>
    %cst_25 = arith.constant dense<0.000000e+00> : vector<5x128xf32>
    %51 = tpu.matmul %50, %49, %cst_25 {dimension_numbers = #tpu.dot_dimension_numbers<[1], [0], [0], [1], [0, 0, 1, 1], [], []>} : vector<5x32xbf16>, vector<32x128xbf16>, vector<5x128xf32> -> vector<5x128xf32>
    %52 = arith.addf %48, %51 : vector<5x128xf32>
    %c0_26 = arith.constant 0 : index
    %c0_27 = arith.constant 0 : index
    %53 = vector.load %arg9[%c0_26, %c0_27] : memref<4x128xf32, #tpu.memory_space<vmem>>, vector<4x128xf32>
    %cst_28 = arith.constant 0.000000e+00 : f32
    %54 = vector.broadcast %cst_28 : f32 to vector<5x128xf32>
    %c-3_i32 = arith.constant -3 : i32
    %55 = vector.broadcast %c-3_i32 : i32 to vector<5x5xi32>
    %56 = arith.addi %31, %55 : vector<5x5xi32>
    %57 = arith.cmpi eq, %32, %56 : vector<5x5xi32>
    %58 = arith.extui %57 : vector<5x5xi1> to vector<5x5xi32>
    %59 = arith.sitofp %58 : vector<5x5xi32> to vector<5x5xf32>
    %cst_29 = arith.constant dense<0.000000e+00> : vector<5x128xf32>
    %60 = tpu.matmul %59, %45, %cst_29 {dimension_numbers = #tpu.dot_dimension_numbers<[1], [0], [0], [1], [0, 0, 1, 1], [], []>} : vector<5x5xf32>, vector<5x128xf32>, vector<5x128xf32> -> vector<5x128xf32>
    %61 = vector.extract_strided_slice %53 {offsets = [0, 0], sizes = [1, 128], strides = [1, 1]} : vector<4x128xf32> to vector<1x128xf32>
    %62 = vector.broadcast %61 : vector<1x128xf32> to vector<5x128xf32>
    %63 = arith.mulf %60, %62 : vector<5x128xf32>
    %64 = arith.addf %54, %63 : vector<5x128xf32>
    %c-2_i32 = arith.constant -2 : i32
    %65 = vector.broadcast %c-2_i32 : i32 to vector<5x5xi32>
    %66 = arith.addi %31, %65 : vector<5x5xi32>
    %67 = arith.cmpi eq, %32, %66 : vector<5x5xi32>
    %68 = arith.extui %67 : vector<5x5xi1> to vector<5x5xi32>
    %69 = arith.sitofp %68 : vector<5x5xi32> to vector<5x5xf32>
    %cst_30 = arith.constant dense<0.000000e+00> : vector<5x128xf32>
    %70 = tpu.matmul %69, %45, %cst_30 {dimension_numbers = #tpu.dot_dimension_numbers<[1], [0], [0], [1], [0, 0, 1, 1], [], []>} : vector<5x5xf32>, vector<5x128xf32>, vector<5x128xf32> -> vector<5x128xf32>
    %71 = vector.extract_strided_slice %53 {offsets = [1, 0], sizes = [1, 128], strides = [1, 1]} : vector<4x128xf32> to vector<1x128xf32>
    %72 = vector.broadcast %71 : vector<1x128xf32> to vector<5x128xf32>
    %73 = arith.mulf %70, %72 : vector<5x128xf32>
    %74 = arith.addf %64, %73 : vector<5x128xf32>
    %c-1_i32 = arith.constant -1 : i32
    %75 = vector.broadcast %c-1_i32 : i32 to vector<5x5xi32>
    %76 = arith.addi %31, %75 : vector<5x5xi32>
    %77 = arith.cmpi eq, %32, %76 : vector<5x5xi32>
    %78 = arith.extui %77 : vector<5x5xi1> to vector<5x5xi32>
    %79 = arith.sitofp %78 : vector<5x5xi32> to vector<5x5xf32>
    %cst_31 = arith.constant dense<0.000000e+00> : vector<5x128xf32>
    %80 = tpu.matmul %79, %45, %cst_31 {dimension_numbers = #tpu.dot_dimension_numbers<[1], [0], [0], [1], [0, 0, 1, 1], [], []>} : vector<5x5xf32>, vector<5x128xf32>, vector<5x128xf32> -> vector<5x128xf32>
    %81 = vector.extract_strided_slice %53 {offsets = [2, 0], sizes = [1, 128], strides = [1, 1]} : vector<4x128xf32> to vector<1x128xf32>
    %82 = vector.broadcast %81 : vector<1x128xf32> to vector<5x128xf32>
    %83 = arith.mulf %80, %82 : vector<5x128xf32>
    %84 = arith.addf %74, %83 : vector<5x128xf32>
    %c0_i32 = arith.constant 0 : i32
    %85 = vector.broadcast %c0_i32 : i32 to vector<5x5xi32>
    %86 = arith.addi %31, %85 : vector<5x5xi32>
    %87 = arith.cmpi eq, %32, %86 : vector<5x5xi32>
    %88 = arith.extui %87 : vector<5x5xi1> to vector<5x5xi32>
    %89 = arith.sitofp %88 : vector<5x5xi32> to vector<5x5xf32>
    %cst_32 = arith.constant dense<0.000000e+00> : vector<5x128xf32>
    %90 = tpu.matmul %89, %45, %cst_32 {dimension_numbers = #tpu.dot_dimension_numbers<[1], [0], [0], [1], [0, 0, 1, 1], [], []>} : vector<5x5xf32>, vector<5x128xf32>, vector<5x128xf32> -> vector<5x128xf32>
    %91 = vector.extract_strided_slice %53 {offsets = [3, 0], sizes = [1, 128], strides = [1, 1]} : vector<4x128xf32> to vector<1x128xf32>
    %92 = vector.broadcast %91 : vector<1x128xf32> to vector<5x128xf32>
    %93 = arith.mulf %90, %92 : vector<5x128xf32>
    %94 = arith.addf %84, %93 : vector<5x128xf32>
    %c0_33 = arith.constant 0 : index
    %c0_34 = arith.constant 0 : index
    %95 = vector.load %arg10[%c0_33, %c0_34] : memref<1x128xf32, #tpu.memory_space<vmem>>, vector<1x128xf32>
    %96 = vector.broadcast %95 : vector<1x128xf32> to vector<5x128xf32>
    %97 = arith.addf %94, %96 : vector<5x128xf32>
    %cst_35 = arith.constant 0.000000e+00 : f32
    %98 = vector.broadcast %cst_35 : f32 to vector<5x128xf32>
    %99 = arith.subf %98, %97 : vector<5x128xf32>
    %100 = math.exp %99 : vector<5x128xf32>
    %cst_36 = arith.constant 1.000000e+00 : f32
    %101 = vector.broadcast %cst_36 : f32 to vector<5x128xf32>
    %102 = arith.addf %101, %100 : vector<5x128xf32>
    %103 = tpu.reciprocal %102 {approx = true} : vector<5x128xf32> -> vector<5x128xf32>
    %104 = arith.mulf %97, %103 : vector<5x128xf32>
    %c0_37 = arith.constant 0 : index
    %c0_38 = arith.constant 0 : index
    %105 = vector.load %arg11[%c0_37, %c0_38] : memref<128x4xbf16, #tpu.memory_space<vmem>>, vector<128x4xbf16>
    %106 = arith.truncf %104 : vector<5x128xf32> to vector<5x128xbf16>
    %cst_39 = arith.constant dense<0.000000e+00> : vector<5x4xf32>
    %107 = tpu.matmul %106, %105, %cst_39 {dimension_numbers = #tpu.dot_dimension_numbers<[1], [0], [0], [1], [0, 0, 1, 1], [], []>} : vector<5x128xbf16>, vector<128x4xbf16>, vector<5x4xf32> -> vector<5x4xf32>
    %c0_40 = arith.constant 0 : index
    %c0_41 = arith.constant 0 : index
    %108 = vector.load %arg12[%c0_40, %c0_41] : memref<128x16xbf16, #tpu.memory_space<vmem>>, vector<128x16xbf16>
    %109 = arith.truncf %104 : vector<5x128xf32> to vector<5x128xbf16>
    %cst_42 = arith.constant dense<0.000000e+00> : vector<5x16xf32>
    %110 = tpu.matmul %109, %108, %cst_42 {dimension_numbers = #tpu.dot_dimension_numbers<[1], [0], [0], [1], [0, 0, 1, 1], [], []>} : vector<5x128xbf16>, vector<128x16xbf16>, vector<5x16xf32> -> vector<5x16xf32>
    %c0_43 = arith.constant 0 : index
    %c0_44 = arith.constant 0 : index
    %111 = vector.load %arg13[%c0_43, %c0_44] : memref<128x16xbf16, #tpu.memory_space<vmem>>, vector<128x16xbf16>
    %112 = arith.truncf %104 : vector<5x128xf32> to vector<5x128xbf16>
    %cst_45 = arith.constant dense<0.000000e+00> : vector<5x16xf32>
    %113 = tpu.matmul %112, %111, %cst_45 {dimension_numbers = #tpu.dot_dimension_numbers<[1], [0], [0], [1], [0, 0, 1, 1], [], []>} : vector<5x128xbf16>, vector<128x16xbf16>, vector<5x16xf32> -> vector<5x16xf32>
    %c0_46 = arith.constant 0 : index
    %c0_47 = arith.constant 0 : index
    %114 = vector.load %arg14[%c0_46, %c0_47] : memref<4x128xf32, #tpu.memory_space<vmem>>, vector<4x128xf32>
    %cst_48 = arith.constant dense<0.000000e+00> : vector<5x128xf32>
    %115 = tpu.matmul %107, %114, %cst_48 {dimension_numbers = #tpu.dot_dimension_numbers<[1], [0], [0], [1], [0, 0, 1, 1], [], []>} : vector<5x4xf32>, vector<4x128xf32>, vector<5x128xf32> -> vector<5x128xf32>
    %c0_49 = arith.constant 0 : index
    %c0_50 = arith.constant 0 : index
    %116 = vector.load %arg15[%c0_49, %c0_50] : memref<1x128xf32, #tpu.memory_space<vmem>>, vector<1x128xf32>
    %117 = vector.broadcast %116 : vector<1x128xf32> to vector<5x128xf32>
    %118 = arith.addf %115, %117 : vector<5x128xf32>
    %cst_51 = arith.constant 0.000000e+00 : f32
    %119 = vector.broadcast %cst_51 : f32 to vector<5x128xf32>
    %120 = arith.maximumf %118, %119 : vector<5x128xf32>
    %121 = math.absf %118 : vector<5x128xf32>
    %cst_52 = arith.constant 0.000000e+00 : f32
    %122 = vector.broadcast %cst_52 : f32 to vector<5x128xf32>
    %123 = arith.subf %122, %121 : vector<5x128xf32>
    %124 = math.exp %123 : vector<5x128xf32>
    %cst_53 = arith.constant 1.000000e+00 : f32
    %125 = vector.broadcast %cst_53 : f32 to vector<5x128xf32>
    %126 = arith.addf %125, %124 : vector<5x128xf32>
    %127 = math.log %126 : vector<5x128xf32>
    %128 = arith.addf %120, %127 : vector<5x128xf32>
    %c0_54 = arith.constant 0 : index
    %c0_55 = arith.constant 0 : index
    %129 = vector.load %arg19[%c0_54, %c0_55] : memref<40x5xf32, #tpu.memory_space<vmem>>, vector<40x5xf32>
    %130 = tpu.iota {dimensions = array<i32: 1>} : vector<1x128xi32>
    %c64_i32 = arith.constant 64 : i32
    %131 = vector.broadcast %c64_i32 : i32 to vector<1x128xi32>
    %132 = arith.cmpi slt, %130, %131 : vector<1x128xi32>
    %133 = arith.extui %132 : vector<1x128xi1> to vector<1x128xi32>
    %134 = arith.sitofp %133 : vector<1x128xi32> to vector<1x128xf32>
    %cst_56 = arith.constant 1.000000e+00 : f32
    %135 = vector.broadcast %cst_56 : f32 to vector<1x128xf32>
    %136 = arith.subf %135, %134 : vector<1x128xf32>
    %cst_57 = arith.constant dense<0.000000e+00> : vector<40x128xf32>
    %137 = tpu.matmul %129, %128, %cst_57 {dimension_numbers = #tpu.dot_dimension_numbers<[1], [0], [0], [1], [0, 0, 1, 1], [], []>} : vector<40x5xf32>, vector<5x128xf32>, vector<40x128xf32> -> vector<40x128xf32>
    %138 = arith.mulf %128, %104 : vector<5x128xf32>
    %cst_58 = arith.constant dense<0.000000e+00> : vector<40x128xf32>
    %139 = tpu.matmul %129, %138, %cst_58 {dimension_numbers = #tpu.dot_dimension_numbers<[1], [0], [0], [1], [0, 0, 1, 1], [], []>} : vector<40x5xf32>, vector<5x128xf32>, vector<40x128xf32> -> vector<40x128xf32>
    %c0_59 = arith.constant 0 : index
    %c0_60 = arith.constant 0 : index
    %140 = vector.load %arg16[%c0_59, %c0_60] : memref<40x128xf32, #tpu.memory_space<vmem>>, vector<40x128xf32>
    %141 = arith.mulf %137, %140 : vector<40x128xf32>
    %142 = math.exp %141 : vector<40x128xf32>
    %cst_61 = arith.constant dense<0.000000e+00> : vector<40x16xf32>
    %143 = tpu.matmul %129, %110, %cst_61 {dimension_numbers = #tpu.dot_dimension_numbers<[1], [0], [0], [1], [0, 0, 1, 1], [], []>} : vector<40x5xf32>, vector<5x16xf32>, vector<40x16xf32> -> vector<40x16xf32>
    %cst_62 = arith.constant dense<0.000000e+00> : vector<40x16xf32>
    %144 = tpu.matmul %129, %113, %cst_62 {dimension_numbers = #tpu.dot_dimension_numbers<[1], [0], [0], [1], [0, 0, 1, 1], [], []>} : vector<40x5xf32>, vector<5x16xf32>, vector<40x16xf32> -> vector<40x16xf32>
    %c0_63 = arith.constant 0 : index
    %c0_64 = arith.constant 0 : index
    %145 = vector.load %arg20[%c0_63, %c0_64] : memref<40x16xf32, #tpu.memory_space<vmem>>, vector<40x16xf32>
    %c0_65 = arith.constant 0 : index
    %c0_66 = arith.constant 0 : index
    %146 = vector.load %arg21[%c0_65, %c0_66] : memref<40x16xf32, #tpu.memory_space<vmem>>, vector<40x16xf32>
    %147 = arith.mulf %143, %145 : vector<40x16xf32>
    %cst_67 = arith.constant dense<0.000000e+00> : vector<40xf32>
    %148 = vector.multi_reduction <add>, %147, %cst_67 [1] : vector<40x16xf32> to vector<40xf32>
    %149 = vector.shape_cast %148 : vector<40xf32> to vector<40x1xf32>
    %150 = arith.mulf %143, %146 : vector<40x16xf32>
    %cst_68 = arith.constant dense<0.000000e+00> : vector<40xf32>
    %151 = vector.multi_reduction <add>, %150, %cst_68 [1] : vector<40x16xf32> to vector<40xf32>
    %152 = vector.shape_cast %151 : vector<40xf32> to vector<40x1xf32>
    %153 = arith.mulf %144, %145 : vector<40x16xf32>
    %cst_69 = arith.constant dense<0.000000e+00> : vector<40xf32>
    %154 = vector.multi_reduction <add>, %153, %cst_69 [1] : vector<40x16xf32> to vector<40xf32>
    %155 = vector.shape_cast %154 : vector<40xf32> to vector<40x1xf32>
    %156 = arith.mulf %144, %146 : vector<40x16xf32>
    %cst_70 = arith.constant dense<0.000000e+00> : vector<40xf32>
    %157 = vector.multi_reduction <add>, %156, %cst_70 [1] : vector<40x16xf32> to vector<40xf32>
    %158 = vector.shape_cast %157 : vector<40xf32> to vector<40x1xf32>
    %159 = vector.broadcast %149 : vector<40x1xf32> to vector<40x128xf32>
    %160 = vector.broadcast %134 : vector<1x128xf32> to vector<40x128xf32>
    %161 = arith.mulf %159, %160 : vector<40x128xf32>
    %162 = vector.broadcast %152 : vector<40x1xf32> to vector<40x128xf32>
    %163 = vector.broadcast %136 : vector<1x128xf32> to vector<40x128xf32>
    %164 = arith.mulf %162, %163 : vector<40x128xf32>
    %165 = arith.addf %161, %164 : vector<40x128xf32>
    %166 = vector.broadcast %155 : vector<40x1xf32> to vector<40x128xf32>
    %167 = vector.broadcast %134 : vector<1x128xf32> to vector<40x128xf32>
    %168 = arith.mulf %166, %167 : vector<40x128xf32>
    %169 = vector.broadcast %158 : vector<40x1xf32> to vector<40x128xf32>
    %170 = vector.broadcast %136 : vector<1x128xf32> to vector<40x128xf32>
    %171 = arith.mulf %169, %170 : vector<40x128xf32>
    %172 = arith.addf %168, %171 : vector<40x128xf32>
    %173 = arith.mulf %139, %165 : vector<40x128xf32>
    %cst_71 = arith.constant 0.000000e+00 : f32
    %174 = vector.broadcast %cst_71 : f32 to vector<8x128xf32>
    %175 = vector.extract_strided_slice %142 {offsets = [0, 0], sizes = [8, 128], strides = [1, 1]} : vector<40x128xf32> to vector<8x128xf32>
    %176 = arith.mulf %175, %174 : vector<8x128xf32>
    %177 = vector.extract_strided_slice %173 {offsets = [0, 0], sizes = [8, 128], strides = [1, 1]} : vector<40x128xf32> to vector<8x128xf32>
    %178 = arith.addf %176, %177 : vector<8x128xf32>
    %179 = vector.extract_strided_slice %172 {offsets = [0, 0], sizes = [8, 128], strides = [1, 1]} : vector<40x128xf32> to vector<8x128xf32>
    %180 = arith.mulf %178, %179 : vector<8x128xf32>
    %cst_72 = arith.constant dense<0.000000e+00> : vector<128xf32>
    %181 = vector.multi_reduction <add>, %180, %cst_72 [0] : vector<8x128xf32> to vector<128xf32>
    %182 = vector.shape_cast %181 : vector<128xf32> to vector<1x128xf32>
    %c0_73 = arith.constant 0 : index
    %c0_74 = arith.constant 0 : index
    %183 = vector.load %arg24[%c0_73, %c0_74] : memref<5x128xf32, #tpu.memory_space<vmem>>, vector<1x128xf32>
    tpu.vector_store %arg24[%c0_73, %c0_74], %182 {strides = array<i32>} : memref<5x128xf32, #tpu.memory_space<vmem>>, vector<1x128xf32>,
    %184 = vector.extract_strided_slice %142 {offsets = [8, 0], sizes = [8, 128], strides = [1, 1]} : vector<40x128xf32> to vector<8x128xf32>
    %185 = arith.mulf %184, %178 : vector<8x128xf32>
    %186 = vector.extract_strided_slice %173 {offsets = [8, 0], sizes = [8, 128], strides = [1, 1]} : vector<40x128xf32> to vector<8x128xf32>
    %187 = arith.addf %185, %186 : vector<8x128xf32>
    %188 = vector.extract_strided_slice %172 {offsets = [8, 0], sizes = [8, 128], strides = [1, 1]} : vector<40x128xf32> to vector<8x128xf32>
    %189 = arith.mulf %187, %188 : vector<8x128xf32>
    %cst_75 = arith.constant dense<0.000000e+00> : vector<128xf32>
    %190 = vector.multi_reduction <add>, %189, %cst_75 [0] : vector<8x128xf32> to vector<128xf32>
    %191 = vector.shape_cast %190 : vector<128xf32> to vector<1x128xf32>
    %c1 = arith.constant 1 : index
    %c0_76 = arith.constant 0 : index
    %192 = vector.load %arg24[%c1, %c0_76] : memref<5x128xf32, #tpu.memory_space<vmem>>, vector<1x128xf32>
    tpu.vector_store %arg24[%c1, %c0_76], %191 {strides = array<i32>} : memref<5x128xf32, #tpu.memory_space<vmem>>, vector<1x128xf32>,
    %193 = vector.extract_strided_slice %142 {offsets = [16, 0], sizes = [8, 128], strides = [1, 1]} : vector<40x128xf32> to vector<8x128xf32>
    %194 = arith.mulf %193, %187 : vector<8x128xf32>
    %195 = vector.extract_strided_slice %173 {offsets = [16, 0], sizes = [8, 128], strides = [1, 1]} : vector<40x128xf32> to vector<8x128xf32>
    %196 = arith.addf %194, %195 : vector<8x128xf32>
    %197 = vector.extract_strided_slice %172 {offsets = [16, 0], sizes = [8, 128], strides = [1, 1]} : vector<40x128xf32> to vector<8x128xf32>
    %198 = arith.mulf %196, %197 : vector<8x128xf32>
    %cst_77 = arith.constant dense<0.000000e+00> : vector<128xf32>
    %199 = vector.multi_reduction <add>, %198, %cst_77 [0] : vector<8x128xf32> to vector<128xf32>
    %200 = vector.shape_cast %199 : vector<128xf32> to vector<1x128xf32>
    %c2 = arith.constant 2 : index
    %c0_78 = arith.constant 0 : index
    %201 = vector.load %arg24[%c2, %c0_78] : memref<5x128xf32, #tpu.memory_space<vmem>>, vector<1x128xf32>
    tpu.vector_store %arg24[%c2, %c0_78], %200 {strides = array<i32>} : memref<5x128xf32, #tpu.memory_space<vmem>>, vector<1x128xf32>,
    %202 = vector.extract_strided_slice %142 {offsets = [24, 0], sizes = [8, 128], strides = [1, 1]} : vector<40x128xf32> to vector<8x128xf32>
    %203 = arith.mulf %202, %196 : vector<8x128xf32>
    %204 = vector.extract_strided_slice %173 {offsets = [24, 0], sizes = [8, 128], strides = [1, 1]} : vector<40x128xf32> to vector<8x128xf32>
    %205 = arith.addf %203, %204 : vector<8x128xf32>
    %206 = vector.extract_strided_slice %172 {offsets = [24, 0], sizes = [8, 128], strides = [1, 1]} : vector<40x128xf32> to vector<8x128xf32>
    %207 = arith.mulf %205, %206 : vector<8x128xf32>
    %cst_79 = arith.constant dense<0.000000e+00> : vector<128xf32>
    %208 = vector.multi_reduction <add>, %207, %cst_79 [0] : vector<8x128xf32> to vector<128xf32>
    %209 = vector.shape_cast %208 : vector<128xf32> to vector<1x128xf32>
    %c3 = arith.constant 3 : index
    %c0_80 = arith.constant 0 : index
    %210 = vector.load %arg24[%c3, %c0_80] : memref<5x128xf32, #tpu.memory_space<vmem>>, vector<1x128xf32>
    tpu.vector_store %arg24[%c3, %c0_80], %209 {strides = array<i32>} : memref<5x128xf32, #tpu.memory_space<vmem>>, vector<1x128xf32>,
    %211 = vector.extract_strided_slice %142 {offsets = [32, 0], sizes = [8, 128], strides = [1, 1]} : vector<40x128xf32> to vector<8x128xf32>
    %212 = arith.mulf %211, %205 : vector<8x128xf32>
    %213 = vector.extract_strided_slice %173 {offsets = [32, 0], sizes = [8, 128], strides = [1, 1]} : vector<40x128xf32> to vector<8x128xf32>
    %214 = arith.addf %212, %213 : vector<8x128xf32>
    %215 = vector.extract_strided_slice %172 {offsets = [32, 0], sizes = [8, 128], strides = [1, 1]} : vector<40x128xf32> to vector<8x128xf32>
    %216 = arith.mulf %214, %215 : vector<8x128xf32>
    %cst_81 = arith.constant dense<0.000000e+00> : vector<128xf32>
    %217 = vector.multi_reduction <add>, %216, %cst_81 [0] : vector<8x128xf32> to vector<128xf32>
    %218 = vector.shape_cast %217 : vector<128xf32> to vector<1x128xf32>
    %c4 = arith.constant 4 : index
    %c0_82 = arith.constant 0 : index
    %219 = vector.load %arg24[%c4, %c0_82] : memref<5x128xf32, #tpu.memory_space<vmem>>, vector<1x128xf32>
    tpu.vector_store %arg24[%c4, %c0_82], %218 {strides = array<i32>} : memref<5x128xf32, #tpu.memory_space<vmem>>, vector<1x128xf32>,
    %c0_83 = arith.constant 0 : index
    %c0_84 = arith.constant 0 : index
    %220 = vector.load %arg24[%c0_83, %c0_84] : memref<5x128xf32, #tpu.memory_space<vmem>>, vector<5x128xf32>
    %c0_85 = arith.constant 0 : index
    %c0_86 = arith.constant 0 : index
    %221 = vector.load %arg17[%c0_85, %c0_86] : memref<1x128xf32, #tpu.memory_space<vmem>>, vector<1x128xf32>
    %222 = vector.broadcast %221 : vector<1x128xf32> to vector<5x128xf32>
    %223 = arith.mulf %222, %104 : vector<5x128xf32>
    %224 = arith.addf %220, %223 : vector<5x128xf32>
    %cst_87 = arith.constant 0.000000e+00 : f32
    %225 = vector.broadcast %cst_87 : f32 to vector<5x128xf32>
    %226 = arith.subf %225, %52 : vector<5x128xf32>
    %227 = math.exp %226 : vector<5x128xf32>
    %cst_88 = arith.constant 1.000000e+00 : f32
    %228 = vector.broadcast %cst_88 : f32 to vector<5x128xf32>
    %229 = arith.addf %228, %227 : vector<5x128xf32>
    %230 = tpu.reciprocal %229 {approx = true} : vector<5x128xf32> -> vector<5x128xf32>
    %231 = arith.mulf %52, %230 : vector<5x128xf32>
    %232 = arith.mulf %224, %231 : vector<5x128xf32>
    %233 = vector.broadcast %134 : vector<1x128xf32> to vector<5x128xf32>
    %234 = arith.mulf %232, %233 : vector<5x128xf32>
    %c0_89 = arith.constant 0 : index
    %c0_90 = arith.constant 0 : index
    %235 = vector.load %arg18[%c0_89, %c0_90] : memref<128x32xbf16, #tpu.memory_space<vmem>>, vector<128x32xbf16>
    %236 = arith.truncf %234 : vector<5x128xf32> to vector<5x128xbf16>
    %cst_91 = arith.constant dense<0.000000e+00> : vector<5x32xf32>
    %237 = tpu.matmul %236, %235, %cst_91 {dimension_numbers = #tpu.dot_dimension_numbers<[1], [0], [0], [1], [0, 0, 1, 1], [], []>} : vector<5x128xbf16>, vector<128x32xbf16>, vector<5x32xf32> -> vector<5x32xf32>
    %238 = vector.broadcast %136 : vector<1x128xf32> to vector<5x128xf32>
    %239 = arith.mulf %232, %238 : vector<5x128xf32>
    %c0_92 = arith.constant 0 : index
    %c0_93 = arith.constant 0 : index
    %240 = vector.load %arg18[%c0_92, %c0_93] : memref<128x32xbf16, #tpu.memory_space<vmem>>, vector<128x32xbf16>
    %241 = arith.truncf %239 : vector<5x128xf32> to vector<5x128xbf16>
    %cst_94 = arith.constant dense<0.000000e+00> : vector<5x32xf32>
    %242 = tpu.matmul %241, %240, %cst_94 {dimension_numbers = #tpu.dot_dimension_numbers<[1], [0], [0], [1], [0, 0, 1, 1], [], []>} : vector<5x128xbf16>, vector<128x32xbf16>, vector<5x32xf32> -> vector<5x32xf32>
    %cst_95 = arith.constant dense<0.000000e+00> : vector<5x32xf32>
    %243 = tpu.matmul %37, %242, %cst_95 {dimension_numbers = #tpu.dot_dimension_numbers<[1], [0], [0], [1], [0, 0, 1, 1], [], []>} : vector<5x5xf32>, vector<5x32xf32>, vector<5x32xf32> -> vector<5x32xf32>
    %244 = arith.addf %237, %243 : vector<5x32xf32>
    %cst_96 = arith.constant 5.000000e-01 : f32
    %245 = vector.broadcast %cst_96 : f32 to vector<5x32xf32>
    %246 = arith.mulf %245, %244 : vector<5x32xf32>
    %c0_97 = arith.constant 0 : index
    %c0_98 = arith.constant 0 : index
    %c0_99 = arith.constant 0 : index
    %247 = vector.load %arg22[%c0_97, %c0_98, %c0_99] : memref<1x5x32xf32, #tpu.memory_space<vmem>>, vector<1x5x32xf32>
    %248 = vector.shape_cast %247 : vector<1x5x32xf32> to vector<5x32xf32>
    %249 = vector.shape_cast %246 : vector<5x32xf32> to vector<1x5x32xf32>
    tpu.vector_store %arg22[%c0_97, %c0_98, %c0_99], %249 {strides = array<i32>} : memref<1x5x32xf32, #tpu.memory_space<vmem>>, vector<1x5x32xf32>,
    %c0_100 = arith.constant 0 : index
    %c0_101 = arith.constant 0 : index
    %c0_102 = arith.constant 0 : index
    %250 = vector.load %arg23[%c0_100, %c0_101, %c0_102] : memref<1x5x32xf32, #tpu.memory_space<vmem>>, vector<1x5x32xf32>
    %251 = vector.shape_cast %250 : vector<1x5x32xf32> to vector<5x32xf32>
    %252 = vector.shape_cast %4 : vector<5x32xf32> to vector<1x5x32xf32>
    tpu.vector_store %arg23[%c0_100, %c0_101, %c0_102], %252 {strides = array<i32>} : memref<1x5x32xf32, #tpu.memory_space<vmem>>, vector<1x5x32xf32>,
    return
  }
  func.func @transform_0(%arg0: i32) -> (i32, i32, i32) {
    %c0_i32 = arith.constant 0 : i32
    %c0_i32_0 = arith.constant 0 : i32
    %c0_i32_1 = arith.constant 0 : i32
    return %arg0, %c0_i32, %c0_i32_0 : i32, i32, i32
  }
  func.func @transform_1(%arg0: i32) -> (i32, i32, i32) {
    %c0_i32 = arith.constant 0 : i32
    %c0_i32_0 = arith.constant 0 : i32
    %c0_i32_1 = arith.constant 0 : i32
    return %arg0, %c0_i32, %c0_i32_0 : i32, i32, i32
  }
  func.func @transform_2(%arg0: i32) -> (i32, i32) {
    %c0_i32 = arith.constant 0 : i32
    %c0_i32_0 = arith.constant 0 : i32
    %c0_i32_1 = arith.constant 0 : i32
    return %c0_i32, %c0_i32_0 : i32, i32
  }
  func.func @transform_3(%arg0: i32) -> (i32, i32) {
    %c0_i32 = arith.constant 0 : i32
    %c0_i32_0 = arith.constant 0 : i32
    %c0_i32_1 = arith.constant 0 : i32
    return %c0_i32, %c0_i32_0 : i32, i32
  }
  func.func @transform_4(%arg0: i32) -> (i32, i32) {
    %c0_i32 = arith.constant 0 : i32
    %c0_i32_0 = arith.constant 0 : i32
    %c0_i32_1 = arith.constant 0 : i32
    return %c0_i32, %c0_i32_0 : i32, i32
  }
  func.func @transform_5(%arg0: i32) -> (i32, i32) {
    %c0_i32 = arith.constant 0 : i32
    %c0_i32_0 = arith.constant 0 : i32
    %c0_i32_1 = arith.constant 0 : i32
    return %c0_i32, %c0_i32_0 : i32, i32
  }
  func.func @transform_6(%arg0: i32) -> (i32, i32) {
    %c0_i32 = arith.constant 0 : i32
    %c0_i32_0 = arith.constant 0 : i32
    %c0_i32_1 = arith.constant 0 : i32
    return %c0_i32, %c0_i32_0 : i32, i32
  }
  func.func @transform_7(%arg0: i32) -> (i32, i32) {
    %c0_i32 = arith.constant 0 : i32
    %c0_i32_0 = arith.constant 0 : i32
    %c0_i32_1 = arith.constant 0 : i32
    return %c0_i32, %c0_i32_0 : i32, i32
  }
  func.func @transform_8(%arg0: i32) -> (i32, i32) {
    %c0_i32 = arith.constant 0 : i32
    %c0_i32_0 = arith.constant 0 : i32
    %c0_i32_1 = arith.constant 0 : i32
    return %c0_i32, %c0_i32_0 : i32, i32
  }
  func.func @transform_9(%arg0: i32) -> (i32, i32) {
    %c0_i32 = arith.constant 0 : i32
    %c0_i32_0 = arith.constant 0 : i32
    %c0_i32_1 = arith.constant 0 : i32
    return %c0_i32, %c0_i32_0 : i32, i32
  }
  func.func @transform_10(%arg0: i32) -> (i32, i32) {
    %c0_i32 = arith.constant 0 : i32
    %c0_i32_0 = arith.constant 0 : i32
    %c0_i32_1 = arith.constant 0 : i32
    return %c0_i32, %c0_i32_0 : i32, i32
  }
  func.func @transform_11(%arg0: i32) -> (i32, i32) {
    %c0_i32 = arith.constant 0 : i32
    %c0_i32_0 = arith.constant 0 : i32
    %c0_i32_1 = arith.constant 0 : i32
    return %c0_i32, %c0_i32_0 : i32, i32
  }
  func.func @transform_12(%arg0: i32) -> (i32, i32) {
    %c0_i32 = arith.constant 0 : i32
    %c0_i32_0 = arith.constant 0 : i32
    %c0_i32_1 = arith.constant 0 : i32
    return %c0_i32, %c0_i32_0 : i32, i32
  }
  func.func @transform_13(%arg0: i32) -> (i32, i32) {
    %c0_i32 = arith.constant 0 : i32
    %c0_i32_0 = arith.constant 0 : i32
    %c0_i32_1 = arith.constant 0 : i32
    return %c0_i32, %c0_i32_0 : i32, i32
  }
  func.func @transform_14(%arg0: i32) -> (i32, i32) {
    %c0_i32 = arith.constant 0 : i32
    %c0_i32_0 = arith.constant 0 : i32
    %c0_i32_1 = arith.constant 0 : i32
    return %c0_i32, %c0_i32_0 : i32, i32
  }
  func.func @transform_15(%arg0: i32) -> (i32, i32) {
    %c0_i32 = arith.constant 0 : i32
    %c0_i32_0 = arith.constant 0 : i32
    %c0_i32_1 = arith.constant 0 : i32
    return %c0_i32, %c0_i32_0 : i32, i32
  }
  func.func @transform_16(%arg0: i32) -> (i32, i32) {
    %c0_i32 = arith.constant 0 : i32
    %c0_i32_0 = arith.constant 0 : i32
    %c0_i32_1 = arith.constant 0 : i32
    return %c0_i32, %c0_i32_0 : i32, i32
  }
  func.func @transform_17(%arg0: i32) -> (i32, i32) {
    %c0_i32 = arith.constant 0 : i32
    %c0_i32_0 = arith.constant 0 : i32
    %c0_i32_1 = arith.constant 0 : i32
    return %c0_i32, %c0_i32_0 : i32, i32
  }
  func.func @transform_18(%arg0: i32) -> (i32, i32) {
    %c0_i32 = arith.constant 0 : i32
    %c0_i32_0 = arith.constant 0 : i32
    %c0_i32_1 = arith.constant 0 : i32
    return %c0_i32, %c0_i32_0 : i32, i32
  }
  func.func @transform_19(%arg0: i32) -> (i32, i32) {
    %c0_i32 = arith.constant 0 : i32
    %c0_i32_0 = arith.constant 0 : i32
    %c0_i32_1 = arith.constant 0 : i32
    return %c0_i32, %c0_i32_0 : i32, i32
  }
  func.func @transform_20(%arg0: i32) -> (i32, i32) {
    %c0_i32 = arith.constant 0 : i32
    %c0_i32_0 = arith.constant 0 : i32
    %c0_i32_1 = arith.constant 0 : i32
    return %c0_i32, %c0_i32_0 : i32, i32
  }
  func.func @transform_21(%arg0: i32) -> (i32, i32, i32) {
    %c0_i32 = arith.constant 0 : i32
    %c0_i32_0 = arith.constant 0 : i32
    %c0_i32_1 = arith.constant 0 : i32
    return %arg0, %c0_i32, %c0_i32_0 : i32, i32, i32
  }
  func.func @transform_22(%arg0: i32) -> (i32, i32, i32) {
    %c0_i32 = arith.constant 0 : i32
    %c0_i32_0 = arith.constant 0 : i32
    %c0_i32_1 = arith.constant 0 : i32
    return %arg0, %c0_i32, %c0_i32_0 : i32, i32, i32
  }
}

module attributes {stable_mosaic.version = 11 : i64} {
  func.func @_ln_linear_kernel(%arg0: i32, %arg1: memref<2x16xf32, #tpu.memory_space<vmem>>, %arg2: memref<1x16xf32, #tpu.memory_space<vmem>>, %arg3: memref<1x16xf32, #tpu.memory_space<vmem>>, %arg4: memref<16x8xf32, #tpu.memory_space<vmem>>, %arg5: memref<1x8xf32, #tpu.memory_space<vmem>>, %arg6: memref<2x8xf32, #tpu.memory_space<vmem>>) attributes {dimension_semantics = [#tpu.dimension_semantics<arbitrary>], iteration_bounds = array<i64: 1>, scalar_prefetch = 0 : i64, scratch_operands = 0 : i64, tpu.core_type = #tpu.core_type<tc>, window_params = [{pipeline_mode = #tpu.pipeline_mode<synchronous>, transform_indices = @transform_0, window_bounds = array<i64: 2, 16>}, {pipeline_mode = #tpu.pipeline_mode<synchronous>, transform_indices = @transform_1, window_bounds = array<i64: 1, 16>}, {pipeline_mode = #tpu.pipeline_mode<synchronous>, transform_indices = @transform_2, window_bounds = array<i64: 1, 16>}, {pipeline_mode = #tpu.pipeline_mode<synchronous>, transform_indices = @transform_3, window_bounds = array<i64: 16, 8>}, {pipeline_mode = #tpu.pipeline_mode<synchronous>, transform_indices = @transform_4, window_bounds = array<i64: 1, 8>}, {pipeline_mode = #tpu.pipeline_mode<synchronous>, transform_indices = @transform_5, window_bounds = array<i64: 2, 8>}]} {
    %c0 = arith.constant 0 : index
    %c0_0 = arith.constant 0 : index
    %0 = vector.load %arg1[%c0, %c0_0] : memref<2x16xf32, #tpu.memory_space<vmem>>, vector<2x16xf32>
    %c0_1 = arith.constant 0 : index
    %c0_2 = arith.constant 0 : index
    %1 = vector.load %arg2[%c0_1, %c0_2] : memref<1x16xf32, #tpu.memory_space<vmem>>, vector<1x16xf32>
    %c0_3 = arith.constant 0 : index
    %c0_4 = arith.constant 0 : index
    %2 = vector.load %arg3[%c0_3, %c0_4] : memref<1x16xf32, #tpu.memory_space<vmem>>, vector<1x16xf32>
    %cst = arith.constant dense<0.000000e+00> : vector<2xf32>
    %3 = vector.multi_reduction <add>, %0, %cst [1] : vector<2x16xf32> to vector<2xf32>
    %4 = vector.shape_cast %3 : vector<2xf32> to vector<2x1xf32>
    %cst_5 = arith.constant 1.600000e+01 : f32
    %5 = vector.broadcast %cst_5 : f32 to vector<2x1xf32>
    %6 = arith.divf %4, %5 : vector<2x1xf32>
    %7 = vector.broadcast %6 : vector<2x1xf32> to vector<2x16xf32>
    %8 = arith.subf %0, %7 : vector<2x16xf32>
    %9 = vector.broadcast %6 : vector<2x1xf32> to vector<2x16xf32>
    %10 = arith.subf %0, %9 : vector<2x16xf32>
    %11 = arith.mulf %8, %10 : vector<2x16xf32>
    %cst_6 = arith.constant dense<0.000000e+00> : vector<2xf32>
    %12 = vector.multi_reduction <add>, %11, %cst_6 [1] : vector<2x16xf32> to vector<2xf32>
    %13 = vector.shape_cast %12 : vector<2xf32> to vector<2x1xf32>
    %cst_7 = arith.constant 1.600000e+01 : f32
    %14 = vector.broadcast %cst_7 : f32 to vector<2x1xf32>
    %15 = arith.divf %13, %14 : vector<2x1xf32>
    %16 = vector.broadcast %6 : vector<2x1xf32> to vector<2x16xf32>
    %17 = arith.subf %0, %16 : vector<2x16xf32>
    %cst_8 = arith.constant 9.99999997E-7 : f32
    %18 = vector.broadcast %cst_8 : f32 to vector<2x1xf32>
    %19 = arith.addf %15, %18 : vector<2x1xf32>
    %20 = math.rsqrt %19 : vector<2x1xf32>
    %21 = vector.broadcast %20 : vector<2x1xf32> to vector<2x16xf32>
    %22 = arith.mulf %17, %21 : vector<2x16xf32>
    %23 = vector.broadcast %1 : vector<1x16xf32> to vector<2x16xf32>
    %24 = arith.mulf %22, %23 : vector<2x16xf32>
    %25 = vector.broadcast %2 : vector<1x16xf32> to vector<2x16xf32>
    %26 = arith.addf %24, %25 : vector<2x16xf32>
    %c0_9 = arith.constant 0 : index
    %c0_10 = arith.constant 0 : index
    %27 = vector.load %arg4[%c0_9, %c0_10] : memref<16x8xf32, #tpu.memory_space<vmem>>, vector<16x8xf32>
    %cst_11 = arith.constant dense<0.000000e+00> : vector<2x8xf32>
    %28 = tpu.matmul %26, %27, %cst_11 {dimension_numbers = #tpu.dot_dimension_numbers<[1], [0], [0], [1], [0, 0, 1, 1], [], []>} : vector<2x16xf32>, vector<16x8xf32>, vector<2x8xf32> -> vector<2x8xf32>
    %c0_12 = arith.constant 0 : index
    %c0_13 = arith.constant 0 : index
    %29 = vector.load %arg5[%c0_12, %c0_13] : memref<1x8xf32, #tpu.memory_space<vmem>>, vector<1x8xf32>
    %30 = vector.broadcast %29 : vector<1x8xf32> to vector<2x8xf32>
    %31 = arith.addf %28, %30 : vector<2x8xf32>
    %c0_14 = arith.constant 0 : index
    %c0_15 = arith.constant 0 : index
    %32 = vector.load %arg6[%c0_14, %c0_15] : memref<2x8xf32, #tpu.memory_space<vmem>>, vector<2x8xf32>
    tpu.vector_store %arg6[%c0_14, %c0_15], %31 {strides = array<i32>} : memref<2x8xf32, #tpu.memory_space<vmem>>, vector<2x8xf32>,
    return
  }
  func.func @transform_0(%arg0: i32) -> (i32, i32) {
    %c0_i32 = arith.constant 0 : i32
    %c0_i32_0 = arith.constant 0 : i32
    %c0_i32_1 = arith.constant 0 : i32
    return %c0_i32, %c0_i32_0 : i32, i32
  }
  func.func @transform_1(%arg0: i32) -> (i32, i32) {
    %c0_i32 = arith.constant 0 : i32
    %c0_i32_0 = arith.constant 0 : i32
    %c0_i32_1 = arith.constant 0 : i32
    return %c0_i32, %c0_i32_0 : i32, i32
  }
  func.func @transform_2(%arg0: i32) -> (i32, i32) {
    %c0_i32 = arith.constant 0 : i32
    %c0_i32_0 = arith.constant 0 : i32
    %c0_i32_1 = arith.constant 0 : i32
    return %c0_i32, %c0_i32_0 : i32, i32
  }
  func.func @transform_3(%arg0: i32) -> (i32, i32) {
    %c0_i32 = arith.constant 0 : i32
    %c0_i32_0 = arith.constant 0 : i32
    %c0_i32_1 = arith.constant 0 : i32
    return %c0_i32, %c0_i32_0 : i32, i32
  }
  func.func @transform_4(%arg0: i32) -> (i32, i32) {
    %c0_i32 = arith.constant 0 : i32
    %c0_i32_0 = arith.constant 0 : i32
    %c0_i32_1 = arith.constant 0 : i32
    return %c0_i32, %c0_i32_0 : i32, i32
  }
  func.func @transform_5(%arg0: i32) -> (i32, i32) {
    %c0_i32 = arith.constant 0 : i32
    %c0_i32_0 = arith.constant 0 : i32
    %c0_i32_1 = arith.constant 0 : i32
    return %c0_i32, %c0_i32_0 : i32, i32
  }
}

module attributes {stable_mosaic.version = 11 : i64} {
  func.func @_ln_linear_kernel(%arg0: i32, %arg1: memref<2x8xf32, #tpu.memory_space<vmem>>, %arg2: memref<1x8xf32, #tpu.memory_space<vmem>>, %arg3: memref<1x8xf32, #tpu.memory_space<vmem>>, %arg4: memref<8x1xf32, #tpu.memory_space<vmem>>, %arg5: memref<1x1xf32, #tpu.memory_space<vmem>>, %arg6: memref<2x1xf32, #tpu.memory_space<vmem>>) attributes {dimension_semantics = [#tpu.dimension_semantics<arbitrary>], iteration_bounds = array<i64: 1>, scalar_prefetch = 0 : i64, scratch_operands = 0 : i64, tpu.core_type = #tpu.core_type<tc>, window_params = [{pipeline_mode = #tpu.pipeline_mode<synchronous>, transform_indices = @transform_0, window_bounds = array<i64: 2, 8>}, {pipeline_mode = #tpu.pipeline_mode<synchronous>, transform_indices = @transform_1, window_bounds = array<i64: 1, 8>}, {pipeline_mode = #tpu.pipeline_mode<synchronous>, transform_indices = @transform_2, window_bounds = array<i64: 1, 8>}, {pipeline_mode = #tpu.pipeline_mode<synchronous>, transform_indices = @transform_3, window_bounds = array<i64: 8, 1>}, {pipeline_mode = #tpu.pipeline_mode<synchronous>, transform_indices = @transform_4, window_bounds = array<i64: 1, 1>}, {pipeline_mode = #tpu.pipeline_mode<synchronous>, transform_indices = @transform_5, window_bounds = array<i64: 2, 1>}]} {
    %c0 = arith.constant 0 : index
    %c0_0 = arith.constant 0 : index
    %0 = vector.load %arg1[%c0, %c0_0] : memref<2x8xf32, #tpu.memory_space<vmem>>, vector<2x8xf32>
    %c0_1 = arith.constant 0 : index
    %c0_2 = arith.constant 0 : index
    %1 = vector.load %arg2[%c0_1, %c0_2] : memref<1x8xf32, #tpu.memory_space<vmem>>, vector<1x8xf32>
    %c0_3 = arith.constant 0 : index
    %c0_4 = arith.constant 0 : index
    %2 = vector.load %arg3[%c0_3, %c0_4] : memref<1x8xf32, #tpu.memory_space<vmem>>, vector<1x8xf32>
    %cst = arith.constant dense<0.000000e+00> : vector<2xf32>
    %3 = vector.multi_reduction <add>, %0, %cst [1] : vector<2x8xf32> to vector<2xf32>
    %4 = vector.shape_cast %3 : vector<2xf32> to vector<2x1xf32>
    %cst_5 = arith.constant 8.000000e+00 : f32
    %5 = vector.broadcast %cst_5 : f32 to vector<2x1xf32>
    %6 = arith.divf %4, %5 : vector<2x1xf32>
    %7 = vector.broadcast %6 : vector<2x1xf32> to vector<2x8xf32>
    %8 = arith.subf %0, %7 : vector<2x8xf32>
    %9 = vector.broadcast %6 : vector<2x1xf32> to vector<2x8xf32>
    %10 = arith.subf %0, %9 : vector<2x8xf32>
    %11 = arith.mulf %8, %10 : vector<2x8xf32>
    %cst_6 = arith.constant dense<0.000000e+00> : vector<2xf32>
    %12 = vector.multi_reduction <add>, %11, %cst_6 [1] : vector<2x8xf32> to vector<2xf32>
    %13 = vector.shape_cast %12 : vector<2xf32> to vector<2x1xf32>
    %cst_7 = arith.constant 8.000000e+00 : f32
    %14 = vector.broadcast %cst_7 : f32 to vector<2x1xf32>
    %15 = arith.divf %13, %14 : vector<2x1xf32>
    %16 = vector.broadcast %6 : vector<2x1xf32> to vector<2x8xf32>
    %17 = arith.subf %0, %16 : vector<2x8xf32>
    %cst_8 = arith.constant 9.99999997E-7 : f32
    %18 = vector.broadcast %cst_8 : f32 to vector<2x1xf32>
    %19 = arith.addf %15, %18 : vector<2x1xf32>
    %20 = math.rsqrt %19 : vector<2x1xf32>
    %21 = vector.broadcast %20 : vector<2x1xf32> to vector<2x8xf32>
    %22 = arith.mulf %17, %21 : vector<2x8xf32>
    %23 = vector.broadcast %1 : vector<1x8xf32> to vector<2x8xf32>
    %24 = arith.mulf %22, %23 : vector<2x8xf32>
    %25 = vector.broadcast %2 : vector<1x8xf32> to vector<2x8xf32>
    %26 = arith.addf %24, %25 : vector<2x8xf32>
    %c0_9 = arith.constant 0 : index
    %c0_10 = arith.constant 0 : index
    %27 = vector.load %arg4[%c0_9, %c0_10] : memref<8x1xf32, #tpu.memory_space<vmem>>, vector<8x1xf32>
    %cst_11 = arith.constant dense<0.000000e+00> : vector<2x1xf32>
    %28 = tpu.matmul %26, %27, %cst_11 {dimension_numbers = #tpu.dot_dimension_numbers<[1], [0], [0], [1], [0, 0, 1, 1], [], []>} : vector<2x8xf32>, vector<8x1xf32>, vector<2x1xf32> -> vector<2x1xf32>
    %c0_12 = arith.constant 0 : index
    %c0_13 = arith.constant 0 : index
    %29 = vector.load %arg5[%c0_12, %c0_13] : memref<1x1xf32, #tpu.memory_space<vmem>>, vector<1x1xf32>
    %30 = vector.broadcast %29 : vector<1x1xf32> to vector<2x1xf32>
    %31 = arith.addf %28, %30 : vector<2x1xf32>
    %c0_14 = arith.constant 0 : index
    %c0_15 = arith.constant 0 : index
    %32 = vector.load %arg6[%c0_14, %c0_15] : memref<2x1xf32, #tpu.memory_space<vmem>>, vector<2x1xf32>
    tpu.vector_store %arg6[%c0_14, %c0_15], %31 {strides = array<i32>} : memref<2x1xf32, #tpu.memory_space<vmem>>, vector<2x1xf32>,
    return
  }
  func.func @transform_0(%arg0: i32) -> (i32, i32) {
    %c0_i32 = arith.constant 0 : i32
    %c0_i32_0 = arith.constant 0 : i32
    %c0_i32_1 = arith.constant 0 : i32
    return %c0_i32, %c0_i32_0 : i32, i32
  }
  func.func @transform_1(%arg0: i32) -> (i32, i32) {
    %c0_i32 = arith.constant 0 : i32
    %c0_i32_0 = arith.constant 0 : i32
    %c0_i32_1 = arith.constant 0 : i32
    return %c0_i32, %c0_i32_0 : i32, i32
  }
  func.func @transform_2(%arg0: i32) -> (i32, i32) {
    %c0_i32 = arith.constant 0 : i32
    %c0_i32_0 = arith.constant 0 : i32
    %c0_i32_1 = arith.constant 0 : i32
    return %c0_i32, %c0_i32_0 : i32, i32
  }
  func.func @transform_3(%arg0: i32) -> (i32, i32) {
    %c0_i32 = arith.constant 0 : i32
    %c0_i32_0 = arith.constant 0 : i32
    %c0_i32_1 = arith.constant 0 : i32
    return %c0_i32, %c0_i32_0 : i32, i32
  }
  func.func @transform_4(%arg0: i32) -> (i32, i32) {
    %c0_i32 = arith.constant 0 : i32
    %c0_i32_0 = arith.constant 0 : i32
    %c0_i32_1 = arith.constant 0 : i32
    return %c0_i32, %c0_i32_0 : i32, i32
  }
  func.func @transform_5(%arg0: i32) -> (i32, i32) {
    %c0_i32 = arith.constant 0 : i32
    %c0_i32_0 = arith.constant 0 : i32
    %c0_i32_1 = arith.constant 0 : i32
    return %c0_i32, %c0_i32_0 : i32, i32
  }
}

</mosaic_0001>

<llo_original>
// kernel: _lambda_.6
$region0: #{_lambda_.6}
  #allocation0 [shape = 'u32[]', space=smem, size = 0x4, offset = 0x4, fixed_abs, tag = 'smem constant byte address 0x4 - core index']
  #allocation1 [shape = 'u32[72,128]{1,0:T(1,128)}', space=vmem, size = 0x9000, scoped, tag = 'internal scratch']
  %s0 = inlined_call_operand.vmem [shape: f32[2,4,64], index: 0, kind: input, shape index: {}]
  %s1 = inlined_call_operand.vmem [shape: bf16[64,32], index: 1, kind: input, shape index: {}]
  %s2 = inlined_call_operand.vmem [shape: f32[1,32], index: 2, kind: input, shape index: {}]
  %s3 = inlined_call_operand.vmem [shape: f32[5,32], index: 3, kind: input, shape index: {}]
  %s4 = inlined_call_operand.vmem [shape: f32[2,5,32], index: 4, kind: output, shape index: {}]
  %s5 = sld [smem:[#allocation0]]
  $region49: #{_lambda_.6} parent=0
    _
  %s7 = ssub.s32 1, %s5
  %s8 = scalar_select 0, %s7, %s5
  loop: start=0, step=1, limit=4
  $region2: #{_lambda_.6} parent=0 // loop_pre_header
    _
  $region3: #{_lambda_.6} parent=0 // loop_header
    %s10 = sphi 0, %s14
    %p11 = scmp.ge.s32.totalorder %s10, 4
    %s20 = sphi 0, %s22
    %s23 = sphi 0, %s20
    %s24 = sphi 0, %s23
    %s40 = sphi 0, %s24
    %s44 = sphi 0, %s44
    %s46 = sphi 0, %s44
    %s47 = sphi 0, %s46
    %s61 = sphi 0, %s47
    %s65 = sphi 0, %s65
    %s67 = sphi 0, %s65
    %s68 = sphi 0, %s67
    %s82 = sphi 0, %s68
    %s86 = sphi 0, %s86
    %s88 = sphi 0, %s86
    %s89 = sphi 0, %s88
    %s103 = sphi 0, %s89
    %s109 = sphi 0, %s111
    %s112 = sphi 0, %s109
    %s113 = sphi 0, %s112
    %s129 = sphi 0, %s113
  $region4: #{_lambda_.6} parent=0 // loop_header_branch
    %13 = sbr.rel (%p11) target = $region8
  $region5: #{_lambda_.6} parent=0 // loop_body
    %s15 = ssub.s32 %s10, 1
    %s16 = ssub.s32 %s10, 2
    %s17 = sadd.s32 %s10, 1
    %s18 = ssub.s32 %s10, %s17
    %p19 = scmp.eq.s32.totalorder %s18, 0
    %s21 = sadd.s32 %s20, 1
    %s22 = scalar_select %p19, %s20, %s21
    %p25 = pneg %p19
    %p26 = scmp.eq.s32.totalorder %s10, 1
    %p27 = por %p25, %p26
    %p28 = scmp.ne.s32.totalorder %s20, %s23
    %p29 = scmp.eq.s32.totalorder %s10, 0
    %p30 = por %p28, %p29
    %p31 = scmp.ne.s32.totalorder %s20, %s23
    %p32 = scmp.eq.s32.totalorder %s15, 1
    %p33 = por %p31, %p32
    %p34 = scmp.ne.s32.totalorder %s23, %s24
    %p35 = scmp.eq.s32.totalorder %s15, 0
    %p36 = por %p34, %p35
    %p37 = scmp.ne.s32.totalorder %s23, %s24
    %p38 = scmp.eq.s32.totalorder %s16, 1
    %p39 = por %p37, %p38
    %p41 = scmp.ne.s32.totalorder %s24, %s40
    %p42 = scmp.eq.s32.totalorder %s16, 0
    %p43 = por %p41, %p42
    %s45 = sadd.s32 %s44, 1
    %p48 = scmp.eq.s32.totalorder %s10, 1
    %p49 = scmp.ne.s32.totalorder %s44, %s46
    %p50 = scmp.eq.s32.totalorder %s10, 0
    %p51 = por %p49, %p50
    %p52 = scmp.ne.s32.totalorder %s44, %s46
    %p53 = scmp.eq.s32.totalorder %s15, 1
    %p54 = por %p52, %p53
    %p55 = scmp.ne.s32.totalorder %s46, %s47
    %p56 = scmp.eq.s32.totalorder %s15, 0
    %p57 = por %p55, %p56
    %p58 = scmp.ne.s32.totalorder %s46, %s47
    %p59 = scmp.eq.s32.totalorder %s16, 1
    %p60 = por %p58, %p59
    %p62 = scmp.ne.s32.totalorder %s47, %s61
    %p63 = scmp.eq.s32.totalorder %s16, 0
    %p64 = por %p62, %p63
    %s66 = sadd.s32 %s65, 1
    %p69 = scmp.eq.s32.totalorder %s10, 1
    %p70 = scmp.ne.s32.totalorder %s65, %s67
    %p71 = scmp.eq.s32.totalorder %s10, 0
    %p72 = por %p70, %p71
    %p73 = scmp.ne.s32.totalorder %s65, %s67
    %p74 = scmp.eq.s32.totalorder %s15, 1
    %p75 = por %p73, %p74
    %p76 = scmp.ne.s32.totalorder %s67, %s68
    %p77 = scmp.eq.s32.totalorder %s15, 0
    %p78 = por %p76, %p77
    %p79 = scmp.ne.s32.totalorder %s67, %s68
    %p80 = scmp.eq.s32.totalorder %s16, 1
    %p81 = por %p79, %p80
    %p83 = scmp.ne.s32.totalorder %s68, %s82
    %p84 = scmp.eq.s32.totalorder %s16, 0
    %p85 = por %p83, %p84
    %s87 = sadd.s32 %s86, 1
    %p90 = scmp.eq.s32.totalorder %s10, 1
    %p91 = scmp.ne.s32.totalorder %s86, %s88
    %p92 = scmp.eq.s32.totalorder %s10, 0
    %p93 = por %p91, %p92
    %p94 = scmp.ne.s32.totalorder %s86, %s88
    %p95 = scmp.eq.s32.totalorder %s15, 1
    %p96 = por %p94, %p95
    %p97 = scmp.ne.s32.totalorder %s88, %s89
    %p98 = scmp.eq.s32.totalorder %s15, 0
    %p99 = por %p97, %p98
    %p100 = scmp.ne.s32.totalorder %s88, %s89
    %p101 = scmp.eq.s32.totalorder %s16, 1
    %p102 = por %p100, %p101
    %p104 = scmp.ne.s32.totalorder %s89, %s103
    %p105 = scmp.eq.s32.totalorder %s16, 0
    %p106 = por %p104, %p105
    %s107 = ssub.s32 %s10, %s17
    %p108 = scmp.eq.s32.totalorder %s107, 0
    %s110 = sadd.s32 %s109, 1
    %s111 = scalar_select %p108, %s109, %s110
    %p114 = pneg %p108
    %p115 = scmp.eq.s32.totalorder %s10, 1
    %p116 = por %p114, %p115
    %p117 = scmp.ne.s32.totalorder %s109, %s112
    %p118 = scmp.eq.s32.totalorder %s10, 0
    %p119 = por %p117, %p118
    %p120 = scmp.ne.s32.totalorder %s109, %s112
    %p121 = scmp.eq.s32.totalorder %s15, 1
    %p122 = por %p120, %p121
    %p123 = scmp.ne.s32.totalorder %s112, %s113
    %p124 = scmp.eq.s32.totalorder %s15, 0
    %p125 = por %p123, %p124
    %p126 = scmp.ne.s32.totalorder %s112, %s113
    %p127 = scmp.eq.s32.totalorder %s16, 1
    %p128 = por %p126, %p127
    %p130 = scmp.ne.s32.totalorder %s113, %s129
    %p131 = scmp.eq.s32.totalorder %s16, 0
    %p132 = por %p130, %p131
    %p133 = scmp.le.s32.totalorder 1, %s10
    %p134 = scmp.lt.s32.totalorder %s10, 3
    %p135 = pnand %p133, %p134
    %p136 = pneg %p135
    // Predicated region
    $region9: #{_lambda_.6} parent=5 // pred_check
      _
    $region10: #{_lambda_.6} parent=5 // pred_check_branch
      %138 = sbr.rel (%p135) target = $region12
    $region11: #{_lambda_.6} parent=5 // pred_region
      %s139 = ssub.s32 %s10, 1
      // Predicated region
      $region13: #{_lambda_.6} parent=11 // pred_check
        %p140 = pneg %p57
      $region14: #{_lambda_.6} parent=11 // pred_check_branch
        %142 = sbr.rel (%p140) target = $region16
      $region15: #{_lambda_.6} parent=11 // pred_region
        _
      $region16: #{_lambda_.6} parent=11 // pred_fallthru
        _
      // Predicated region
      $region17: #{_lambda_.6} parent=11 // pred_check
        %p143 = pneg %p78
      $region18: #{_lambda_.6} parent=11 // pred_check_branch
        %145 = sbr.rel (%p143) target = $region20
      $region19: #{_lambda_.6} parent=11 // pred_region
        _
      $region20: #{_lambda_.6} parent=11 // pred_fallthru
        _
      // Predicated region
      $region21: #{_lambda_.6} parent=11 // pred_check
        %p146 = pneg %p99
      $region22: #{_lambda_.6} parent=11 // pred_check_branch
        %148 = sbr.rel (%p146) target = $region24
      $region23: #{_lambda_.6} parent=11 // pred_region
        _
      $region24: #{_lambda_.6} parent=11 // pred_fallthru
        _
    $region12: #{_lambda_.6} parent=5 // pred_fallthru
      _
    %p149 = scmp.lt.s32.totalorder %s10, 2
    // Predicated region
    $region25: #{_lambda_.6} parent=5 // pred_check
      %p150 = pneg %p149
    $region26: #{_lambda_.6} parent=5 // pred_check_branch
      %152 = sbr.rel (%p150) target = $region28
    $region27: #{_lambda_.6} parent=5 // pred_region
      // Predicated region
      $region29: #{_lambda_.6} parent=27 // pred_check
        %p153 = pneg %p30
      $region30: #{_lambda_.6} parent=27 // pred_check_branch
        %155 = sbr.rel (%p153) target = $region32
      $region31: #{_lambda_.6} parent=27 // pred_region
        %p156 = scmp.lt.s32.totalorder %s10, 1
        %s157 = scalar_select %p156, %s10, 1
        %s158 = smul.addr %s157, 4
        %s159 = scalar_lea.vmem %s0, %s158
      $region32: #{_lambda_.6} parent=27 // pred_fallthru
        _
    $region28: #{_lambda_.6} parent=5 // pred_fallthru
      _
    %p160 = scmp.le.s32.totalorder 1, %s10
    %p161 = scmp.lt.s32.totalorder %s10, 3
    %p162 = pnand %p160, %p161
    %p163 = pneg %p162
    // Predicated region
    $region33: #{_lambda_.6} parent=5 // pred_check
      _
    $region34: #{_lambda_.6} parent=5 // pred_check_branch
      %165 = sbr.rel (%p162) target = $region36
    $region35: #{_lambda_.6} parent=5 // pred_region
      %s166 = ssub.s32 %s10, 1
      %p167 = scmp.lt.s32.totalorder %s15, 1
      %s168 = scalar_select %p167, %s15, 1
      %s169 = smul.addr %s168, 4
      %s170 = scalar_lea.vmem %s0, %s169
      %p171 = pneg %p36
      %p172 = pneg %p33
      %p173 = pneg %p57
      %p174 = pneg %p54
      %p175 = pneg %p78
      %p176 = pneg %p75
      %p177 = pneg %p99
      %p178 = pneg %p96
      %p179 = pneg %p125
      %p180 = pneg %p122
      %p181 = scmp.lt.s32.totalorder %s15, 1
      %s182 = scalar_select %p181, %s15, 1
      %s183 = smul.addr %s182, 8
      %s184 = scalar_lea.vmem %s4, %s183
      %p185 = scmp.lt.s32.totalorder %s15, 1
      %s186 = scalar_select %p185, %s15, 1
      %s187 = smul.addr %s186, 4
      %s188 = scalar_lea.vmem %s0, %s187
      %p189 = scmp.lt.s32.totalorder %s15, 1
      %s190 = scalar_select %p189, %s15, 1
      %s191 = smul.addr %s190, 8
      %s192 = scalar_lea.vmem %s4, %s191
      %v194 = vld [vmem:[%s188] sm:$0xf]
      %v195 = vld [vmem:[%s1] sm:$0xf]
      %v196 = vld [vmem:[%s1 + $0x4] sm:$0xf]
      %v197 = vld [vmem:[%s1 + $0x8] sm:$0xf]
      %v198 = vld [vmem:[%s1 + $0xc] sm:$0xf]
      %v199 = vld [vmem:[%s1 + $0x10] sm:$0xf]
      %v200 = vld [vmem:[%s1 + $0x14] sm:$0xf]
      %v201 = vld [vmem:[%s1 + $0x18] sm:$0xf]
      %v202 = vld [vmem:[%s1 + $0x1c] sm:$0xf]
      %v203 = vpack.c.bf16 %v194, %v194
      %v204 = vld [vmem:[%s2] sm:$0x1]
      %v206 = vperm.slane %v204, 0
      %v216 = vunpack.c.l.b16 %v195
      %v217 = vunpack.c.l.b16 %v196
      %v218 = vunpack.c.l.b16 %v197
      %v219 = vunpack.c.l.b16 %v198
      %v220 = vunpack.c.l.b16 %v199
      %v221 = vunpack.c.l.b16 %v200
      %v222 = vunpack.c.l.b16 %v201
      %v223 = vunpack.c.l.b16 %v202
      %v224 = vpack.c.b16 %v217, %v216
      %v225 = vpack.c.b16 %v219, %v218
      %v226 = vpack.c.b16 %v221, %v220
      %v227 = vpack.c.b16 %v223, %v222
      %vm232 = vcmask 523264
      %v234 = vsel %vm232, %v203, 0
      %236 = vmatpush.bf16.msra.mxu0 0
      %237 = vmatpush.bf16.msra.mxu0 0
      %238 = vmatpush.bf16.msra.mxu0 0
      %239 = vmatpush.bf16.msra.mxu0 0
      %240 = vmatpush.bf16.msra.mxu0 %v227
      %241 = vmatpush.bf16.msra.mxu0 %v226
      %242 = vmatpush.bf16.msra.mxu0 %v225
      %243 = vmatpush.bf16.msra.mxu0 %v224
      %244 = vmatmul.bf16.gmra.mxu0 %v234
      %v245 = vpop.f32.mrf.mxu0
      %v246 = vadd.f32 %v206, %v245
      %v247 = vpop.f32.mrf.mxu0
      %248 = vdwg.mxu0
      %v249 = vlaneseq
      %v250 = vshrl.u32 %v249, 7
      %v251 = vlaneseq
      %v252 = vand.u32 %v251, 127
      %v253 = vadd.s32 %v252, 1
      %vm254 = vcmp.eq.s32.totalorder %v250, %v253
      %v255 = vsel %vm254, 1, 0
      %v256 = vcvt.s32.f32 %v255
      %v257 = vld [vmem:[%s3] sm:$0x1f]
      %vm258 = vcmask 31744
      %v260 = vsel %vm258, %v256, 0
      %vm262 = vcmask 1043456
      %v264 = vsel %vm262, %v246, 0
      %266 = vmatpush.msra.mxu0 0.0
      %267 = vmatpush.msra.mxu0 0.0
      %268 = vmatpush.msra.mxu0 0.0
      %269 = vmatpush.msra.mxu0 0.0
      %270 = vmatpush.msra.mxu0 0.0
      %271 = vmatpush.msra.mxu0 0.0
      %272 = vmatpush.msra.mxu0 0.0
      %273 = vmatpush.msra.mxu0 0.0
      %274 = vmatpush.msra.mxu0 0.0
      %275 = vmatpush.msra.mxu0 0.0
      %276 = vmatpush.msra.mxu0 0.0
      %277 = vmatpush.msra.mxu0 0.0
      %278 = vmatpush.msra.mxu0 0.0
      %279 = vmatpush.msra.mxu0 0.0
      %280 = vmatpush.msra.mxu0 0.0
      %281 = vmatpush.msra.mxu0 %v264
      %282 = vmatmul.f32.gmra.mxu0 %v260
      %v283 = vpop.f32.mrf.mxu0
      %v284 = vadd.f32 %v257, %v283
      %285 = vdwg.mxu0
      %vm286 = vcmask 258048
      %287 = vst.msk [vmem:[%s192] sm:$0x1f] %vm286, %v284
      %p288 = scmp.lt.s32.totalorder %s15, 1
      %s289 = scalar_select %p288, %s15, 1
      %s290 = smul.addr %s289, 8
      %s291 = scalar_lea.vmem %s4, %s290
      // Predicated region
      $region37: #{_lambda_.6} parent=35 // pred_check
        %p292 = pneg %p122
      $region38: #{_lambda_.6} parent=35 // pred_check_branch
        %294 = sbr.rel (%p292) target = $region40
      $region39: #{_lambda_.6} parent=35 // pred_region
        _
      $region40: #{_lambda_.6} parent=35 // pred_fallthru
        _
    $region36: #{_lambda_.6} parent=5 // pred_fallthru
      _
    %p295 = scmp.le.s32.totalorder 2, %s10
    // Predicated region
    $region41: #{_lambda_.6} parent=5 // pred_check
      %p296 = pneg %p295
    $region42: #{_lambda_.6} parent=5 // pred_check_branch
      %298 = sbr.rel (%p296) target = $region44
    $region43: #{_lambda_.6} parent=5 // pred_region
      %s299 = ssub.s32 %s10, 2
      // Predicated region
      $region45: #{_lambda_.6} parent=43 // pred_check
        %p300 = pneg %p128
      $region46: #{_lambda_.6} parent=43 // pred_check_branch
        %302 = sbr.rel (%p300) target = $region48
      $region47: #{_lambda_.6} parent=43 // pred_region
        %p303 = scmp.lt.s32.totalorder %s16, 1
        %s304 = scalar_select %p303, %s16, 1
        %s305 = smul.addr %s304, 8
        %s306 = scalar_lea.vmem %s4, %s305
      $region48: #{_lambda_.6} parent=43 // pred_fallthru
        _
    $region44: #{_lambda_.6} parent=5 // pred_fallthru
      _
  $region6: #{_lambda_.6} parent=0 // loop_footer
    %s14 = sadd.s32 1, %s10
  $region7: #{_lambda_.6} parent=0 // loop_footer_branch
    %9 = sbr.rel target = $region3
  $region8: #{_lambda_.6} parent=0 // loop_exit
    _

// kernel: _lambda_.9
$region0: #{_lambda_.9}
  #allocation0 [shape = 'u32[]', space=smem, size = 0x4, offset = 0x4, fixed_abs, tag = 'smem constant byte address 0x4 - core index']
  #allocation1 [shape = 'u32[72,128]{1,0:T(1,128)}', space=vmem, size = 0x9000, scoped, tag = 'internal scratch']
  %s0 = inlined_call_operand.vmem [shape: f32[2,32], index: 0, kind: input, shape index: {}]
  %s1 = inlined_call_operand.vmem [shape: f32[2,32], index: 1, kind: input, shape index: {}]
  %s2 = inlined_call_operand.vmem [shape: f32[1,32], index: 2, kind: input, shape index: {}]
  %s3 = inlined_call_operand.vmem [shape: f32[1,32], index: 3, kind: input, shape index: {}]
  %s4 = inlined_call_operand.vmem [shape: f32[1,32], index: 4, kind: input, shape index: {}]
  %s5 = inlined_call_operand.vmem [shape: f32[1,32], index: 5, kind: input, shape index: {}]
  %s6 = inlined_call_operand.vmem [shape: f32[32,16], index: 6, kind: input, shape index: {}]
  %s7 = inlined_call_operand.vmem [shape: f32[1,16], index: 7, kind: input, shape index: {}]
  %s8 = inlined_call_operand.vmem [shape: f32[2,16], index: 8, kind: output, shape index: {}]
  %s9 = sld [smem:[#allocation0]]
  $region42: #{_lambda_.9} parent=0
    _
  %s11 = ssub.s32 1, %s9
  %s12 = scalar_select 0, %s11, %s9
  // Predicated region
  $region2: #{_lambda_.9} parent=0 // pred_check
    _
  $region3: #{_lambda_.9} parent=0 // pred_check_branch
    %14 = sbr.rel (0) target = $region5
  $region4: #{_lambda_.9} parent=0 // pred_region
    _
  $region5: #{_lambda_.9} parent=0 // pred_fallthru
    _
  // Predicated region
  $region6: #{_lambda_.9} parent=0 // pred_check
    _
  $region7: #{_lambda_.9} parent=0 // pred_check_branch
    %16 = sbr.rel (0) target = $region9
  $region8: #{_lambda_.9} parent=0 // pred_region
    _
  $region9: #{_lambda_.9} parent=0 // pred_fallthru
    _
  // Predicated region
  $region10: #{_lambda_.9} parent=0 // pred_check
    _
  $region11: #{_lambda_.9} parent=0 // pred_check_branch
    %18 = sbr.rel (0) target = $region13
  $region12: #{_lambda_.9} parent=0 // pred_region
    _
  $region13: #{_lambda_.9} parent=0 // pred_fallthru
    _
  // Predicated region
  $region14: #{_lambda_.9} parent=0 // pred_check
    _
  $region15: #{_lambda_.9} parent=0 // pred_check_branch
    %20 = sbr.rel (0) target = $region17
  $region16: #{_lambda_.9} parent=0 // pred_region
    _
  $region17: #{_lambda_.9} parent=0 // pred_fallthru
    _
  // Predicated region
  $region18: #{_lambda_.9} parent=0 // pred_check
    _
  $region19: #{_lambda_.9} parent=0 // pred_check_branch
    %22 = sbr.rel (0) target = $region21
  $region20: #{_lambda_.9} parent=0 // pred_region
    _
  $region21: #{_lambda_.9} parent=0 // pred_fallthru
    _
  // Predicated region
  $region22: #{_lambda_.9} parent=0 // pred_check
    _
  $region23: #{_lambda_.9} parent=0 // pred_check_branch
    %24 = sbr.rel (0) target = $region25
  $region24: #{_lambda_.9} parent=0 // pred_region
    _
  $region25: #{_lambda_.9} parent=0 // pred_fallthru
    _
  // Predicated region
  $region26: #{_lambda_.9} parent=0 // pred_check
    _
  $region27: #{_lambda_.9} parent=0 // pred_check_branch
    %26 = sbr.rel (0) target = $region29
  $region28: #{_lambda_.9} parent=0 // pred_region
    _
  $region29: #{_lambda_.9} parent=0 // pred_fallthru
    _
  // Predicated region
  $region30: #{_lambda_.9} parent=0 // pred_check
    _
  $region31: #{_lambda_.9} parent=0 // pred_check_branch
    %28 = sbr.rel (0) target = $region33
  $region32: #{_lambda_.9} parent=0 // pred_region
    _
  $region33: #{_lambda_.9} parent=0 // pred_fallthru
    _
  %v29 = vld [vmem:[%s0] sm:$0x3]
  %v30 = vld [vmem:[%s1] sm:$0x3]
  %v31 = vadd.f32 %v29, %v30
  %v32 = vld [vmem:[%s2] sm:$0x1]
  %v33 = vld [vmem:[%s3] sm:$0x1]
  %vm34 = vcmask 254976
  %v35 = vsel %vm34, %v31, 0.0
  %36 = vadd.xlane.f32.xlu0 %v35
  %v37 = vpop.xlane.xlu0 %36
  %v38 = vrcp.pop 32.0
  %v39 = vmul.f32 32.0, %v38
  %v40 = vsub.f32 1.0, %v39
  %v41 = vmul.f32 %v38, %v40
  %v42 = vadd.f32 %v38, %v41
  %vm43 = vweird.f32 %v38
  %v44 = vsel %vm43, %v38, %v42
  %v45 = vmul.f32 %v37, %v44
  %v46 = vsub.f32 %v31, %v45
  %v47 = vmul.f32 %v46, %v46
  %v48 = vsel %vm34, %v47, 0.0
  %49 = vadd.xlane.f32.xlu0 %v48
  %v50 = vpop.xlane.xlu0 %49
  %v51 = vmul.f32 %v50, %v44
  %v52 = vadd.f32 %v51, 1e-05
  %v53 = vrsqrt.pop %v52
  %v54 = vmul.f32 %v53, %v52
  %v55 = vmul.f32 %v54, %v53
  %v56 = vmul.f32 0.5, %v55
  %v57 = vsub.f32 1.5, %v56
  %v58 = vmul.f32 %v53, %v57
  %vm59 = vweird.f32 %v52
  %vm60 = vweird.f32 %v53
  %vm61 = vmor %vm59, %vm60
  %v62 = vsel %vm61, %v53, %v58
  %v63 = vmul.f32 %v46, %v62
  %v65 = vperm.slane %v32, 0
  %v67 = vmul.f32 %v63, %v65
  %v69 = vperm.slane %v33, 0
  %v71 = vadd.f32 %v67, %v69
  %v72 = vld [vmem:[%s4] sm:$0x1]
  %v73 = vld [vmem:[%s5] sm:$0x1]
  %v74 = vsel %vm34, %v71, 0.0
  %75 = vadd.xlane.f32.xlu0 %v74
  %v76 = vpop.xlane.xlu0 %75
  %v77 = vmul.f32 %v76, %v44
  %v78 = vsub.f32 %v71, %v77
  %v79 = vmul.f32 %v78, %v78
  %v80 = vsel %vm34, %v79, 0.0
  %81 = vadd.xlane.f32.xlu0 %v80
  %v82 = vpop.xlane.xlu0 %81
  %v83 = vmul.f32 %v82, %v44
  %v84 = vadd.f32 %v83, 1e-06
  %v85 = vrsqrt.pop %v84
  %v86 = vmul.f32 %v85, %v84
  %v87 = vmul.f32 %v86, %v85
  %v88 = vmul.f32 0.5, %v87
  %v89 = vsub.f32 1.5, %v88
  %v90 = vmul.f32 %v85, %v89
  %vm91 = vweird.f32 %v84
  %vm92 = vweird.f32 %v85
  %vm93 = vmor %vm91, %vm92
  %v94 = vsel %vm93, %v85, %v90
  %v95 = vmul.f32 %v78, %v94
  %v97 = vperm.slane %v72, 0
  %v99 = vmul.f32 %v95, %v97
  %v101 = vperm.slane %v73, 0
  %v103 = vadd.f32 %v99, %v101
  %v104 = vld [vmem:[%s6] sm:$0xff]
  %v105 = vld [vmem:[%s6 + $0x8] sm:$0xff]
  %v106 = vld [vmem:[%s6 + $0x10] sm:$0xff]
  %v107 = vld [vmem:[%s6 + $0x18] sm:$0xff]
  %v108 = vld [vmem:[%s7] sm:$0x1]
  %v110 = vperm.slane %v108, 0
  %vm112 = vcmask 261120
  %v114 = vsel %vm112, %v103, 0
  %116 = vmatpush.msra.mxu0 0.0
  %117 = vmatpush.msra.mxu0 0.0
  %118 = vmatpush.msra.mxu0 0.0
  %119 = vmatpush.msra.mxu0 0.0
  %120 = vmatpush.msra.mxu0 0.0
  %121 = vmatpush.msra.mxu0 0.0
  %122 = vmatpush.msra.mxu0 0.0
  %123 = vmatpush.msra.mxu0 0.0
  %124 = vmatpush.msra.mxu0 0.0
  %125 = vmatpush.msra.mxu0 0.0
  %126 = vmatpush.msra.mxu0 0.0
  %127 = vmatpush.msra.mxu0 0.0
  %128 = vmatpush.msra.mxu0 %v107
  %129 = vmatpush.msra.mxu0 %v106
  %130 = vmatpush.msra.mxu0 %v105
  %131 = vmatpush.msra.mxu0 %v104
  %132 = vmatmul.f32.gmra.mxu0 %v114
  %v133 = vpop.f32.mrf.mxu0
  %v134 = vadd.f32 %v110, %v133
  %135 = vdwg.mxu0
  %vm136 = vcmask 123904
  %137 = vst.msk [vmem:[%s8] sm:$0x3] %vm136, %v134
  // Predicated region
  $region34: #{_lambda_.9} parent=0 // pred_check
    _
  $region35: #{_lambda_.9} parent=0 // pred_check_branch
    %139 = sbr.rel (0) target = $region37
  $region36: #{_lambda_.9} parent=0 // pred_region
    _
  $region37: #{_lambda_.9} parent=0 // pred_fallthru
    _
  // Predicated region
  $region38: #{_lambda_.9} parent=0 // pred_check
    _
  $region39: #{_lambda_.9} parent=0 // pred_check_branch
    %141 = sbr.rel (0) target = $region41
  $region40: #{_lambda_.9} parent=0 // pred_region
    _
  $region41: #{_lambda_.9} parent=0 // pred_fallthru
    _

// kernel: _lambda_.10
$region0: #{_lambda_.10}
  #allocation0 [shape = 'u32[]', space=smem, size = 0x4, offset = 0x4, fixed_abs, tag = 'smem constant byte address 0x4 - core index']
  #allocation1 [shape = 'u32[72,128]{1,0:T(1,128)}', space=vmem, size = 0x9000, scoped, tag = 'internal scratch']
  %s0 = inlined_call_operand.vmem [shape: f32[2,16], index: 0, kind: input, shape index: {}]
  %s1 = inlined_call_operand.vmem [shape: f32[1,16], index: 1, kind: input, shape index: {}]
  %s2 = inlined_call_operand.vmem [shape: f32[1,16], index: 2, kind: input, shape index: {}]
  %s3 = inlined_call_operand.vmem [shape: f32[16,8], index: 3, kind: input, shape index: {}]
  %s4 = inlined_call_operand.vmem [shape: f32[1,8], index: 4, kind: input, shape index: {}]
  %s5 = inlined_call_operand.vmem [shape: f32[2,8], index: 5, kind: output, shape index: {}]
  %s6 = sld [smem:[#allocation0]]
  $region30: #{_lambda_.10} parent=0
    _
  %s8 = ssub.s32 1, %s6
  %s9 = scalar_select 0, %s8, %s6
  // Predicated region
  $region2: #{_lambda_.10} parent=0 // pred_check
    _
  $region3: #{_lambda_.10} parent=0 // pred_check_branch
    %11 = sbr.rel (0) target = $region5
  $region4: #{_lambda_.10} parent=0 // pred_region
    _
  $region5: #{_lambda_.10} parent=0 // pred_fallthru
    _
  // Predicated region
  $region6: #{_lambda_.10} parent=0 // pred_check
    _
  $region7: #{_lambda_.10} parent=0 // pred_check_branch
    %13 = sbr.rel (0) target = $region9
  $region8: #{_lambda_.10} parent=0 // pred_region
    _
  $region9: #{_lambda_.10} parent=0 // pred_fallthru
    _
  // Predicated region
  $region10: #{_lambda_.10} parent=0 // pred_check
    _
  $region11: #{_lambda_.10} parent=0 // pred_check_branch
    %15 = sbr.rel (0) target = $region13
  $region12: #{_lambda_.10} parent=0 // pred_region
    _
  $region13: #{_lambda_.10} parent=0 // pred_fallthru
    _
  // Predicated region
  $region14: #{_lambda_.10} parent=0 // pred_check
    _
  $region15: #{_lambda_.10} parent=0 // pred_check_branch
    %17 = sbr.rel (0) target = $region17
  $region16: #{_lambda_.10} parent=0 // pred_region
    _
  $region17: #{_lambda_.10} parent=0 // pred_fallthru
    _
  // Predicated region
  $region18: #{_lambda_.10} parent=0 // pred_check
    _
  $region19: #{_lambda_.10} parent=0 // pred_check_branch
    %19 = sbr.rel (0) target = $region21
  $region20: #{_lambda_.10} parent=0 // pred_region
    _
  $region21: #{_lambda_.10} parent=0 // pred_fallthru
    _
  %v20 = vld [vmem:[%s0] sm:$0x3]
  %v21 = vld [vmem:[%s1] sm:$0x1]
  %v22 = vld [vmem:[%s2] sm:$0x1]
  %vm23 = vcmask 123904
  %v24 = vsel %vm23, %v20, 0.0
  %25 = vadd.xlane.f32.xlu0 %v24
  %v26 = vpop.xlane.xlu0 %25
  %v27 = vrcp.pop 16.0
  %v28 = vmul.f32 16.0, %v27
  %v29 = vsub.f32 1.0, %v28
  %v30 = vmul.f32 %v27, %v29
  %v31 = vadd.f32 %v27, %v30
  %vm32 = vweird.f32 %v27
  %v33 = vsel %vm32, %v27, %v31
  %v34 = vmul.f32 %v26, %v33
  %v35 = vsub.f32 %v20, %v34
  %v36 = vmul.f32 %v35, %v35
  %v37 = vsel %vm23, %v36, 0.0
  %38 = vadd.xlane.f32.xlu0 %v37
  %v39 = vpop.xlane.xlu0 %38
  %v40 = vmul.f32 %v39, %v33
  %v41 = vadd.f32 %v40, 1e-06
  %v42 = vrsqrt.pop %v41
  %v43 = vmul.f32 %v42, %v41
  %v44 = vmul.f32 %v43, %v42
  %v45 = vmul.f32 0.5, %v44
  %v46 = vsub.f32 1.5, %v45
  %v47 = vmul.f32 %v42, %v46
  %vm48 = vweird.f32 %v41
  %vm49 = vweird.f32 %v42
  %vm50 = vmor %vm48, %vm49
  %v51 = vsel %vm50, %v42, %v47
  %v52 = vmul.f32 %v35, %v51
  %v54 = vperm.slane %v21, 0
  %v56 = vmul.f32 %v52, %v54
  %v58 = vperm.slane %v22, 0
  %v60 = vadd.f32 %v56, %v58
  %v61 = vld [vmem:[%s3] sm:$0xff]
  %v62 = vld [vmem:[%s3 + $0x8] sm:$0xff]
  %v63 = vld [vmem:[%s4] sm:$0x1]
  %v65 = vperm.slane %v63, 0
  %vm67 = vcmask 130048
  %v69 = vsel %vm67, %v60, 0
  %71 = vmatpush.msra.mxu0 0.0
  %72 = vmatpush.msra.mxu0 0.0
  %73 = vmatpush.msra.mxu0 0.0
  %74 = vmatpush.msra.mxu0 0.0
  %75 = vmatpush.msra.mxu0 0.0
  %76 = vmatpush.msra.mxu0 0.0
  %77 = vmatpush.msra.mxu0 0.0
  %78 = vmatpush.msra.mxu0 0.0
  %79 = vmatpush.msra.mxu0 0.0
  %80 = vmatpush.msra.mxu0 0.0
  %81 = vmatpush.msra.mxu0 0.0
  %82 = vmatpush.msra.mxu0 0.0
  %83 = vmatpush.msra.mxu0 0.0
  %84 = vmatpush.msra.mxu0 0.0
  %85 = vmatpush.msra.mxu0 %v62
  %86 = vmatpush.msra.mxu0 %v61
  %87 = vmatmul.f32.gmra.mxu0 %v69
  %v88 = vpop.f32.mrf.mxu0
  %v89 = vadd.f32 %v65, %v88
  %90 = vdwg.mxu0
  %vm91 = vcmask 58368
  %92 = vst.msk [vmem:[%s5] sm:$0x3] %vm91, %v89
  // Predicated region
  $region22: #{_lambda_.10} parent=0 // pred_check
    _
  $region23: #{_lambda_.10} parent=0 // pred_check_branch
    %94 = sbr.rel (0) target = $region25
  $region24: #{_lambda_.10} parent=0 // pred_region
    _
  $region25: #{_lambda_.10} parent=0 // pred_fallthru
    _
  // Predicated region
  $region26: #{_lambda_.10} parent=0 // pred_check
    _
  $region27: #{_lambda_.10} parent=0 // pred_check_branch
    %96 = sbr.rel (0) target = $region29
  $region28: #{_lambda_.10} parent=0 // pred_region
    _
  $region29: #{_lambda_.10} parent=0 // pred_fallthru
    _

// kernel: _lambda_.7
$region0: #{_lambda_.7}
  #allocation0 [shape = 'u32[]', space=smem, size = 0x4, offset = 0x4, fixed_abs, tag = 'smem constant byte address 0x4 - core index']
  #allocation1 [shape = 'u32[72,128]{1,0:T(1,128)}', space=vmem, size = 0x9000, scoped, tag = 'internal scratch']
  #allocation2 [shape = 'f32[5,128]{1,0:T(8,128)}', space=vmem, size = 0x1000, scoped, tag = 'scratch operand']
  %s0 = inlined_call_operand.vmem [shape: f32[2,5,32], index: 0, kind: input, shape index: {}]
  %s1 = inlined_call_operand.vmem [shape: f32[2,5,32], index: 1, kind: input, shape index: {}]
  %s2 = inlined_call_operand.vmem [shape: f32[1,32], index: 2, kind: input, shape index: {}]
  %s3 = inlined_call_operand.vmem [shape: f32[1,32], index: 3, kind: input, shape index: {}]
  %s4 = inlined_call_operand.vmem [shape: bf16[32,128], index: 4, kind: input, shape index: {}]
  %s5 = inlined_call_operand.vmem [shape: bf16[32,128], index: 5, kind: input, shape index: {}]
  %s6 = inlined_call_operand.vmem [shape: bf16[32,128], index: 6, kind: input, shape index: {}]
  %s7 = inlined_call_operand.vmem [shape: bf16[32,128], index: 7, kind: input, shape index: {}]
  %s8 = inlined_call_operand.vmem [shape: f32[4,128], index: 8, kind: input, shape index: {}]
  %s9 = inlined_call_operand.vmem [shape: f32[1,128], index: 9, kind: input, shape index: {}]
  %s10 = inlined_call_operand.vmem [shape: bf16[128,4], index: 10, kind: input, shape index: {}]
  %s11 = inlined_call_operand.vmem [shape: bf16[128,16], index: 11, kind: input, shape index: {}]
  %s12 = inlined_call_operand.vmem [shape: bf16[128,16], index: 12, kind: input, shape index: {}]
  %s13 = inlined_call_operand.vmem [shape: f32[4,128], index: 13, kind: input, shape index: {}]
  %s14 = inlined_call_operand.vmem [shape: f32[1,128], index: 14, kind: input, shape index: {}]
  %s15 = inlined_call_operand.vmem [shape: f32[40,128], index: 15, kind: input, shape index: {}]
  %s16 = inlined_call_operand.vmem [shape: f32[1,128], index: 16, kind: input, shape index: {}]
  %s17 = inlined_call_operand.vmem [shape: bf16[128,32], index: 17, kind: input, shape index: {}]
  %s18 = inlined_call_operand.vmem [shape: f32[40,5], index: 18, kind: input, shape index: {}]
  %s19 = inlined_call_operand.vmem [shape: f32[40,16], index: 19, kind: input, shape index: {}]
  %s20 = inlined_call_operand.vmem [shape: f32[40,16], index: 20, kind: input, shape index: {}]
  %s21 = inlined_call_operand.vmem [shape: f32[2,5,32], index: 21, kind: output, shape index: {0}]
  %s22 = inlined_call_operand.vmem [shape: f32[2,5,32], index: 22, kind: output, shape index: {1}]
  %23 = xla_tuple %s21, %s22
  %s24 = sld [smem:[#allocation0]]
  $region125: #{_lambda_.7} parent=0
    _
  %s26 = ssub.s32 1, %s24
  %s27 = scalar_select 0, %s26, %s24
  loop: start=0, step=1, limit=4
  $region2: #{_lambda_.7} parent=0 // loop_pre_header
    _
  $region3: #{_lambda_.7} parent=0 // loop_header
    %s29 = sphi 0, %s33
    %p30 = scmp.ge.s32.totalorder %s29, 4
    %s39 = sphi 0, %s41
    %s42 = sphi 0, %s39
    %s43 = sphi 0, %s42
    %s59 = sphi 0, %s43
    %s65 = sphi 0, %s67
    %s68 = sphi 0, %s65
    %s69 = sphi 0, %s68
    %s85 = sphi 0, %s69
    %s89 = sphi 0, %s89
    %s91 = sphi 0, %s89
    %s92 = sphi 0, %s91
    %s106 = sphi 0, %s92
    %s110 = sphi 0, %s110
    %s112 = sphi 0, %s110
    %s113 = sphi 0, %s112
    %s127 = sphi 0, %s113
    %s131 = sphi 0, %s131
    %s133 = sphi 0, %s131
    %s134 = sphi 0, %s133
    %s148 = sphi 0, %s134
    %s152 = sphi 0, %s152
    %s154 = sphi 0, %s152
    %s155 = sphi 0, %s154
    %s169 = sphi 0, %s155
    %s173 = sphi 0, %s173
    %s175 = sphi 0, %s173
    %s176 = sphi 0, %s175
    %s190 = sphi 0, %s176
    %s194 = sphi 0, %s194
    %s196 = sphi 0, %s194
    %s197 = sphi 0, %s196
    %s211 = sphi 0, %s197
    %s215 = sphi 0, %s215
    %s217 = sphi 0, %s215
    %s218 = sphi 0, %s217
    %s232 = sphi 0, %s218
    %s236 = sphi 0, %s236
    %s238 = sphi 0, %s236
    %s239 = sphi 0, %s238
    %s253 = sphi 0, %s239
    %s257 = sphi 0, %s257
    %s259 = sphi 0, %s257
    %s260 = sphi 0, %s259
    %s274 = sphi 0, %s260
    %s278 = sphi 0, %s278
    %s280 = sphi 0, %s278
    %s281 = sphi 0, %s280
    %s295 = sphi 0, %s281
    %s299 = sphi 0, %s299
    %s301 = sphi 0, %s299
    %s302 = sphi 0, %s301
    %s316 = sphi 0, %s302
    %s320 = sphi 0, %s320
    %s322 = sphi 0, %s320
    %s323 = sphi 0, %s322
    %s337 = sphi 0, %s323
    %s341 = sphi 0, %s341
    %s343 = sphi 0, %s341
    %s344 = sphi 0, %s343
    %s358 = sphi 0, %s344
    %s362 = sphi 0, %s362
    %s364 = sphi 0, %s362
    %s365 = sphi 0, %s364
    %s379 = sphi 0, %s365
    %s383 = sphi 0, %s383
    %s385 = sphi 0, %s383
    %s386 = sphi 0, %s385
    %s400 = sphi 0, %s386
    %s404 = sphi 0, %s404
    %s406 = sphi 0, %s404
    %s407 = sphi 0, %s406
    %s421 = sphi 0, %s407
    %s425 = sphi 0, %s425
    %s427 = sphi 0, %s425
    %s428 = sphi 0, %s427
    %s442 = sphi 0, %s428
    %s446 = sphi 0, %s446
    %s448 = sphi 0, %s446
    %s449 = sphi 0, %s448
    %s463 = sphi 0, %s449
    %s467 = sphi 0, %s467
    %s469 = sphi 0, %s467
    %s470 = sphi 0, %s469
    %s484 = sphi 0, %s470
    %s490 = sphi 0, %s492
    %s493 = sphi 0, %s490
    %s494 = sphi 0, %s493
    %s510 = sphi 0, %s494
    %s516 = sphi 0, %s518
    %s519 = sphi 0, %s516
    %s520 = sphi 0, %s519
    %s536 = sphi 0, %s520
  $region4: #{_lambda_.7} parent=0 // loop_header_branch
    %32 = sbr.rel (%p30) target = $region8
  $region5: #{_lambda_.7} parent=0 // loop_body
    %s34 = ssub.s32 %s29, 1
    %s35 = ssub.s32 %s29, 2
    %s36 = sadd.s32 %s29, 1
    %s37 = ssub.s32 %s29, %s36
    %p38 = scmp.eq.s32.totalorder %s37, 0
    %s40 = sadd.s32 %s39, 1
    %s41 = scalar_select %p38, %s39, %s40
    %p44 = pneg %p38
    %p45 = scmp.eq.s32.totalorder %s29, 1
    %p46 = por %p44, %p45
    %p47 = scmp.ne.s32.totalorder %s39, %s42
    %p48 = scmp.eq.s32.totalorder %s29, 0
    %p49 = por %p47, %p48
    %p50 = scmp.ne.s32.totalorder %s39, %s42
    %p51 = scmp.eq.s32.totalorder %s34, 1
    %p52 = por %p50, %p51
    %p53 = scmp.ne.s32.totalorder %s42, %s43
    %p54 = scmp.eq.s32.totalorder %s34, 0
    %p55 = por %p53, %p54
    %p56 = scmp.ne.s32.totalorder %s42, %s43
    %p57 = scmp.eq.s32.totalorder %s35, 1
    %p58 = por %p56, %p57
    %p60 = scmp.ne.s32.totalorder %s43, %s59
    %p61 = scmp.eq.s32.totalorder %s35, 0
    %p62 = por %p60, %p61
    %s63 = ssub.s32 %s29, %s36
    %p64 = scmp.eq.s32.totalorder %s63, 0
    %s66 = sadd.s32 %s65, 1
    %s67 = scalar_select %p64, %s65, %s66
    %p70 = pneg %p64
    %p71 = scmp.eq.s32.totalorder %s29, 1
    %p72 = por %p70, %p71
    %p73 = scmp.ne.s32.totalorder %s65, %s68
    %p74 = scmp.eq.s32.totalorder %s29, 0
    %p75 = por %p73, %p74
    %p76 = scmp.ne.s32.totalorder %s65, %s68
    %p77 = scmp.eq.s32.totalorder %s34, 1
    %p78 = por %p76, %p77
    %p79 = scmp.ne.s32.totalorder %s68, %s69
    %p80 = scmp.eq.s32.totalorder %s34, 0
    %p81 = por %p79, %p80
    %p82 = scmp.ne.s32.totalorder %s68, %s69
    %p83 = scmp.eq.s32.totalorder %s35, 1
    %p84 = por %p82, %p83
    %p86 = scmp.ne.s32.totalorder %s69, %s85
    %p87 = scmp.eq.s32.totalorder %s35, 0
    %p88 = por %p86, %p87
    %s90 = sadd.s32 %s89, 1
    %p93 = scmp.eq.s32.totalorder %s29, 1
    %p94 = scmp.ne.s32.totalorder %s89, %s91
    %p95 = scmp.eq.s32.totalorder %s29, 0
    %p96 = por %p94, %p95
    %p97 = scmp.ne.s32.totalorder %s89, %s91
    %p98 = scmp.eq.s32.totalorder %s34, 1
    %p99 = por %p97, %p98
    %p100 = scmp.ne.s32.totalorder %s91, %s92
    %p101 = scmp.eq.s32.totalorder %s34, 0
    %p102 = por %p100, %p101
    %p103 = scmp.ne.s32.totalorder %s91, %s92
    %p104 = scmp.eq.s32.totalorder %s35, 1
    %p105 = por %p103, %p104
    %p107 = scmp.ne.s32.totalorder %s92, %s106
    %p108 = scmp.eq.s32.totalorder %s35, 0
    %p109 = por %p107, %p108
    %s111 = sadd.s32 %s110, 1
    %p114 = scmp.eq.s32.totalorder %s29, 1
    %p115 = scmp.ne.s32.totalorder %s110, %s112
    %p116 = scmp.eq.s32.totalorder %s29, 0
    %p117 = por %p115, %p116
    %p118 = scmp.ne.s32.totalorder %s110, %s112
    %p119 = scmp.eq.s32.totalorder %s34, 1
    %p120 = por %p118, %p119
    %p121 = scmp.ne.s32.totalorder %s112, %s113
    %p122 = scmp.eq.s32.totalorder %s34, 0
    %p123 = por %p121, %p122
    %p124 = scmp.ne.s32.totalorder %s112, %s113
    %p125 = scmp.eq.s32.totalorder %s35, 1
    %p126 = por %p124, %p125
    %p128 = scmp.ne.s32.totalorder %s113, %s127
    %p129 = scmp.eq.s32.totalorder %s35, 0
    %p130 = por %p128, %p129
    %s132 = sadd.s32 %s131, 1
    %p135 = scmp.eq.s32.totalorder %s29, 1
    %p136 = scmp.ne.s32.totalorder %s131, %s133
    %p137 = scmp.eq.s32.totalorder %s29, 0
    %p138 = por %p136, %p137
    %p139 = scmp.ne.s32.totalorder %s131, %s133
    %p140 = scmp.eq.s32.totalorder %s34, 1
    %p141 = por %p139, %p140
    %p142 = scmp.ne.s32.totalorder %s133, %s134
    %p143 = scmp.eq.s32.totalorder %s34, 0
    %p144 = por %p142, %p143
    %p145 = scmp.ne.s32.totalorder %s133, %s134
    %p146 = scmp.eq.s32.totalorder %s35, 1
    %p147 = por %p145, %p146
    %p149 = scmp.ne.s32.totalorder %s134, %s148
    %p150 = scmp.eq.s32.totalorder %s35, 0
    %p151 = por %p149, %p150
    %s153 = sadd.s32 %s152, 1
    %p156 = scmp.eq.s32.totalorder %s29, 1
    %p157 = scmp.ne.s32.totalorder %s152, %s154
    %p158 = scmp.eq.s32.totalorder %s29, 0
    %p159 = por %p157, %p158
    %p160 = scmp.ne.s32.totalorder %s152, %s154
    %p161 = scmp.eq.s32.totalorder %s34, 1
    %p162 = por %p160, %p161
    %p163 = scmp.ne.s32.totalorder %s154, %s155
    %p164 = scmp.eq.s32.totalorder %s34, 0
    %p165 = por %p163, %p164
    %p166 = scmp.ne.s32.totalorder %s154, %s155
    %p167 = scmp.eq.s32.totalorder %s35, 1
    %p168 = por %p166, %p167
    %p170 = scmp.ne.s32.totalorder %s155, %s169
    %p171 = scmp.eq.s32.totalorder %s35, 0
    %p172 = por %p170, %p171
    %s174 = sadd.s32 %s173, 1
    %p177 = scmp.eq.s32.totalorder %s29, 1
    %p178 = scmp.ne.s32.totalorder %s173, %s175
    %p179 = scmp.eq.s32.totalorder %s29, 0
    %p180 = por %p178, %p179
    %p181 = scmp.ne.s32.totalorder %s173, %s175
    %p182 = scmp.eq.s32.totalorder %s34, 1
    %p183 = por %p181, %p182
    %p184 = scmp.ne.s32.totalorder %s175, %s176
    %p185 = scmp.eq.s32.totalorder %s34, 0
    %p186 = por %p184, %p185
    %p187 = scmp.ne.s32.totalorder %s175, %s176
    %p188 = scmp.eq.s32.totalorder %s35, 1
    %p189 = por %p187, %p188
    %p191 = scmp.ne.s32.totalorder %s176, %s190
    %p192 = scmp.eq.s32.totalorder %s35, 0
    %p193 = por %p191, %p192
    %s195 = sadd.s32 %s194, 1
    %p198 = scmp.eq.s32.totalorder %s29, 1
    %p199 = scmp.ne.s32.totalorder %s194, %s196
    %p200 = scmp.eq.s32.totalorder %s29, 0
    %p201 = por %p199, %p200
    %p202 = scmp.ne.s32.totalorder %s194, %s196
    %p203 = scmp.eq.s32.totalorder %s34, 1
    %p204 = por %p202, %p203
    %p205 = scmp.ne.s32.totalorder %s196, %s197
    %p206 = scmp.eq.s32.totalorder %s34, 0
    %p207 = por %p205, %p206
    %p208 = scmp.ne.s32.totalorder %s196, %s197
    %p209 = scmp.eq.s32.totalorder %s35, 1
    %p210 = por %p208, %p209
    %p212 = scmp.ne.s32.totalorder %s197, %s211
    %p213 = scmp.eq.s32.totalorder %s35, 0
    %p214 = por %p212, %p213
    %s216 = sadd.s32 %s215, 1
    %p219 = scmp.eq.s32.totalorder %s29, 1
    %p220 = scmp.ne.s32.totalorder %s215, %s217
    %p221 = scmp.eq.s32.totalorder %s29, 0
    %p222 = por %p220, %p221
    %p223 = scmp.ne.s32.totalorder %s215, %s217
    %p224 = scmp.eq.s32.totalorder %s34, 1
    %p225 = por %p223, %p224
    %p226 = scmp.ne.s32.totalorder %s217, %s218
    %p227 = scmp.eq.s32.totalorder %s34, 0
    %p228 = por %p226, %p227
    %p229 = scmp.ne.s32.totalorder %s217, %s218
    %p230 = scmp.eq.s32.totalorder %s35, 1
    %p231 = por %p229, %p230
    %p233 = scmp.ne.s32.totalorder %s218, %s232
    %p234 = scmp.eq.s32.totalorder %s35, 0
    %p235 = por %p233, %p234
    %s237 = sadd.s32 %s236, 1
    %p240 = scmp.eq.s32.totalorder %s29, 1
    %p241 = scmp.ne.s32.totalorder %s236, %s238
    %p242 = scmp.eq.s32.totalorder %s29, 0
    %p243 = por %p241, %p242
    %p244 = scmp.ne.s32.totalorder %s236, %s238
    %p245 = scmp.eq.s32.totalorder %s34, 1
    %p246 = por %p244, %p245
    %p247 = scmp.ne.s32.totalorder %s238, %s239
    %p248 = scmp.eq.s32.totalorder %s34, 0
    %p249 = por %p247, %p248
    %p250 = scmp.ne.s32.totalorder %s238, %s239
    %p251 = scmp.eq.s32.totalorder %s35, 1
    %p252 = por %p250, %p251
    %p254 = scmp.ne.s32.totalorder %s239, %s253
    %p255 = scmp.eq.s32.totalorder %s35, 0
    %p256 = por %p254, %p255
    %s258 = sadd.s32 %s257, 1
    %p261 = scmp.eq.s32.totalorder %s29, 1
    %p262 = scmp.ne.s32.totalorder %s257, %s259
    %p263 = scmp.eq.s32.totalorder %s29, 0
    %p264 = por %p262, %p263
    %p265 = scmp.ne.s32.totalorder %s257, %s259
    %p266 = scmp.eq.s32.totalorder %s34, 1
    %p267 = por %p265, %p266
    %p268 = scmp.ne.s32.totalorder %s259, %s260
    %p269 = scmp.eq.s32.totalorder %s34, 0
    %p270 = por %p268, %p269
    %p271 = scmp.ne.s32.totalorder %s259, %s260
    %p272 = scmp.eq.s32.totalorder %s35, 1
    %p273 = por %p271, %p272
    %p275 = scmp.ne.s32.totalorder %s260, %s274
    %p276 = scmp.eq.s32.totalorder %s35, 0
    %p277 = por %p275, %p276
    %s279 = sadd.s32 %s278, 1
    %p282 = scmp.eq.s32.totalorder %s29, 1
    %p283 = scmp.ne.s32.totalorder %s278, %s280
    %p284 = scmp.eq.s32.totalorder %s29, 0
    %p285 = por %p283, %p284
    %p286 = scmp.ne.s32.totalorder %s278, %s280
    %p287 = scmp.eq.s32.totalorder %s34, 1
    %p288 = por %p286, %p287
    %p289 = scmp.ne.s32.totalorder %s280, %s281
    %p290 = scmp.eq.s32.totalorder %s34, 0
    %p291 = por %p289, %p290
    %p292 = scmp.ne.s32.totalorder %s280, %s281
    %p293 = scmp.eq.s32.totalorder %s35, 1
    %p294 = por %p292, %p293
    %p296 = scmp.ne.s32.totalorder %s281, %s295
    %p297 = scmp.eq.s32.totalorder %s35, 0
    %p298 = por %p296, %p297
    %s300 = sadd.s32 %s299, 1
    %p303 = scmp.eq.s32.totalorder %s29, 1
    %p304 = scmp.ne.s32.totalorder %s299, %s301
    %p305 = scmp.eq.s32.totalorder %s29, 0
    %p306 = por %p304, %p305
    %p307 = scmp.ne.s32.totalorder %s299, %s301
    %p308 = scmp.eq.s32.totalorder %s34, 1
    %p309 = por %p307, %p308
    %p310 = scmp.ne.s32.totalorder %s301, %s302
    %p311 = scmp.eq.s32.totalorder %s34, 0
    %p312 = por %p310, %p311
    %p313 = scmp.ne.s32.totalorder %s301, %s302
    %p314 = scmp.eq.s32.totalorder %s35, 1
    %p315 = por %p313, %p314
    %p317 = scmp.ne.s32.totalorder %s302, %s316
    %p318 = scmp.eq.s32.totalorder %s35, 0
    %p319 = por %p317, %p318
    %s321 = sadd.s32 %s320, 1
    %p324 = scmp.eq.s32.totalorder %s29, 1
    %p325 = scmp.ne.s32.totalorder %s320, %s322
    %p326 = scmp.eq.s32.totalorder %s29, 0
    %p327 = por %p325, %p326
    %p328 = scmp.ne.s32.totalorder %s320, %s322
    %p329 = scmp.eq.s32.totalorder %s34, 1
    %p330 = por %p328, %p329
    %p331 = scmp.ne.s32.totalorder %s322, %s323
    %p332 = scmp.eq.s32.totalorder %s34, 0
    %p333 = por %p331, %p332
    %p334 = scmp.ne.s32.totalorder %s322, %s323
    %p335 = scmp.eq.s32.totalorder %s35, 1
    %p336 = por %p334, %p335
    %p338 = scmp.ne.s32.totalorder %s323, %s337
    %p339 = scmp.eq.s32.totalorder %s35, 0
    %p340 = por %p338, %p339
    %s342 = sadd.s32 %s341, 1
    %p345 = scmp.eq.s32.totalorder %s29, 1
    %p346 = scmp.ne.s32.totalorder %s341, %s343
    %p347 = scmp.eq.s32.totalorder %s29, 0
    %p348 = por %p346, %p347
    %p349 = scmp.ne.s32.totalorder %s341, %s343
    %p350 = scmp.eq.s32.totalorder %s34, 1
    %p351 = por %p349, %p350
    %p352 = scmp.ne.s32.totalorder %s343, %s344
    %p353 = scmp.eq.s32.totalorder %s34, 0
    %p354 = por %p352, %p353
    %p355 = scmp.ne.s32.totalorder %s343, %s344
    %p356 = scmp.eq.s32.totalorder %s35, 1
    %p357 = por %p355, %p356
    %p359 = scmp.ne.s32.totalorder %s344, %s358
    %p360 = scmp.eq.s32.totalorder %s35, 0
    %p361 = por %p359, %p360
    %s363 = sadd.s32 %s362, 1
    %p366 = scmp.eq.s32.totalorder %s29, 1
    %p367 = scmp.ne.s32.totalorder %s362, %s364
    %p368 = scmp.eq.s32.totalorder %s29, 0
    %p369 = por %p367, %p368
    %p370 = scmp.ne.s32.totalorder %s362, %s364
    %p371 = scmp.eq.s32.totalorder %s34, 1
    %p372 = por %p370, %p371
    %p373 = scmp.ne.s32.totalorder %s364, %s365
    %p374 = scmp.eq.s32.totalorder %s34, 0
    %p375 = por %p373, %p374
    %p376 = scmp.ne.s32.totalorder %s364, %s365
    %p377 = scmp.eq.s32.totalorder %s35, 1
    %p378 = por %p376, %p377
    %p380 = scmp.ne.s32.totalorder %s365, %s379
    %p381 = scmp.eq.s32.totalorder %s35, 0
    %p382 = por %p380, %p381
    %s384 = sadd.s32 %s383, 1
    %p387 = scmp.eq.s32.totalorder %s29, 1
    %p388 = scmp.ne.s32.totalorder %s383, %s385
    %p389 = scmp.eq.s32.totalorder %s29, 0
    %p390 = por %p388, %p389
    %p391 = scmp.ne.s32.totalorder %s383, %s385
    %p392 = scmp.eq.s32.totalorder %s34, 1
    %p393 = por %p391, %p392
    %p394 = scmp.ne.s32.totalorder %s385, %s386
    %p395 = scmp.eq.s32.totalorder %s34, 0
    %p396 = por %p394, %p395
    %p397 = scmp.ne.s32.totalorder %s385, %s386
    %p398 = scmp.eq.s32.totalorder %s35, 1
    %p399 = por %p397, %p398
    %p401 = scmp.ne.s32.totalorder %s386, %s400
    %p402 = scmp.eq.s32.totalorder %s35, 0
    %p403 = por %p401, %p402
    %s405 = sadd.s32 %s404, 1
    %p408 = scmp.eq.s32.totalorder %s29, 1
    %p409 = scmp.ne.s32.totalorder %s404, %s406
    %p410 = scmp.eq.s32.totalorder %s29, 0
    %p411 = por %p409, %p410
    %p412 = scmp.ne.s32.totalorder %s404, %s406
    %p413 = scmp.eq.s32.totalorder %s34, 1
    %p414 = por %p412, %p413
    %p415 = scmp.ne.s32.totalorder %s406, %s407
    %p416 = scmp.eq.s32.totalorder %s34, 0
    %p417 = por %p415, %p416
    %p418 = scmp.ne.s32.totalorder %s406, %s407
    %p419 = scmp.eq.s32.totalorder %s35, 1
    %p420 = por %p418, %p419
    %p422 = scmp.ne.s32.totalorder %s407, %s421
    %p423 = scmp.eq.s32.totalorder %s35, 0
    %p424 = por %p422, %p423
    %s426 = sadd.s32 %s425, 1
    %p429 = scmp.eq.s32.totalorder %s29, 1
    %p430 = scmp.ne.s32.totalorder %s425, %s427
    %p431 = scmp.eq.s32.totalorder %s29, 0
    %p432 = por %p430, %p431
    %p433 = scmp.ne.s32.totalorder %s425, %s427
    %p434 = scmp.eq.s32.totalorder %s34, 1
    %p435 = por %p433, %p434
    %p436 = scmp.ne.s32.totalorder %s427, %s428
    %p437 = scmp.eq.s32.totalorder %s34, 0
    %p438 = por %p436, %p437
    %p439 = scmp.ne.s32.totalorder %s427, %s428
    %p440 = scmp.eq.s32.totalorder %s35, 1
    %p441 = por %p439, %p440
    %p443 = scmp.ne.s32.totalorder %s428, %s442
    %p444 = scmp.eq.s32.totalorder %s35, 0
    %p445 = por %p443, %p444
    %s447 = sadd.s32 %s446, 1
    %p450 = scmp.eq.s32.totalorder %s29, 1
    %p451 = scmp.ne.s32.totalorder %s446, %s448
    %p452 = scmp.eq.s32.totalorder %s29, 0
    %p453 = por %p451, %p452
    %p454 = scmp.ne.s32.totalorder %s446, %s448
    %p455 = scmp.eq.s32.totalorder %s34, 1
    %p456 = por %p454, %p455
    %p457 = scmp.ne.s32.totalorder %s448, %s449
    %p458 = scmp.eq.s32.totalorder %s34, 0
    %p459 = por %p457, %p458
    %p460 = scmp.ne.s32.totalorder %s448, %s449
    %p461 = scmp.eq.s32.totalorder %s35, 1
    %p462 = por %p460, %p461
    %p464 = scmp.ne.s32.totalorder %s449, %s463
    %p465 = scmp.eq.s32.totalorder %s35, 0
    %p466 = por %p464, %p465
    %s468 = sadd.s32 %s467, 1
    %p471 = scmp.eq.s32.totalorder %s29, 1
    %p472 = scmp.ne.s32.totalorder %s467, %s469
    %p473 = scmp.eq.s32.totalorder %s29, 0
    %p474 = por %p472, %p473
    %p475 = scmp.ne.s32.totalorder %s467, %s469
    %p476 = scmp.eq.s32.totalorder %s34, 1
    %p477 = por %p475, %p476
    %p478 = scmp.ne.s32.totalorder %s469, %s470
    %p479 = scmp.eq.s32.totalorder %s34, 0
    %p480 = por %p478, %p479
    %p481 = scmp.ne.s32.totalorder %s469, %s470
    %p482 = scmp.eq.s32.totalorder %s35, 1
    %p483 = por %p481, %p482
    %p485 = scmp.ne.s32.totalorder %s470, %s484
    %p486 = scmp.eq.s32.totalorder %s35, 0
    %p487 = por %p485, %p486
    %s488 = ssub.s32 %s29, %s36
    %p489 = scmp.eq.s32.totalorder %s488, 0
    %s491 = sadd.s32 %s490, 1
    %s492 = scalar_select %p489, %s490, %s491
    %p495 = pneg %p489
    %p496 = scmp.eq.s32.totalorder %s29, 1
    %p497 = por %p495, %p496
    %p498 = scmp.ne.s32.totalorder %s490, %s493
    %p499 = scmp.eq.s32.totalorder %s29, 0
    %p500 = por %p498, %p499
    %p501 = scmp.ne.s32.totalorder %s490, %s493
    %p502 = scmp.eq.s32.totalorder %s34, 1
    %p503 = por %p501, %p502
    %p504 = scmp.ne.s32.totalorder %s493, %s494
    %p505 = scmp.eq.s32.totalorder %s34, 0
    %p506 = por %p504, %p505
    %p507 = scmp.ne.s32.totalorder %s493, %s494
    %p508 = scmp.eq.s32.totalorder %s35, 1
    %p509 = por %p507, %p508
    %p511 = scmp.ne.s32.totalorder %s494, %s510
    %p512 = scmp.eq.s32.totalorder %s35, 0
    %p513 = por %p511, %p512
    %s514 = ssub.s32 %s29, %s36
    %p515 = scmp.eq.s32.totalorder %s514, 0
    %s517 = sadd.s32 %s516, 1
    %s518 = scalar_select %p515, %s516, %s517
    %p521 = pneg %p515
    %p522 = scmp.eq.s32.totalorder %s29, 1
    %p523 = por %p521, %p522
    %p524 = scmp.ne.s32.totalorder %s516, %s519
    %p525 = scmp.eq.s32.totalorder %s29, 0
    %p526 = por %p524, %p525
    %p527 = scmp.ne.s32.totalorder %s516, %s519
    %p528 = scmp.eq.s32.totalorder %s34, 1
    %p529 = por %p527, %p528
    %p530 = scmp.ne.s32.totalorder %s519, %s520
    %p531 = scmp.eq.s32.totalorder %s34, 0
    %p532 = por %p530, %p531
    %p533 = scmp.ne.s32.totalorder %s519, %s520
    %p534 = scmp.eq.s32.totalorder %s35, 1
    %p535 = por %p533, %p534
    %p537 = scmp.ne.s32.totalorder %s520, %s536
    %p538 = scmp.eq.s32.totalorder %s35, 0
    %p539 = por %p537, %p538
    %p540 = scmp.le.s32.totalorder 1, %s29
    %p541 = scmp.lt.s32.totalorder %s29, 3
    %p542 = pnand %p540, %p541
    %p543 = pneg %p542
    // Predicated region
    $region9: #{_lambda_.7} parent=5 // pred_check
      _
    $region10: #{_lambda_.7} parent=5 // pred_check_branch
      %545 = sbr.rel (%p542) target = $region12
    $region11: #{_lambda_.7} parent=5 // pred_region
      %s546 = ssub.s32 %s29, 1
      // Predicated region
      $region13: #{_lambda_.7} parent=11 // pred_check
        %p547 = pneg %p102
      $region14: #{_lambda_.7} parent=11 // pred_check_branch
        %549 = sbr.rel (%p547) target = $region16
      $region15: #{_lambda_.7} parent=11 // pred_region
        _
      $region16: #{_lambda_.7} parent=11 // pred_fallthru
        _
      // Predicated region
      $region17: #{_lambda_.7} parent=11 // pred_check
        %p550 = pneg %p123
      $region18: #{_lambda_.7} parent=11 // pred_check_branch
        %552 = sbr.rel (%p550) target = $region20
      $region19: #{_lambda_.7} parent=11 // pred_region
        _
      $region20: #{_lambda_.7} parent=11 // pred_fallthru
        _
      // Predicated region
      $region21: #{_lambda_.7} parent=11 // pred_check
        %p553 = pneg %p144
      $region22: #{_lambda_.7} parent=11 // pred_check_branch
        %555 = sbr.rel (%p553) target = $region24
      $region23: #{_lambda_.7} parent=11 // pred_region
        _
      $region24: #{_lambda_.7} parent=11 // pred_fallthru
        _
      // Predicated region
      $region25: #{_lambda_.7} parent=11 // pred_check
        %p556 = pneg %p165
      $region26: #{_lambda_.7} parent=11 // pred_check_branch
        %558 = sbr.rel (%p556) target = $region28
      $region27: #{_lambda_.7} parent=11 // pred_region
        _
      $region28: #{_lambda_.7} parent=11 // pred_fallthru
        _
      // Predicated region
      $region29: #{_lambda_.7} parent=11 // pred_check
        %p559 = pneg %p186
      $region30: #{_lambda_.7} parent=11 // pred_check_branch
        %561 = sbr.rel (%p559) target = $region32
      $region31: #{_lambda_.7} parent=11 // pred_region
        _
      $region32: #{_lambda_.7} parent=11 // pred_fallthru
        _
      // Predicated region
      $region33: #{_lambda_.7} parent=11 // pred_check
        %p562 = pneg %p207
      $region34: #{_lambda_.7} parent=11 // pred_check_branch
        %564 = sbr.rel (%p562) target = $region36
      $region35: #{_lambda_.7} parent=11 // pred_region
        _
      $region36: #{_lambda_.7} parent=11 // pred_fallthru
        _
      // Predicated region
      $region37: #{_lambda_.7} parent=11 // pred_check
        %p565 = pneg %p228
      $region38: #{_lambda_.7} parent=11 // pred_check_branch
        %567 = sbr.rel (%p565) target = $region40
      $region39: #{_lambda_.7} parent=11 // pred_region
        _
      $region40: #{_lambda_.7} parent=11 // pred_fallthru
        _
      // Predicated region
      $region41: #{_lambda_.7} parent=11 // pred_check
        %p568 = pneg %p249
      $region42: #{_lambda_.7} parent=11 // pred_check_branch
        %570 = sbr.rel (%p568) target = $region44
      $region43: #{_lambda_.7} parent=11 // pred_region
        _
      $region44: #{_lambda_.7} parent=11 // pred_fallthru
        _
      // Predicated region
      $region45: #{_lambda_.7} parent=11 // pred_check
        %p571 = pneg %p270
      $region46: #{_lambda_.7} parent=11 // pred_check_branch
        %573 = sbr.rel (%p571) target = $region48
      $region47: #{_lambda_.7} parent=11 // pred_region
        _
      $region48: #{_lambda_.7} parent=11 // pred_fallthru
        _
      // Predicated region
      $region49: #{_lambda_.7} parent=11 // pred_check
        %p574 = pneg %p291
      $region50: #{_lambda_.7} parent=11 // pred_check_branch
        %576 = sbr.rel (%p574) target = $region52
      $region51: #{_lambda_.7} parent=11 // pred_region
        _
      $region52: #{_lambda_.7} parent=11 // pred_fallthru
        _
      // Predicated region
      $region53: #{_lambda_.7} parent=11 // pred_check
        %p577 = pneg %p312
      $region54: #{_lambda_.7} parent=11 // pred_check_branch
        %579 = sbr.rel (%p577) target = $region56
      $region55: #{_lambda_.7} parent=11 // pred_region
        _
      $region56: #{_lambda_.7} parent=11 // pred_fallthru
        _
      // Predicated region
      $region57: #{_lambda_.7} parent=11 // pred_check
        %p580 = pneg %p333
      $region58: #{_lambda_.7} parent=11 // pred_check_branch
        %582 = sbr.rel (%p580) target = $region60
      $region59: #{_lambda_.7} parent=11 // pred_region
        _
      $region60: #{_lambda_.7} parent=11 // pred_fallthru
        _
      // Predicated region
      $region61: #{_lambda_.7} parent=11 // pred_check
        %p583 = pneg %p354
      $region62: #{_lambda_.7} parent=11 // pred_check_branch
        %585 = sbr.rel (%p583) target = $region64
      $region63: #{_lambda_.7} parent=11 // pred_region
        _
      $region64: #{_lambda_.7} parent=11 // pred_fallthru
        _
      // Predicated region
      $region65: #{_lambda_.7} parent=11 // pred_check
        %p586 = pneg %p375
      $region66: #{_lambda_.7} parent=11 // pred_check_branch
        %588 = sbr.rel (%p586) target = $region68
      $region67: #{_lambda_.7} parent=11 // pred_region
        _
      $region68: #{_lambda_.7} parent=11 // pred_fallthru
        _
      // Predicated region
      $region69: #{_lambda_.7} parent=11 // pred_check
        %p589 = pneg %p396
      $region70: #{_lambda_.7} parent=11 // pred_check_branch
        %591 = sbr.rel (%p589) target = $region72
      $region71: #{_lambda_.7} parent=11 // pred_region
        _
      $region72: #{_lambda_.7} parent=11 // pred_fallthru
        _
      // Predicated region
      $region73: #{_lambda_.7} parent=11 // pred_check
        %p592 = pneg %p417
      $region74: #{_lambda_.7} parent=11 // pred_check_branch
        %594 = sbr.rel (%p592) target = $region76
      $region75: #{_lambda_.7} parent=11 // pred_region
        _
      $region76: #{_lambda_.7} parent=11 // pred_fallthru
        _
      // Predicated region
      $region77: #{_lambda_.7} parent=11 // pred_check
        %p595 = pneg %p438
      $region78: #{_lambda_.7} parent=11 // pred_check_branch
        %597 = sbr.rel (%p595) target = $region80
      $region79: #{_lambda_.7} parent=11 // pred_region
        _
      $region80: #{_lambda_.7} parent=11 // pred_fallthru
        _
      // Predicated region
      $region81: #{_lambda_.7} parent=11 // pred_check
        %p598 = pneg %p459
      $region82: #{_lambda_.7} parent=11 // pred_check_branch
        %600 = sbr.rel (%p598) target = $region84
      $region83: #{_lambda_.7} parent=11 // pred_region
        _
      $region84: #{_lambda_.7} parent=11 // pred_fallthru
        _
      // Predicated region
      $region85: #{_lambda_.7} parent=11 // pred_check
        %p601 = pneg %p480
      $region86: #{_lambda_.7} parent=11 // pred_check_branch
        %603 = sbr.rel (%p601) target = $region88
      $region87: #{_lambda_.7} parent=11 // pred_region
        _
      $region88: #{_lambda_.7} parent=11 // pred_fallthru
        _
    $region12: #{_lambda_.7} parent=5 // pred_fallthru
      _
    %p604 = scmp.lt.s32.totalorder %s29, 2
    // Predicated region
    $region89: #{_lambda_.7} parent=5 // pred_check
      %p605 = pneg %p604
    $region90: #{_lambda_.7} parent=5 // pred_check_branch
      %607 = sbr.rel (%p605) target = $region92
    $region91: #{_lambda_.7} parent=5 // pred_region
      // Predicated region
      $region93: #{_lambda_.7} parent=91 // pred_check
        %p608 = pneg %p49
      $region94: #{_lambda_.7} parent=91 // pred_check_branch
        %610 = sbr.rel (%p608) target = $region96
      $region95: #{_lambda_.7} parent=91 // pred_region
        %p611 = scmp.lt.s32.totalorder %s29, 1
        %s612 = scalar_select %p611, %s29, 1
        %s613 = smul.addr %s612, 8
        %s614 = scalar_lea.vmem %s0, %s613
      $region96: #{_lambda_.7} parent=91 // pred_fallthru
        _
      // Predicated region
      $region97: #{_lambda_.7} parent=91 // pred_check
        %p615 = pneg %p75
      $region98: #{_lambda_.7} parent=91 // pred_check_branch
        %617 = sbr.rel (%p615) target = $region100
      $region99: #{_lambda_.7} parent=91 // pred_region
        %p618 = scmp.lt.s32.totalorder %s29, 1
        %s619 = scalar_select %p618, %s29, 1
        %s620 = smul.addr %s619, 8
        %s621 = scalar_lea.vmem %s1, %s620
      $region100: #{_lambda_.7} parent=91 // pred_fallthru
        _
    $region92: #{_lambda_.7} parent=5 // pred_fallthru
      _
    %p622 = scmp.le.s32.totalorder 1, %s29
    %p623 = scmp.lt.s32.totalorder %s29, 3
    %p624 = pnand %p622, %p623
    %p625 = pneg %p624
    // Predicated region
    $region101: #{_lambda_.7} parent=5 // pred_check
      _
    $region102: #{_lambda_.7} parent=5 // pred_check_branch
      %627 = sbr.rel (%p624) target = $region104
    $region103: #{_lambda_.7} parent=5 // pred_region
      %s628 = ssub.s32 %s29, 1
      %p629 = scmp.lt.s32.totalorder %s34, 1
      %s630 = scalar_select %p629, %s34, 1
      %s631 = smul.addr %s630, 8
      %s632 = scalar_lea.vmem %s0, %s631
      %p633 = pneg %p55
      %p634 = pneg %p52
      %p635 = scmp.lt.s32.totalorder %s34, 1
      %s636 = scalar_select %p635, %s34, 1
      %s637 = smul.addr %s636, 8
      %s638 = scalar_lea.vmem %s1, %s637
      %p639 = pneg %p81
      %p640 = pneg %p78
      %p641 = pneg %p102
      %p642 = pneg %p99
      %p643 = pneg %p123
      %p644 = pneg %p120
      %p645 = pneg %p144
      %p646 = pneg %p141
      %p647 = pneg %p165
      %p648 = pneg %p162
      %p649 = pneg %p186
      %p650 = pneg %p183
      %p651 = pneg %p207
      %p652 = pneg %p204
      %p653 = pneg %p228
      %p654 = pneg %p225
      %p655 = pneg %p249
      %p656 = pneg %p246
      %p657 = pneg %p270
      %p658 = pneg %p267
      %p659 = pneg %p291
      %p660 = pneg %p288
      %p661 = pneg %p312
      %p662 = pneg %p309
      %p663 = pneg %p333
      %p664 = pneg %p330
      %p665 = pneg %p354
      %p666 = pneg %p351
      %p667 = pneg %p375
      %p668 = pneg %p372
      %p669 = pneg %p396
      %p670 = pneg %p393
      %p671 = pneg %p417
      %p672 = pneg %p414
      %p673 = pneg %p438
      %p674 = pneg %p435
      %p675 = pneg %p459
      %p676 = pneg %p456
      %p677 = pneg %p480
      %p678 = pneg %p477
      %p679 = pneg %p506
      %p680 = pneg %p503
      %p681 = scmp.lt.s32.totalorder %s34, 1
      %s682 = scalar_select %p681, %s34, 1
      %s683 = smul.addr %s682, 8
      %s684 = scalar_lea.vmem %s21, %s683
      %p685 = pneg %p532
      %p686 = pneg %p529
      %p687 = scmp.lt.s32.totalorder %s34, 1
      %s688 = scalar_select %p687, %s34, 1
      %s689 = smul.addr %s688, 8
      %s690 = scalar_lea.vmem %s22, %s689
      %p691 = scmp.lt.s32.totalorder %s34, 1
      %s692 = scalar_select %p691, %s34, 1
      %s693 = smul.addr %s692, 8
      %s694 = scalar_lea.vmem %s0, %s693
      %p695 = scmp.lt.s32.totalorder %s34, 1
      %s696 = scalar_select %p695, %s34, 1
      %s697 = smul.addr %s696, 8
      %s698 = scalar_lea.vmem %s1, %s697
      %p699 = scmp.lt.s32.totalorder %s34, 1
      %s700 = scalar_select %p699, %s34, 1
      %s701 = smul.addr %s700, 8
      %s702 = scalar_lea.vmem %s21, %s701
      %p703 = scmp.lt.s32.totalorder %s34, 1
      %s704 = scalar_select %p703, %s34, 1
      %s705 = smul.addr %s704, 8
      %s706 = scalar_lea.vmem %s22, %s705
      %v708 = vld [vmem:[%s694] sm:$0x1f]
      %v709 = vld [vmem:[%s698] sm:$0x1f]
      %v710 = vadd.f32 %v708, %v709
      %v711 = vld [vmem:[%s2] sm:$0x1]
      %v712 = vld [vmem:[%s3] sm:$0x1]
      %vm713 = vcmask 258048
      %v714 = vsel %vm713, %v710, 0.0
      %715 = vadd.xlane.f32.xlu0 %v714
      %v716 = vpop.xlane.xlu0 %715
      %v717 = vrcp.pop 32.0
      %v718 = vmul.f32 32.0, %v717
      %v719 = vsub.f32 1.0, %v718
      %v720 = vmul.f32 %v717, %v719
      %v721 = vadd.f32 %v717, %v720
      %vm722 = vweird.f32 %v717
      %v723 = vsel %vm722, %v717, %v721
      %v724 = vmul.f32 %v716, %v723
      %v725 = vsub.f32 %v710, %v724
      %v726 = vmul.f32 %v725, %v725
      %v727 = vsel %vm713, %v726, 0.0
      %728 = vadd.xlane.f32.xlu0 %v727
      %v729 = vpop.xlane.xlu0 %728
      %v730 = vmul.f32 %v729, %v723
      %v731 = vadd.f32 %v730, 1e-05
      %v732 = vrsqrt.pop %v731
      %v733 = vmul.f32 %v732, %v731
      %v734 = vmul.f32 %v733, %v732
      %v735 = vmul.f32 0.5, %v734
      %v736 = vsub.f32 1.5, %v735
      %v737 = vmul.f32 %v732, %v736
      %vm738 = vweird.f32 %v731
      %vm739 = vweird.f32 %v732
      %vm740 = vmor %vm738, %vm739
      %v741 = vsel %vm740, %v732, %v737
      %v742 = vmul.f32 %v725, %v741
      %v744 = vperm.slane %v711, 0
      %v746 = vmul.f32 %v742, %v744
      %v748 = vperm.slane %v712, 0
      %v750 = vadd.f32 %v746, %v748
      %v751 = vlaneseq
      %v752 = vshrl.u32 %v751, 7
      %v753 = vlaneseq
      %v754 = vand.u32 %v753, 127
      %v755 = vadd.s32 %v752, %v754
      %vm756 = vcmp.eq.s32.totalorder %v755, 4
      %v757 = vsel %vm756, 1, 0
      %v758 = vcvt.s32.f32 %v757
      %vm759 = vcmask 39936
      %v761 = vsel %vm759, %v758, 0
      %vm763 = vcmask 1044480
      %v765 = vsel %vm763, %v750, 0
      %767 = vmatpush.msra.mxu0 0.0
      %768 = vmatpush.msra.mxu0 0.0
      %769 = vmatpush.msra.mxu0 0.0
      %770 = vmatpush.msra.mxu0 0.0
      %771 = vmatpush.msra.mxu0 0.0
      %772 = vmatpush.msra.mxu0 0.0
      %773 = vmatpush.msra.mxu0 0.0
      %774 = vmatpush.msra.mxu0 0.0
      %775 = vmatpush.msra.mxu0 0.0
      %776 = vmatpush.msra.mxu0 0.0
      %777 = vmatpush.msra.mxu0 0.0
      %778 = vmatpush.msra.mxu0 0.0
      %779 = vmatpush.msra.mxu0 0.0
      %780 = vmatpush.msra.mxu0 0.0
      %781 = vmatpush.msra.mxu0 0.0
      %782 = vmatpush.msra.mxu0 %v765
      %783 = vmatmul.f32.gmra.mxu0 %v761
      %v784 = vpop.f32.mrf.mxu0
      %v785 = vadd.f32 0.0, %v784
      %786 = vdwg.mxu0
      %v787 = vld [vmem:[%s4] sm:$0xf]
      %v788 = vld [vmem:[%s4 + $0x4] sm:$0xf]
      %v789 = vld [vmem:[%s4 + $0x8] sm:$0xf]
      %v790 = vld [vmem:[%s4 + $0xc] sm:$0xf]
      %v791 = vpack.c.bf16 %v750, %v750
      %v792 = vld [vmem:[%s5] sm:$0xf]
      %v793 = vld [vmem:[%s5 + $0x4] sm:$0xf]
      %v794 = vld [vmem:[%s5 + $0x8] sm:$0xf]
      %v795 = vld [vmem:[%s5 + $0xc] sm:$0xf]
      %v796 = vpack.c.bf16 %v785, %v785
      %v801 = vunpack.c.l.b16 %v792
      %v802 = vunpack.c.l.b16 %v793
      %v803 = vunpack.c.l.b16 %v794
      %v804 = vunpack.c.l.b16 %v795
      %v805 = vpack.c.b16 %v802, %v801
      %v806 = vpack.c.b16 %v804, %v803
      %vm809 = vcmask 261120
      %v811 = vsel %vm809, %v796, 0
      %813 = vmatpush.bf16.msra.mxu0 0
      %814 = vmatpush.bf16.msra.mxu0 0
      %815 = vmatpush.bf16.msra.mxu0 0
      %816 = vmatpush.bf16.msra.mxu0 0
      %817 = vmatpush.bf16.msra.mxu0 0
      %818 = vmatpush.bf16.msra.mxu0 0
      %819 = vmatpush.bf16.msra.mxu0 %v806
      %820 = vmatpush.bf16.msra.mxu0 %v805
      %821 = vmatmul.bf16.gmra.mxu0 %v811
      %v822 = vpop.f32.mrf.mxu0
      %v823 = vadd.f32 0.0, %v822
      %v824 = vpop.f32.mrf.mxu0
      %825 = vdwg.mxu0
      %v830 = vunpack.c.l.b16 %v787
      %v831 = vunpack.c.l.b16 %v788
      %v832 = vunpack.c.l.b16 %v789
      %v833 = vunpack.c.l.b16 %v790
      %v834 = vpack.c.b16 %v831, %v830
      %v835 = vpack.c.b16 %v833, %v832
      %v839 = vsel %vm809, %v791, 0
      %841 = vmatpush.bf16.msra.mxu0 0
      %842 = vmatpush.bf16.msra.mxu0 0
      %843 = vmatpush.bf16.msra.mxu0 0
      %844 = vmatpush.bf16.msra.mxu0 0
      %845 = vmatpush.bf16.msra.mxu0 0
      %846 = vmatpush.bf16.msra.mxu0 0
      %847 = vmatpush.bf16.msra.mxu0 %v835
      %848 = vmatpush.bf16.msra.mxu0 %v834
      %849 = vmatmul.bf16.gmra.mxu0 %v839
      %v850 = vpop.f32.mrf.mxu0
      %v851 = vadd.f32 %v823, %v850
      %v852 = vpop.f32.mrf.mxu0
      %853 = vdwg.mxu0
      %v854 = vld [vmem:[%s6] sm:$0xf]
      %v855 = vld [vmem:[%s6 + $0x4] sm:$0xf]
      %v856 = vld [vmem:[%s6 + $0x8] sm:$0xf]
      %v857 = vld [vmem:[%s6 + $0xc] sm:$0xf]
      %v858 = vld [vmem:[%s7] sm:$0xf]
      %v859 = vld [vmem:[%s7 + $0x4] sm:$0xf]
      %v860 = vld [vmem:[%s7 + $0x8] sm:$0xf]
      %v861 = vld [vmem:[%s7 + $0xc] sm:$0xf]
      %v866 = vunpack.c.l.b16 %v858
      %v867 = vunpack.c.l.b16 %v859
      %v868 = vunpack.c.l.b16 %v860
      %v869 = vunpack.c.l.b16 %v861
      %v870 = vpack.c.b16 %v867, %v866
      %v871 = vpack.c.b16 %v869, %v868
      %874 = vmatpush.bf16.msra.mxu0 0
      %875 = vmatpush.bf16.msra.mxu0 0
      %876 = vmatpush.bf16.msra.mxu0 0
      %877 = vmatpush.bf16.msra.mxu0 0
      %878 = vmatpush.bf16.msra.mxu0 0
      %879 = vmatpush.bf16.msra.mxu0 0
      %880 = vmatpush.bf16.msra.mxu0 %v871
      %881 = vmatpush.bf16.msra.mxu0 %v870
      %882 = vmatmul.bf16.gmra.mxu0 %v811
      %v883 = vpop.f32.mrf.mxu0
      %v884 = vadd.f32 0.0, %v883
      %v885 = vpop.f32.mrf.mxu0
      %886 = vdwg.mxu0
      %v891 = vunpack.c.l.b16 %v854
      %v892 = vunpack.c.l.b16 %v855
      %v893 = vunpack.c.l.b16 %v856
      %v894 = vunpack.c.l.b16 %v857
      %v895 = vpack.c.b16 %v892, %v891
      %v896 = vpack.c.b16 %v894, %v893
      %899 = vmatpush.bf16.msra.mxu0 0
      %900 = vmatpush.bf16.msra.mxu0 0
      %901 = vmatpush.bf16.msra.mxu0 0
      %902 = vmatpush.bf16.msra.mxu0 0
      %903 = vmatpush.bf16.msra.mxu0 0
      %904 = vmatpush.bf16.msra.mxu0 0
      %905 = vmatpush.bf16.msra.mxu0 %v896
      %906 = vmatpush.bf16.msra.mxu0 %v895
      %907 = vmatmul.bf16.gmra.mxu0 %v839
      %v908 = vpop.f32.mrf.mxu0
      %v909 = vadd.f32 %v884, %v908
      %v910 = vpop.f32.mrf.mxu0
      %911 = vdwg.mxu0
      %v912 = vld [vmem:[%s8] sm:$0xf]
      %v913 = vadd.s32 %v752, 4294967293
      %vm914 = vcmp.eq.s32.totalorder %v754, %v913
      %v915 = vsel %vm914, 1, 0
      %v916 = vcvt.s32.f32 %v915
      %v918 = vsel %vm759, %v916, 0
      %v921 = vsel %vm763, %v851, 0
      %923 = vmatpush.msra.mxu0 0.0
      %924 = vmatpush.msra.mxu0 0.0
      %925 = vmatpush.msra.mxu0 0.0
      %926 = vmatpush.msra.mxu0 0.0
      %927 = vmatpush.msra.mxu0 0.0
      %928 = vmatpush.msra.mxu0 0.0
      %929 = vmatpush.msra.mxu0 0.0
      %930 = vmatpush.msra.mxu0 0.0
      %931 = vmatpush.msra.mxu0 0.0
      %932 = vmatpush.msra.mxu0 0.0
      %933 = vmatpush.msra.mxu0 0.0
      %934 = vmatpush.msra.mxu0 0.0
      %935 = vmatpush.msra.mxu0 0.0
      %936 = vmatpush.msra.mxu0 0.0
      %937 = vmatpush.msra.mxu0 0.0
      %938 = vmatpush.msra.mxu0 %v921
      %939 = vmatmul.f32.gmra.mxu0 %v918
      %v940 = vpop.f32.mrf.mxu0
      %v941 = vadd.f32 0.0, %v940
      %942 = vdwg.mxu0
      %v943 = vperm.slane %v912, 0
      %v944 = vmul.f32 %v941, %v943
      %v945 = vadd.f32 %v944, 0.0
      %v946 = vadd.s32 %v752, 4294967294
      %vm947 = vcmp.eq.s32.totalorder %v754, %v946
      %v948 = vsel %vm947, 1, 0
      %v949 = vcvt.s32.f32 %v948
      %v951 = vsel %vm759, %v949, 0
      %953 = vmatpush.msra.mxu0 0.0
      %954 = vmatpush.msra.mxu0 0.0
      %955 = vmatpush.msra.mxu0 0.0
      %956 = vmatpush.msra.mxu0 0.0
      %957 = vmatpush.msra.mxu0 0.0
      %958 = vmatpush.msra.mxu0 0.0
      %959 = vmatpush.msra.mxu0 0.0
      %960 = vmatpush.msra.mxu0 0.0
      %961 = vmatpush.msra.mxu0 0.0
      %962 = vmatpush.msra.mxu0 0.0
      %963 = vmatpush.msra.mxu0 0.0
      %964 = vmatpush.msra.mxu0 0.0
      %965 = vmatpush.msra.mxu0 0.0
      %966 = vmatpush.msra.mxu0 0.0
      %967 = vmatpush.msra.mxu0 0.0
      %968 = vmatpush.msra.mxu0 %v921
      %969 = vmatmul.f32.gmra.mxu0 %v951
      %v970 = vpop.f32.mrf.mxu0
      %v971 = vadd.f32 0.0, %v970
      %972 = vdwg.mxu0
      %v973 = vperm.slane %v912, 1
      %v974 = vmul.f32 %v971, %v973
      %v975 = vadd.f32 %v945, %v974
      %v976 = vadd.s32 %v752, 4294967295
      %vm977 = vcmp.eq.s32.totalorder %v754, %v976
      %v978 = vsel %vm977, 1, 0
      %v979 = vcvt.s32.f32 %v978
      %v981 = vsel %vm759, %v979, 0
      %983 = vmatpush.msra.mxu0 0.0
      %984 = vmatpush.msra.mxu0 0.0
      %985 = vmatpush.msra.mxu0 0.0
      %986 = vmatpush.msra.mxu0 0.0
      %987 = vmatpush.msra.mxu0 0.0
      %988 = vmatpush.msra.mxu0 0.0
      %989 = vmatpush.msra.mxu0 0.0
      %990 = vmatpush.msra.mxu0 0.0
      %991 = vmatpush.msra.mxu0 0.0
      %992 = vmatpush.msra.mxu0 0.0
      %993 = vmatpush.msra.mxu0 0.0
      %994 = vmatpush.msra.mxu0 0.0
      %995 = vmatpush.msra.mxu0 0.0
      %996 = vmatpush.msra.mxu0 0.0
      %997 = vmatpush.msra.mxu0 0.0
      %998 = vmatpush.msra.mxu0 %v921
      %999 = vmatmul.f32.gmra.mxu0 %v981
      %v1000 = vpop.f32.mrf.mxu0
      %v1001 = vadd.f32 0.0, %v1000
      %1002 = vdwg.mxu0
      %v1003 = vperm.slane %v912, 2
      %v1004 = vmul.f32 %v1001, %v1003
      %v1005 = vadd.f32 %v975, %v1004
      %vm1006 = vcmp.eq.s32.totalorder %v754, %v752
      %v1007 = vsel %vm1006, 1, 0
      %v1008 = vcvt.s32.f32 %v1007
      %v1010 = vsel %vm759, %v1008, 0
      %1012 = vmatpush.msra.mxu0 0.0
      %1013 = vmatpush.msra.mxu0 0.0
      %1014 = vmatpush.msra.mxu0 0.0
      %1015 = vmatpush.msra.mxu0 0.0
      %1016 = vmatpush.msra.mxu0 0.0
      %1017 = vmatpush.msra.mxu0 0.0
      %1018 = vmatpush.msra.mxu0 0.0
      %1019 = vmatpush.msra.mxu0 0.0
      %1020 = vmatpush.msra.mxu0 0.0
      %1021 = vmatpush.msra.mxu0 0.0
      %1022 = vmatpush.msra.mxu0 0.0
      %1023 = vmatpush.msra.mxu0 0.0
      %1024 = vmatpush.msra.mxu0 0.0
      %1025 = vmatpush.msra.mxu0 0.0
      %1026 = vmatpush.msra.mxu0 0.0
      %1027 = vmatpush.msra.mxu0 %v921
      %1028 = vmatmul.f32.gmra.mxu0 %v1010
      %v1029 = vpop.f32.mrf.mxu0
      %v1030 = vadd.f32 0.0, %v1029
      %1031 = vdwg.mxu0
      %v1032 = vperm.slane %v912, 3
      %v1033 = vmul.f32 %v1030, %v1032
      %v1034 = vadd.f32 %v1005, %v1033
      %v1035 = vld [vmem:[%s9] sm:$0x1]
      %v1037 = vperm.slane %v1035, 0
      %v1039 = vadd.f32 %v1034, %v1037
      %v1040 = vsub.f32 0.0, %v1039
      %v1041 = vmul.f32 %v1040, 1.442695
      %v1042 = vpow.pop %v1041
      %v1043 = vadd.f32 %v1042, 1.0
      %v1044 = vrcp.pop %v1043
      %v1045 = vmul.f32 %v1039, %v1044
      %v1046 = vld [vmem:[%s10] sm:$0xf]
      %v1047 = vld [vmem:[%s10 + $0x4] sm:$0xf]
      %v1048 = vld [vmem:[%s10 + $0x8] sm:$0xf]
      %v1049 = vld [vmem:[%s10 + $0xc] sm:$0xf]
      %v1050 = vld [vmem:[%s10 + $0x10] sm:$0xf]
      %v1051 = vld [vmem:[%s10 + $0x14] sm:$0xf]
      %v1052 = vld [vmem:[%s10 + $0x18] sm:$0xf]
      %v1053 = vld [vmem:[%s10 + $0x1c] sm:$0xf]
      %v1054 = vld [vmem:[%s10 + $0x20] sm:$0xf]
      %v1055 = vld [vmem:[%s10 + $0x24] sm:$0xf]
      %v1056 = vld [vmem:[%s10 + $0x28] sm:$0xf]
      %v1057 = vld [vmem:[%s10 + $0x2c] sm:$0xf]
      %v1058 = vld [vmem:[%s10 + $0x30] sm:$0xf]
      %v1059 = vld [vmem:[%s10 + $0x34] sm:$0xf]
      %v1060 = vld [vmem:[%s10 + $0x38] sm:$0xf]
      %v1061 = vld [vmem:[%s10 + $0x3c] sm:$0xf]
      %v1062 = vpack.c.bf16 %v1045, %v1045
      %v1079 = vunpack.c.l.b16 %v1046
      %v1080 = vunpack.c.l.b16 %v1047
      %v1081 = vunpack.c.l.b16 %v1048
      %v1082 = vunpack.c.l.b16 %v1049
      %v1083 = vunpack.c.l.b16 %v1050
      %v1084 = vunpack.c.l.b16 %v1051
      %v1085 = vunpack.c.l.b16 %v1052
      %v1086 = vunpack.c.l.b16 %v1053
      %v1087 = vunpack.c.l.b16 %v1054
      %v1088 = vunpack.c.l.b16 %v1055
      %v1089 = vunpack.c.l.b16 %v1056
      %v1090 = vunpack.c.l.b16 %v1057
      %v1091 = vunpack.c.l.b16 %v1058
      %v1092 = vunpack.c.l.b16 %v1059
      %v1093 = vunpack.c.l.b16 %v1060
      %v1094 = vunpack.c.l.b16 %v1061
      %v1095 = vpack.c.b16 %v1080, %v1079
      %v1096 = vpack.c.b16 %v1082, %v1081
      %v1097 = vpack.c.b16 %v1084, %v1083
      %v1098 = vpack.c.b16 %v1086, %v1085
      %v1099 = vpack.c.b16 %v1088, %v1087
      %v1100 = vpack.c.b16 %v1090, %v1089
      %v1101 = vpack.c.b16 %v1092, %v1091
      %v1102 = vpack.c.b16 %v1094, %v1093
      %1111 = vmatpush.bf16.msra.mxu0 %v1102
      %1112 = vmatpush.bf16.msra.mxu0 %v1101
      %1113 = vmatpush.bf16.msra.mxu0 %v1100
      %1114 = vmatpush.bf16.msra.mxu0 %v1099
      %1115 = vmatpush.bf16.msra.mxu0 %v1098
      %1116 = vmatpush.bf16.msra.mxu0 %v1097
      %1117 = vmatpush.bf16.msra.mxu0 %v1096
      %1118 = vmatpush.bf16.msra.mxu0 %v1095
      %1119 = vmatmul.bf16.gmra.mxu0 %v1062
      %v1120 = vpop.f32.mrf.mxu0
      %v1121 = vadd.f32 0.0, %v1120
      %v1122 = vpop.f32.mrf.mxu0
      %1123 = vdwg.mxu0
      %v1124 = vld [vmem:[%s11] sm:$0xf]
      %v1125 = vld [vmem:[%s11 + $0x4] sm:$0xf]
      %v1126 = vld [vmem:[%s11 + $0x8] sm:$0xf]
      %v1127 = vld [vmem:[%s11 + $0xc] sm:$0xf]
      %v1128 = vld [vmem:[%s11 + $0x10] sm:$0xf]
      %v1129 = vld [vmem:[%s11 + $0x14] sm:$0xf]
      %v1130 = vld [vmem:[%s11 + $0x18] sm:$0xf]
      %v1131 = vld [vmem:[%s11 + $0x1c] sm:$0xf]
      %v1132 = vld [vmem:[%s11 + $0x20] sm:$0xf]
      %v1133 = vld [vmem:[%s11 + $0x24] sm:$0xf]
      %v1134 = vld [vmem:[%s11 + $0x28] sm:$0xf]
      %v1135 = vld [vmem:[%s11 + $0x2c] sm:$0xf]
      %v1136 = vld [vmem:[%s11 + $0x30] sm:$0xf]
      %v1137 = vld [vmem:[%s11 + $0x34] sm:$0xf]
      %v1138 = vld [vmem:[%s11 + $0x38] sm:$0xf]
      %v1139 = vld [vmem:[%s11 + $0x3c] sm:$0xf]
      %v1156 = vunpack.c.l.b16 %v1124
      %v1157 = vunpack.c.l.b16 %v1125
      %v1158 = vunpack.c.l.b16 %v1126
      %v1159 = vunpack.c.l.b16 %v1127
      %v1160 = vunpack.c.l.b16 %v1128
      %v1161 = vunpack.c.l.b16 %v1129
      %v1162 = vunpack.c.l.b16 %v1130
      %v1163 = vunpack.c.l.b16 %v1131
      %v1164 = vunpack.c.l.b16 %v1132
      %v1165 = vunpack.c.l.b16 %v1133
      %v1166 = vunpack.c.l.b16 %v1134
      %v1167 = vunpack.c.l.b16 %v1135
      %v1168 = vunpack.c.l.b16 %v1136
      %v1169 = vunpack.c.l.b16 %v1137
      %v1170 = vunpack.c.l.b16 %v1138
      %v1171 = vunpack.c.l.b16 %v1139
      %v1172 = vpack.c.b16 %v1157, %v1156
      %v1173 = vpack.c.b16 %v1159, %v1158
      %v1174 = vpack.c.b16 %v1161, %v1160
      %v1175 = vpack.c.b16 %v1163, %v1162
      %v1176 = vpack.c.b16 %v1165, %v1164
      %v1177 = vpack.c.b16 %v1167, %v1166
      %v1178 = vpack.c.b16 %v1169, %v1168
      %v1179 = vpack.c.b16 %v1171, %v1170
      %1188 = vmatpush.bf16.msra.mxu0 %v1179
      %1189 = vmatpush.bf16.msra.mxu0 %v1178
      %1190 = vmatpush.bf16.msra.mxu0 %v1177
      %1191 = vmatpush.bf16.msra.mxu0 %v1176
      %1192 = vmatpush.bf16.msra.mxu0 %v1175
      %1193 = vmatpush.bf16.msra.mxu0 %v1174
      %1194 = vmatpush.bf16.msra.mxu0 %v1173
      %1195 = vmatpush.bf16.msra.mxu0 %v1172
      %1196 = vmatmul.bf16.gmra.mxu0 %v1062
      %v1197 = vpop.f32.mrf.mxu0
      %v1198 = vadd.f32 0.0, %v1197
      %v1199 = vpop.f32.mrf.mxu0
      %1200 = vdwg.mxu0
      %v1201 = vld [vmem:[%s12] sm:$0xf]
      %v1202 = vld [vmem:[%s12 + $0x4] sm:$0xf]
      %v1203 = vld [vmem:[%s12 + $0x8] sm:$0xf]
      %v1204 = vld [vmem:[%s12 + $0xc] sm:$0xf]
      %v1205 = vld [vmem:[%s12 + $0x10] sm:$0xf]
      %v1206 = vld [vmem:[%s12 + $0x14] sm:$0xf]
      %v1207 = vld [vmem:[%s12 + $0x18] sm:$0xf]
      %v1208 = vld [vmem:[%s12 + $0x1c] sm:$0xf]
      %v1209 = vld [vmem:[%s12 + $0x20] sm:$0xf]
      %v1210 = vld [vmem:[%s12 + $0x24] sm:$0xf]
      %v1211 = vld [vmem:[%s12 + $0x28] sm:$0xf]
      %v1212 = vld [vmem:[%s12 + $0x2c] sm:$0xf]
      %v1213 = vld [vmem:[%s12 + $0x30] sm:$0xf]
      %v1214 = vld [vmem:[%s12 + $0x34] sm:$0xf]
      %v1215 = vld [vmem:[%s12 + $0x38] sm:$0xf]
      %v1216 = vld [vmem:[%s12 + $0x3c] sm:$0xf]
      %v1233 = vunpack.c.l.b16 %v1201
      %v1234 = vunpack.c.l.b16 %v1202
      %v1235 = vunpack.c.l.b16 %v1203
      %v1236 = vunpack.c.l.b16 %v1204
      %v1237 = vunpack.c.l.b16 %v1205
      %v1238 = vunpack.c.l.b16 %v1206
      %v1239 = vunpack.c.l.b16 %v1207
      %v1240 = vunpack.c.l.b16 %v1208
      %v1241 = vunpack.c.l.b16 %v1209
      %v1242 = vunpack.c.l.b16 %v1210
      %v1243 = vunpack.c.l.b16 %v1211
      %v1244 = vunpack.c.l.b16 %v1212
      %v1245 = vunpack.c.l.b16 %v1213
      %v1246 = vunpack.c.l.b16 %v1214
      %v1247 = vunpack.c.l.b16 %v1215
      %v1248 = vunpack.c.l.b16 %v1216
      %v1249 = vpack.c.b16 %v1234, %v1233
      %v1250 = vpack.c.b16 %v1236, %v1235
      %v1251 = vpack.c.b16 %v1238, %v1237
      %v1252 = vpack.c.b16 %v1240, %v1239
      %v1253 = vpack.c.b16 %v1242, %v1241
      %v1254 = vpack.c.b16 %v1244, %v1243
      %v1255 = vpack.c.b16 %v1246, %v1245
      %v1256 = vpack.c.b16 %v1248, %v1247
      %1265 = vmatpush.bf16.msra.mxu0 %v1256
      %1266 = vmatpush.bf16.msra.mxu0 %v1255
      %1267 = vmatpush.bf16.msra.mxu0 %v1254
      %1268 = vmatpush.bf16.msra.mxu0 %v1253
      %1269 = vmatpush.bf16.msra.mxu0 %v1252
      %1270 = vmatpush.bf16.msra.mxu0 %v1251
      %1271 = vmatpush.bf16.msra.mxu0 %v1250
      %1272 = vmatpush.bf16.msra.mxu0 %v1249
      %1273 = vmatmul.bf16.gmra.mxu0 %v1062
      %v1274 = vpop.f32.mrf.mxu0
      %v1275 = vadd.f32 0.0, %v1274
      %v1276 = vpop.f32.mrf.mxu0
      %1277 = vdwg.mxu0
      %v1278 = vld [vmem:[%s13] sm:$0xf]
      %v1279 = vld [vmem:[%s14] sm:$0x1]
      %v1281 = vperm.slane %v1279, 0
      %vm1283 = vcmask 31744
      %v1285 = vsel %vm1283, %v1121, 0
      %vm1287 = vcmask 1043456
      %v1289 = vsel %vm1287, %v1278, 0
      %1291 = vmatpush.msra.mxu0 0.0
      %1292 = vmatpush.msra.mxu0 0.0
      %1293 = vmatpush.msra.mxu0 0.0
      %1294 = vmatpush.msra.mxu0 0.0
      %1295 = vmatpush.msra.mxu0 0.0
      %1296 = vmatpush.msra.mxu0 0.0
      %1297 = vmatpush.msra.mxu0 0.0
      %1298 = vmatpush.msra.mxu0 0.0
      %1299 = vmatpush.msra.mxu0 0.0
      %1300 = vmatpush.msra.mxu0 0.0
      %1301 = vmatpush.msra.mxu0 0.0
      %1302 = vmatpush.msra.mxu0 0.0
      %1303 = vmatpush.msra.mxu0 0.0
      %1304 = vmatpush.msra.mxu0 0.0
      %1305 = vmatpush.msra.mxu0 0.0
      %1306 = vmatpush.msra.mxu0 %v1289
      %1307 = vmatmul.f32.gmra.mxu0 %v1285
      %v1308 = vpop.f32.mrf.mxu0
      %v1309 = vadd.f32 %v1281, %v1308
      %1310 = vdwg.mxu0
      %v1311 = vmax.f32 %v1309, 0.0
      %v1312 = vand.u32 2147483647, %v1309
      %v1313 = vsub.f32 0.0, %v1312
      %v1314 = vmul.f32 %v1313, 1.442695
      %v1315 = vpow.pop %v1314
      %v1316 = vadd.f32 %v1315, 1.0
      %v1317 = vlog2.pop %v1316
      %v1318 = vmul.f32 %v1317, 0.6931472
      %v1319 = vadd.f32 %v1311, %v1318
      %v1320 = vld [vmem:[%s18] sm:$0xff]
      %v1321 = vld [vmem:[%s18 + $0x8] sm:$0xff]
      %v1322 = vld [vmem:[%s18 + $0x10] sm:$0xff]
      %v1323 = vld [vmem:[%s18 + $0x18] sm:$0xff]
      %v1324 = vld [vmem:[%s18 + $0x20] sm:$0xff]
      %vm1325 = vcmp.lt.s32.totalorder %v754, 64
      %v1326 = vsel %vm1325, 1, 0
      %v1327 = vcvt.s32.f32 %v1326
      %v1328 = vsub.f32 1.0, %v1327
      %v1330 = vsel %vm759, %v1320, 0
      %v1333 = vsel %vm759, %v1321, 0
      %v1336 = vsel %vm759, %v1322, 0
      %v1339 = vsel %vm759, %v1323, 0
      %v1342 = vsel %vm759, %v1324, 0
      %v1345 = vsel %vm763, %v1319, 0
      %1347 = vmatpush.msra.mxu0 0.0
      %1348 = vmatpush.msra.mxu0 0.0
      %1349 = vmatpush.msra.mxu0 0.0
      %1350 = vmatpush.msra.mxu0 0.0
      %1351 = vmatpush.msra.mxu0 0.0
      %1352 = vmatpush.msra.mxu0 0.0
      %1353 = vmatpush.msra.mxu0 0.0
      %1354 = vmatpush.msra.mxu0 0.0
      %1355 = vmatpush.msra.mxu0 0.0
      %1356 = vmatpush.msra.mxu0 0.0
      %1357 = vmatpush.msra.mxu0 0.0
      %1358 = vmatpush.msra.mxu0 0.0
      %1359 = vmatpush.msra.mxu0 0.0
      %1360 = vmatpush.msra.mxu0 0.0
      %1361 = vmatpush.msra.mxu0 0.0
      %1362 = vmatpush.msra.mxu0 %v1345
      %1363 = vmatmul.f32.gmra.mxu0 %v1330
      %v1364 = vpop.f32.mrf.mxu0
      %v1365 = vadd.f32 0.0, %v1364
      %1366 = vmatmul.f32.gmra.mxu0 %v1333
      %v1367 = vpop.f32.mrf.mxu0
      %v1368 = vadd.f32 0.0, %v1367
      %1369 = vmatmul.f32.gmra.mxu0 %v1336
      %v1370 = vpop.f32.mrf.mxu0
      %v1371 = vadd.f32 0.0, %v1370
      %1372 = vmatmul.f32.gmra.mxu0 %v1339
      %v1373 = vpop.f32.mrf.mxu0
      %v1374 = vadd.f32 0.0, %v1373
      %1375 = vmatmul.f32.gmra.mxu0 %v1342
      %v1376 = vpop.f32.mrf.mxu0
      %v1377 = vadd.f32 0.0, %v1376
      %1378 = vdwg.mxu0
      %v1379 = vmul.f32 %v1319, %v1045
      %v1381 = vsel %vm763, %v1379, 0
      %1383 = vmatpush.msra.mxu0 0.0
      %1384 = vmatpush.msra.mxu0 0.0
      %1385 = vmatpush.msra.mxu0 0.0
      %1386 = vmatpush.msra.mxu0 0.0
      %1387 = vmatpush.msra.mxu0 0.0
      %1388 = vmatpush.msra.mxu0 0.0
      %1389 = vmatpush.msra.mxu0 0.0
      %1390 = vmatpush.msra.mxu0 0.0
      %1391 = vmatpush.msra.mxu0 0.0
      %1392 = vmatpush.msra.mxu0 0.0
      %1393 = vmatpush.msra.mxu0 0.0
      %1394 = vmatpush.msra.mxu0 0.0
      %1395 = vmatpush.msra.mxu0 0.0
      %1396 = vmatpush.msra.mxu0 0.0
      %1397 = vmatpush.msra.mxu0 0.0
      %1398 = vmatpush.msra.mxu0 %v1381
      %1399 = vmatmul.f32.gmra.mxu0 %v1330
      %v1400 = vpop.f32.mrf.mxu0
      %v1401 = vadd.f32 0.0, %v1400
      %1402 = vmatmul.f32.gmra.mxu0 %v1333
      %v1403 = vpop.f32.mrf.mxu0
      %v1404 = vadd.f32 0.0, %v1403
      %1405 = vmatmul.f32.gmra.mxu0 %v1336
      %v1406 = vpop.f32.mrf.mxu0
      %v1407 = vadd.f32 0.0, %v1406
      %1408 = vmatmul.f32.gmra.mxu0 %v1339
      %v1409 = vpop.f32.mrf.mxu0
      %v1410 = vadd.f32 0.0, %v1409
      %1411 = vmatmul.f32.gmra.mxu0 %v1342
      %v1412 = vpop.f32.mrf.mxu0
      %v1413 = vadd.f32 0.0, %v1412
      %1414 = vdwg.mxu0
      %v1415 = vld [vmem:[%s15] sm:$0xff]
      %v1416 = vld [vmem:[%s15 + $0x8] sm:$0xff]
      %v1417 = vld [vmem:[%s15 + $0x10] sm:$0xff]
      %v1418 = vld [vmem:[%s15 + $0x18] sm:$0xff]
      %v1419 = vld [vmem:[%s15 + $0x20] sm:$0xff]
      %v1420 = vmul.f32 %v1365, %v1415
      %v1421 = vmul.f32 %v1368, %v1416
      %v1422 = vmul.f32 %v1371, %v1417
      %v1423 = vmul.f32 %v1374, %v1418
      %v1424 = vmul.f32 %v1377, %v1419
      %v1425 = vmul.f32 %v1420, 1.442695
      %v1426 = vpow.pop %v1425
      %v1427 = vmul.f32 %v1421, 1.442695
      %v1428 = vpow.pop %v1427
      %v1429 = vmul.f32 %v1422, 1.442695
      %v1430 = vpow.pop %v1429
      %v1431 = vmul.f32 %v1423, 1.442695
      %v1432 = vpow.pop %v1431
      %v1433 = vmul.f32 %v1424, 1.442695
      %v1434 = vpow.pop %v1433
      %v1436 = vsel %vm763, %v1198, 0
      %1438 = vmatpush.msra.mxu0 0.0
      %1439 = vmatpush.msra.mxu0 0.0
      %1440 = vmatpush.msra.mxu0 0.0
      %1441 = vmatpush.msra.mxu0 0.0
      %1442 = vmatpush.msra.mxu0 0.0
      %1443 = vmatpush.msra.mxu0 0.0
      %1444 = vmatpush.msra.mxu0 0.0
      %1445 = vmatpush.msra.mxu0 0.0
      %1446 = vmatpush.msra.mxu0 0.0
      %1447 = vmatpush.msra.mxu0 0.0
      %1448 = vmatpush.msra.mxu0 0.0
      %1449 = vmatpush.msra.mxu0 0.0
      %1450 = vmatpush.msra.mxu0 0.0
      %1451 = vmatpush.msra.mxu0 0.0
      %1452 = vmatpush.msra.mxu0 0.0
      %1453 = vmatpush.msra.mxu0 %v1436
      %1454 = vmatmul.f32.gmra.mxu0 %v1330
      %v1455 = vpop.f32.mrf.mxu0
      %v1456 = vadd.f32 0.0, %v1455
      %1457 = vmatmul.f32.gmra.mxu0 %v1333
      %v1458 = vpop.f32.mrf.mxu0
      %v1459 = vadd.f32 0.0, %v1458
      %1460 = vmatmul.f32.gmra.mxu0 %v1336
      %v1461 = vpop.f32.mrf.mxu0
      %v1462 = vadd.f32 0.0, %v1461
      %1463 = vmatmul.f32.gmra.mxu0 %v1339
      %v1464 = vpop.f32.mrf.mxu0
      %v1465 = vadd.f32 0.0, %v1464
      %1466 = vmatmul.f32.gmra.mxu0 %v1342
      %v1467 = vpop.f32.mrf.mxu0
      %v1468 = vadd.f32 0.0, %v1467
      %1469 = vdwg.mxu0
      %v1471 = vsel %vm763, %v1275, 0
      %1473 = vmatpush.msra.mxu0 0.0
      %1474 = vmatpush.msra.mxu0 0.0
      %1475 = vmatpush.msra.mxu0 0.0
      %1476 = vmatpush.msra.mxu0 0.0
      %1477 = vmatpush.msra.mxu0 0.0
      %1478 = vmatpush.msra.mxu0 0.0
      %1479 = vmatpush.msra.mxu0 0.0
      %1480 = vmatpush.msra.mxu0 0.0
      %1481 = vmatpush.msra.mxu0 0.0
      %1482 = vmatpush.msra.mxu0 0.0
      %1483 = vmatpush.msra.mxu0 0.0
      %1484 = vmatpush.msra.mxu0 0.0
      %1485 = vmatpush.msra.mxu0 0.0
      %1486 = vmatpush.msra.mxu0 0.0
      %1487 = vmatpush.msra.mxu0 0.0
      %1488 = vmatpush.msra.mxu0 %v1471
      %1489 = vmatmul.f32.gmra.mxu0 %v1330
      %v1490 = vpop.f32.mrf.mxu0
      %v1491 = vadd.f32 0.0, %v1490
      %1492 = vmatmul.f32.gmra.mxu0 %v1333
      %v1493 = vpop.f32.mrf.mxu0
      %v1494 = vadd.f32 0.0, %v1493
      %1495 = vmatmul.f32.gmra.mxu0 %v1336
      %v1496 = vpop.f32.mrf.mxu0
      %v1497 = vadd.f32 0.0, %v1496
      %1498 = vmatmul.f32.gmra.mxu0 %v1339
      %v1499 = vpop.f32.mrf.mxu0
      %v1500 = vadd.f32 0.0, %v1499
      %1501 = vmatmul.f32.gmra.mxu0 %v1342
      %v1502 = vpop.f32.mrf.mxu0
      %v1503 = vadd.f32 0.0, %v1502
      %1504 = vdwg.mxu0
      %v1505 = vld [vmem:[%s19] sm:$0xff]
      %v1506 = vld [vmem:[%s19 + $0x8] sm:$0xff]
      %v1507 = vld [vmem:[%s19 + $0x10] sm:$0xff]
      %v1508 = vld [vmem:[%s19 + $0x18] sm:$0xff]
      %v1509 = vld [vmem:[%s19 + $0x20] sm:$0xff]
      %v1510 = vld [vmem:[%s20] sm:$0xff]
      %v1511 = vld [vmem:[%s20 + $0x8] sm:$0xff]
      %v1512 = vld [vmem:[%s20 + $0x10] sm:$0xff]
      %v1513 = vld [vmem:[%s20 + $0x18] sm:$0xff]
      %v1514 = vld [vmem:[%s20 + $0x20] sm:$0xff]
      %v1515 = vmul.f32 %v1456, %v1505
      %v1516 = vmul.f32 %v1459, %v1506
      %v1517 = vmul.f32 %v1462, %v1507
      %v1518 = vmul.f32 %v1465, %v1508
      %v1519 = vmul.f32 %v1468, %v1509
      %vm1520 = vcmask 130048
      %v1521 = vsel %vm1520, %v1515, 0.0
      %1522 = vadd.xlane.f32.xlu0 %v1521
      %v1523 = vpop.xlane.xlu0 %1522
      %v1524 = vsel %vm1520, %v1516, 0.0
      %1525 = vadd.xlane.f32.xlu0 %v1524
      %v1526 = vpop.xlane.xlu0 %1525
      %v1527 = vsel %vm1520, %v1517, 0.0
      %1528 = vadd.xlane.f32.xlu0 %v1527
      %v1529 = vpop.xlane.xlu0 %1528
      %v1530 = vsel %vm1520, %v1518, 0.0
      %1531 = vadd.xlane.f32.xlu0 %v1530
      %v1532 = vpop.xlane.xlu0 %1531
      %v1533 = vsel %vm1520, %v1519, 0.0
      %1534 = vadd.xlane.f32.xlu0 %v1533
      %v1535 = vpop.xlane.xlu0 %1534
      %v1536 = vmul.f32 %v1456, %v1510
      %v1537 = vmul.f32 %v1459, %v1511
      %v1538 = vmul.f32 %v1462, %v1512
      %v1539 = vmul.f32 %v1465, %v1513
      %v1540 = vmul.f32 %v1468, %v1514
      %v1541 = vsel %vm1520, %v1536, 0.0
      %1542 = vadd.xlane.f32.xlu0 %v1541
      %v1543 = vpop.xlane.xlu0 %1542
      %v1544 = vsel %vm1520, %v1537, 0.0
      %1545 = vadd.xlane.f32.xlu0 %v1544
      %v1546 = vpop.xlane.xlu0 %1545
      %v1547 = vsel %vm1520, %v1538, 0.0
      %1548 = vadd.xlane.f32.xlu0 %v1547
      %v1549 = vpop.xlane.xlu0 %1548
      %v1550 = vsel %vm1520, %v1539, 0.0
      %1551 = vadd.xlane.f32.xlu0 %v1550
      %v1552 = vpop.xlane.xlu0 %1551
      %v1553 = vsel %vm1520, %v1540, 0.0
      %1554 = vadd.xlane.f32.xlu0 %v1553
      %v1555 = vpop.xlane.xlu0 %1554
      %v1556 = vmul.f32 %v1491, %v1505
      %v1557 = vmul.f32 %v1494, %v1506
      %v1558 = vmul.f32 %v1497, %v1507
      %v1559 = vmul.f32 %v1500, %v1508
      %v1560 = vmul.f32 %v1503, %v1509
      %v1561 = vsel %vm1520, %v1556, 0.0
      %1562 = vadd.xlane.f32.xlu0 %v1561
      %v1563 = vpop.xlane.xlu0 %1562
      %v1564 = vsel %vm1520, %v1557, 0.0
      %1565 = vadd.xlane.f32.xlu0 %v1564
      %v1566 = vpop.xlane.xlu0 %1565
      %v1567 = vsel %vm1520, %v1558, 0.0
      %1568 = vadd.xlane.f32.xlu0 %v1567
      %v1569 = vpop.xlane.xlu0 %1568
      %v1570 = vsel %vm1520, %v1559, 0.0
      %1571 = vadd.xlane.f32.xlu0 %v1570
      %v1572 = vpop.xlane.xlu0 %1571
      %v1573 = vsel %vm1520, %v1560, 0.0
      %1574 = vadd.xlane.f32.xlu0 %v1573
      %v1575 = vpop.xlane.xlu0 %1574
      %v1576 = vmul.f32 %v1491, %v1510
      %v1577 = vmul.f32 %v1494, %v1511
      %v1578 = vmul.f32 %v1497, %v1512
      %v1579 = vmul.f32 %v1500, %v1513
      %v1580 = vmul.f32 %v1503, %v1514
      %v1581 = vsel %vm1520, %v1576, 0.0
      %1582 = vadd.xlane.f32.xlu0 %v1581
      %v1583 = vpop.xlane.xlu0 %1582
      %v1584 = vsel %vm1520, %v1577, 0.0
      %1585 = vadd.xlane.f32.xlu0 %v1584
      %v1586 = vpop.xlane.xlu0 %1585
      %v1587 = vsel %vm1520, %v1578, 0.0
      %1588 = vadd.xlane.f32.xlu0 %v1587
      %v1589 = vpop.xlane.xlu0 %1588
      %v1590 = vsel %vm1520, %v1579, 0.0
      %1591 = vadd.xlane.f32.xlu0 %v1590
      %v1592 = vpop.xlane.xlu0 %1591
      %v1593 = vsel %vm1520, %v1580, 0.0
      %1594 = vadd.xlane.f32.xlu0 %v1593
      %v1595 = vpop.xlane.xlu0 %1594
      %v1596 = vmul.f32 %v1523, %v1327
      %v1597 = vmul.f32 %v1526, %v1327
      %v1598 = vmul.f32 %v1529, %v1327
      %v1599 = vmul.f32 %v1532, %v1327
      %v1600 = vmul.f32 %v1535, %v1327
      %v1601 = vmul.f32 %v1543, %v1328
      %v1602 = vmul.f32 %v1546, %v1328
      %v1603 = vmul.f32 %v1549, %v1328
      %v1604 = vmul.f32 %v1552, %v1328
      %v1605 = vmul.f32 %v1555, %v1328
      %v1606 = vadd.f32 %v1596, %v1601
      %v1607 = vadd.f32 %v1597, %v1602
      %v1608 = vadd.f32 %v1598, %v1603
      %v1609 = vadd.f32 %v1599, %v1604
      %v1610 = vadd.f32 %v1600, %v1605
      %v1611 = vmul.f32 %v1563, %v1327
      %v1612 = vmul.f32 %v1566, %v1327
      %v1613 = vmul.f32 %v1569, %v1327
      %v1614 = vmul.f32 %v1572, %v1327
      %v1615 = vmul.f32 %v1575, %v1327
      %v1616 = vmul.f32 %v1583, %v1328
      %v1617 = vmul.f32 %v1586, %v1328
      %v1618 = vmul.f32 %v1589, %v1328
      %v1619 = vmul.f32 %v1592, %v1328
      %v1620 = vmul.f32 %v1595, %v1328
      %v1621 = vadd.f32 %v1611, %v1616
      %v1622 = vadd.f32 %v1612, %v1617
      %v1623 = vadd.f32 %v1613, %v1618
      %v1624 = vadd.f32 %v1614, %v1619
      %v1625 = vadd.f32 %v1615, %v1620
      %v1626 = vmul.f32 %v1401, %v1606
      %v1627 = vmul.f32 %v1404, %v1607
      %v1628 = vmul.f32 %v1407, %v1608
      %v1629 = vmul.f32 %v1410, %v1609
      %v1630 = vmul.f32 %v1413, %v1610
      %v1631 = vmul.f32 %v1426, 0.0
      %v1632 = vadd.f32 %v1631, %v1626
      %v1633 = vmul.f32 %v1632, %v1621
      %v1634 = vrot.slane %v1633, 4
      %v1635 = vadd.f32 %v1633, %v1634
      %v1636 = vrot.slane %v1635, 2
      %v1637 = vadd.f32 %v1635, %v1636
      %v1638 = vrot.slane %v1637, 1
      %v1639 = vadd.f32 %v1637, %v1638
      %1640 = vst [vmem:[#allocation2] sm:$0x1] %v1639
      %v1641 = vmul.f32 %v1428, %v1632
      %v1642 = vadd.f32 %v1641, %v1627
      %v1643 = vmul.f32 %v1642, %v1622
      %v1644 = vrot.slane %v1643, 4
      %v1645 = vadd.f32 %v1643, %v1644
      %v1646 = vrot.slane %v1645, 2
      %v1647 = vadd.f32 %v1645, %v1646
      %v1648 = vrot.slane %v1647, 1
      %v1649 = vadd.f32 %v1647, %v1648
      %1650 = vst [vmem:[#allocation2 + $0x1] sm:$0x1] %v1649
      %v1651 = vmul.f32 %v1430, %v1642
      %v1652 = vadd.f32 %v1651, %v1628
      %v1653 = vmul.f32 %v1652, %v1623
      %v1654 = vrot.slane %v1653, 4
      %v1655 = vadd.f32 %v1653, %v1654
      %v1656 = vrot.slane %v1655, 2
      %v1657 = vadd.f32 %v1655, %v1656
      %v1658 = vrot.slane %v1657, 1
      %v1659 = vadd.f32 %v1657, %v1658
      %1660 = vst [vmem:[#allocation2 + $0x2] sm:$0x1] %v1659
      %v1661 = vmul.f32 %v1432, %v1652
      %v1662 = vadd.f32 %v1661, %v1629
      %v1663 = vmul.f32 %v1662, %v1624
      %v1664 = vrot.slane %v1663, 4
      %v1665 = vadd.f32 %v1663, %v1664
      %v1666 = vrot.slane %v1665, 2
      %v1667 = vadd.f32 %v1665, %v1666
      %v1668 = vrot.slane %v1667, 1
      %v1669 = vadd.f32 %v1667, %v1668
      %1670 = vst [vmem:[#allocation2 + $0x3] sm:$0x1] %v1669
      %v1671 = vmul.f32 %v1434, %v1662
      %v1672 = vadd.f32 %v1671, %v1630
      %v1673 = vmul.f32 %v1672, %v1625
      %v1674 = vrot.slane %v1673, 4
      %v1675 = vadd.f32 %v1673, %v1674
      %v1676 = vrot.slane %v1675, 2
      %v1677 = vadd.f32 %v1675, %v1676
      %v1678 = vrot.slane %v1677, 1
      %v1679 = vadd.f32 %v1677, %v1678
      %1680 = vst [vmem:[#allocation2 + $0x4] sm:$0x1] %v1679
      %v1681 = vld [vmem:[#allocation2] sm:$0x1f]
      %v1682 = vld [vmem:[%s16] sm:$0x1]
      %v1684 = vperm.slane %v1682, 0
      %v1686 = vmul.f32 %v1684, %v1045
      %v1687 = vadd.f32 %v1681, %v1686
      %v1688 = vsub.f32 0.0, %v909
      %v1689 = vmul.f32 %v1688, 1.442695
      %v1690 = vpow.pop %v1689
      %v1691 = vadd.f32 %v1690, 1.0
      %v1692 = vrcp.pop %v1691
      %v1693 = vmul.f32 %v909, %v1692
      %v1694 = vmul.f32 %v1687, %v1693
      %v1695 = vmul.f32 %v1694, %v1327
      %v1696 = vld [vmem:[%s17] sm:$0xf]
      %v1697 = vld [vmem:[%s17 + $0x4] sm:$0xf]
      %v1698 = vld [vmem:[%s17 + $0x8] sm:$0xf]
      %v1699 = vld [vmem:[%s17 + $0xc] sm:$0xf]
      %v1700 = vld [vmem:[%s17 + $0x10] sm:$0xf]
      %v1701 = vld [vmem:[%s17 + $0x14] sm:$0xf]
      %v1702 = vld [vmem:[%s17 + $0x18] sm:$0xf]
      %v1703 = vld [vmem:[%s17 + $0x1c] sm:$0xf]
      %v1704 = vld [vmem:[%s17 + $0x20] sm:$0xf]
      %v1705 = vld [vmem:[%s17 + $0x24] sm:$0xf]
      %v1706 = vld [vmem:[%s17 + $0x28] sm:$0xf]
      %v1707 = vld [vmem:[%s17 + $0x2c] sm:$0xf]
      %v1708 = vld [vmem:[%s17 + $0x30] sm:$0xf]
      %v1709 = vld [vmem:[%s17 + $0x34] sm:$0xf]
      %v1710 = vld [vmem:[%s17 + $0x38] sm:$0xf]
      %v1711 = vld [vmem:[%s17 + $0x3c] sm:$0xf]
      %v1712 = vpack.c.bf16 %v1695, %v1695
      %v1713 = vmul.f32 %v1694, %v1328
      %v1714 = vpack.c.bf16 %v1713, %v1713
      %v1731 = vunpack.c.l.b16 %v1696
      %v1732 = vunpack.c.l.b16 %v1697
      %v1733 = vunpack.c.l.b16 %v1698
      %v1734 = vunpack.c.l.b16 %v1699
      %v1735 = vunpack.c.l.b16 %v1700
      %v1736 = vunpack.c.l.b16 %v1701
      %v1737 = vunpack.c.l.b16 %v1702
      %v1738 = vunpack.c.l.b16 %v1703
      %v1739 = vunpack.c.l.b16 %v1704
      %v1740 = vunpack.c.l.b16 %v1705
      %v1741 = vunpack.c.l.b16 %v1706
      %v1742 = vunpack.c.l.b16 %v1707
      %v1743 = vunpack.c.l.b16 %v1708
      %v1744 = vunpack.c.l.b16 %v1709
      %v1745 = vunpack.c.l.b16 %v1710
      %v1746 = vunpack.c.l.b16 %v1711
      %v1747 = vpack.c.b16 %v1732, %v1731
      %v1748 = vpack.c.b16 %v1734, %v1733
      %v1749 = vpack.c.b16 %v1736, %v1735
      %v1750 = vpack.c.b16 %v1738, %v1737
      %v1751 = vpack.c.b16 %v1740, %v1739
      %v1752 = vpack.c.b16 %v1742, %v1741
      %v1753 = vpack.c.b16 %v1744, %v1743
      %v1754 = vpack.c.b16 %v1746, %v1745
      %1763 = vmatpush.bf16.msra.mxu0 %v1754
      %1764 = vmatpush.bf16.msra.mxu0 %v1753
      %1765 = vmatpush.bf16.msra.mxu0 %v1752
      %1766 = vmatpush.bf16.msra.mxu0 %v1751
      %1767 = vmatpush.bf16.msra.mxu0 %v1750
      %1768 = vmatpush.bf16.msra.mxu0 %v1749
      %1769 = vmatpush.bf16.msra.mxu0 %v1748
      %1770 = vmatpush.bf16.msra.mxu0 %v1747
      %1771 = vmatmul.bf16.gmra.mxu0 %v1714
      %v1772 = vpop.f32.mrf.mxu0
      %v1773 = vadd.f32 0.0, %v1772
      %v1774 = vpop.f32.mrf.mxu0
      %1775 = vdwg.mxu0
      %v1777 = vsel %vm763, %v1773, 0
      %1779 = vmatpush.msra.mxu0 0.0
      %1780 = vmatpush.msra.mxu0 0.0
      %1781 = vmatpush.msra.mxu0 0.0
      %1782 = vmatpush.msra.mxu0 0.0
      %1783 = vmatpush.msra.mxu0 0.0
      %1784 = vmatpush.msra.mxu0 0.0
      %1785 = vmatpush.msra.mxu0 0.0
      %1786 = vmatpush.msra.mxu0 0.0
      %1787 = vmatpush.msra.mxu0 0.0
      %1788 = vmatpush.msra.mxu0 0.0
      %1789 = vmatpush.msra.mxu0 0.0
      %1790 = vmatpush.msra.mxu0 0.0
      %1791 = vmatpush.msra.mxu0 0.0
      %1792 = vmatpush.msra.mxu0 0.0
      %1793 = vmatpush.msra.mxu0 0.0
      %1794 = vmatpush.msra.mxu0 %v1777
      %1795 = vmatmul.f32.gmra.mxu0 %v761
      %v1796 = vpop.f32.mrf.mxu0
      %v1797 = vadd.f32 0.0, %v1796
      %1798 = vdwg.mxu0
      %1799 = vmatpush.bf16.msra.mxu0 %v1754
      %1800 = vmatpush.bf16.msra.mxu0 %v1753
      %1801 = vmatpush.bf16.msra.mxu0 %v1752
      %1802 = vmatpush.bf16.msra.mxu0 %v1751
      %1803 = vmatpush.bf16.msra.mxu0 %v1750
      %1804 = vmatpush.bf16.msra.mxu0 %v1749
      %1805 = vmatpush.bf16.msra.mxu0 %v1748
      %1806 = vmatpush.bf16.msra.mxu0 %v1747
      %1807 = vmatmul.bf16.gmra.mxu0 %v1712
      %v1808 = vpop.f32.mrf.mxu0
      %v1809 = vadd.f32 %v1797, %v1808
      %v1810 = vpop.f32.mrf.mxu0
      %1811 = vdwg.mxu0
      %v1812 = vmul.f32 %v1809, 0.5
      %1813 = vst.msk [vmem:[%s702] sm:$0x1f] %vm713, %v1812
      %1814 = vst.msk [vmem:[%s706] sm:$0x1f] %vm713, %v710
      %p1815 = scmp.lt.s32.totalorder %s34, 1
      %s1816 = scalar_select %p1815, %s34, 1
      %s1817 = smul.addr %s1816, 8
      %s1818 = scalar_lea.vmem %s21, %s1817
      %p1819 = scmp.lt.s32.totalorder %s34, 1
      %s1820 = scalar_select %p1819, %s34, 1
      %s1821 = smul.addr %s1820, 8
      %s1822 = scalar_lea.vmem %s22, %s1821
      // Predicated region
      $region105: #{_lambda_.7} parent=103 // pred_check
        %p1823 = pneg %p503
      $region106: #{_lambda_.7} parent=103 // pred_check_branch
        %1825 = sbr.rel (%p1823) target = $region108
      $region107: #{_lambda_.7} parent=103 // pred_region
        _
      $region108: #{_lambda_.7} parent=103 // pred_fallthru
        _
      // Predicated region
      $region109: #{_lambda_.7} parent=103 // pred_check
        %p1826 = pneg %p529
      $region110: #{_lambda_.7} parent=103 // pred_check_branch
        %1828 = sbr.rel (%p1826) target = $region112
      $region111: #{_lambda_.7} parent=103 // pred_region
        _
      $region112: #{_lambda_.7} parent=103 // pred_fallthru
        _
    $region104: #{_lambda_.7} parent=5 // pred_fallthru
      _
    %p1829 = scmp.le.s32.totalorder 2, %s29
    // Predicated region
    $region113: #{_lambda_.7} parent=5 // pred_check
      %p1830 = pneg %p1829
    $region114: #{_lambda_.7} parent=5 // pred_check_branch
      %1832 = sbr.rel (%p1830) target = $region116
    $region115: #{_lambda_.7} parent=5 // pred_region
      %s1833 = ssub.s32 %s29, 2
      // Predicated region
      $region117: #{_lambda_.7} parent=115 // pred_check
        %p1834 = pneg %p509
      $region118: #{_lambda_.7} parent=115 // pred_check_branch
        %1836 = sbr.rel (%p1834) target = $region120
      $region119: #{_lambda_.7} parent=115 // pred_region
        %p1837 = scmp.lt.s32.totalorder %s35, 1
        %s1838 = scalar_select %p1837, %s35, 1
        %s1839 = smul.addr %s1838, 8
        %s1840 = scalar_lea.vmem %s21, %s1839
      $region120: #{_lambda_.7} parent=115 // pred_fallthru
        _
      // Predicated region
      $region121: #{_lambda_.7} parent=115 // pred_check
        %p1841 = pneg %p535
      $region122: #{_lambda_.7} parent=115 // pred_check_branch
        %1843 = sbr.rel (%p1841) target = $region124
      $region123: #{_lambda_.7} parent=115 // pred_region
        %p1844 = scmp.lt.s32.totalorder %s35, 1
        %s1845 = scalar_select %p1844, %s35, 1
        %s1846 = smul.addr %s1845, 8
        %s1847 = scalar_lea.vmem %s22, %s1846
      $region124: #{_lambda_.7} parent=115 // pred_fallthru
        _
    $region116: #{_lambda_.7} parent=5 // pred_fallthru
      _
  $region6: #{_lambda_.7} parent=0 // loop_footer
    %s33 = sadd.s32 1, %s29
  $region7: #{_lambda_.7} parent=0 // loop_footer_branch
    %28 = sbr.rel target = $region3
  $region8: #{_lambda_.7} parent=0 // loop_exit
    _

// kernel: _lambda_.11
$region0: #{_lambda_.11}
  #allocation0 [shape = 'u32[]', space=smem, size = 0x4, offset = 0x4, fixed_abs, tag = 'smem constant byte address 0x4 - core index']
  #allocation1 [shape = 'u32[72,128]{1,0:T(1,128)}', space=vmem, size = 0x9000, scoped, tag = 'internal scratch']
  #allocation2 [shape = 'f32[1,1]{1,0:T(1,128)S(1)}', space=vmem, size = 0x200, scoped, tag = 'scoped memory for _lambda_.11']
  %s0 = inlined_call_operand.vmem [shape: f32[2,8], index: 0, kind: input, shape index: {}]
  %s1 = inlined_call_operand.vmem [shape: f32[1,8], index: 1, kind: input, shape index: {}]
  %s2 = inlined_call_operand.vmem [shape: f32[1,8], index: 2, kind: input, shape index: {}]
  %s3 = inlined_call_operand.vmem [shape: f32[8,1], index: 3, kind: input, shape index: {}]
  %s4 = inlined_call_operand.<no memory space> [shape: f32[1,1], index: 4, kind: input, shape index: {}]
  %s5 = inlined_call_operand.vmem [shape: f32[2,1], index: 5, kind: output, shape index: {}]
  %s6 = sld [smem:[#allocation0]]
  $region30: #{_lambda_.11} parent=0
    _
  %s8 = ssub.s32 1, %s6
  %s9 = scalar_select 0, %s8, %s6
  %v10 = vstv %s4
  %11 = vst [vmem:[#allocation2] sm:$0x1] %v10
  // Predicated region
  $region2: #{_lambda_.11} parent=0 // pred_check
    _
  $region3: #{_lambda_.11} parent=0 // pred_check_branch
    %13 = sbr.rel (0) target = $region5
  $region4: #{_lambda_.11} parent=0 // pred_region
    _
  $region5: #{_lambda_.11} parent=0 // pred_fallthru
    _
  // Predicated region
  $region6: #{_lambda_.11} parent=0 // pred_check
    _
  $region7: #{_lambda_.11} parent=0 // pred_check_branch
    %15 = sbr.rel (0) target = $region9
  $region8: #{_lambda_.11} parent=0 // pred_region
    _
  $region9: #{_lambda_.11} parent=0 // pred_fallthru
    _
  // Predicated region
  $region10: #{_lambda_.11} parent=0 // pred_check
    _
  $region11: #{_lambda_.11} parent=0 // pred_check_branch
    %17 = sbr.rel (0) target = $region13
  $region12: #{_lambda_.11} parent=0 // pred_region
    _
  $region13: #{_lambda_.11} parent=0 // pred_fallthru
    _
  // Predicated region
  $region14: #{_lambda_.11} parent=0 // pred_check
    _
  $region15: #{_lambda_.11} parent=0 // pred_check_branch
    %19 = sbr.rel (0) target = $region17
  $region16: #{_lambda_.11} parent=0 // pred_region
    _
  $region17: #{_lambda_.11} parent=0 // pred_fallthru
    _
  // Predicated region
  $region18: #{_lambda_.11} parent=0 // pred_check
    _
  $region19: #{_lambda_.11} parent=0 // pred_check_branch
    %21 = sbr.rel (0) target = $region21
  $region20: #{_lambda_.11} parent=0 // pred_region
    _
  $region21: #{_lambda_.11} parent=0 // pred_fallthru
    _
  %v22 = vld [vmem:[%s0] sm:$0x3]
  %v23 = vld [vmem:[%s1] sm:$0x1]
  %v24 = vld [vmem:[%s2] sm:$0x1]
  %vm25 = vcmask 58368
  %v26 = vsel %vm25, %v22, 0.0
  %27 = vadd.xlane.f32.xlu0 %v26
  %v28 = vpop.xlane.xlu0 %27
  %v29 = vrcp.pop 8.0
  %v30 = vmul.f32 8.0, %v29
  %v31 = vsub.f32 1.0, %v30
  %v32 = vmul.f32 %v29, %v31
  %v33 = vadd.f32 %v29, %v32
  %vm34 = vweird.f32 %v29
  %v35 = vsel %vm34, %v29, %v33
  %v36 = vmul.f32 %v28, %v35
  %v37 = vsub.f32 %v22, %v36
  %v38 = vmul.f32 %v37, %v37
  %v39 = vsel %vm25, %v38, 0.0
  %40 = vadd.xlane.f32.xlu0 %v39
  %v41 = vpop.xlane.xlu0 %40
  %v42 = vmul.f32 %v41, %v35
  %v43 = vadd.f32 %v42, 1e-06
  %v44 = vrsqrt.pop %v43
  %v45 = vmul.f32 %v44, %v43
  %v46 = vmul.f32 %v45, %v44
  %v47 = vmul.f32 0.5, %v46
  %v48 = vsub.f32 1.5, %v47
  %v49 = vmul.f32 %v44, %v48
  %vm50 = vweird.f32 %v43
  %vm51 = vweird.f32 %v44
  %vm52 = vmor %vm50, %vm51
  %v53 = vsel %vm52, %v44, %v49
  %v54 = vmul.f32 %v37, %v53
  %v56 = vperm.slane %v23, 0
  %v58 = vmul.f32 %v54, %v56
  %v60 = vperm.slane %v24, 0
  %v62 = vadd.f32 %v58, %v60
  %v63 = vld [vmem:[%s3] sm:$0xff]
  %v64 = vld [vmem:[#allocation2] sm:$0x1]
  %v66 = vperm.slane %v64, 0
  %vm68 = vcmask 64512
  %v70 = vsel %vm68, %v62, 0
  %72 = vmatpush.msra.mxu0 0.0
  %73 = vmatpush.msra.mxu0 0.0
  %74 = vmatpush.msra.mxu0 0.0
  %75 = vmatpush.msra.mxu0 0.0
  %76 = vmatpush.msra.mxu0 0.0
  %77 = vmatpush.msra.mxu0 0.0
  %78 = vmatpush.msra.mxu0 0.0
  %79 = vmatpush.msra.mxu0 0.0
  %80 = vmatpush.msra.mxu0 0.0
  %81 = vmatpush.msra.mxu0 0.0
  %82 = vmatpush.msra.mxu0 0.0
  %83 = vmatpush.msra.mxu0 0.0
  %84 = vmatpush.msra.mxu0 0.0
  %85 = vmatpush.msra.mxu0 0.0
  %86 = vmatpush.msra.mxu0 0.0
  %87 = vmatpush.msra.mxu0 %v63
  %88 = vmatmul.f32.gmra.mxu0 %v70
  %v89 = vpop.f32.mrf.mxu0
  %v90 = vadd.f32 %v66, %v89
  %91 = vdwg.mxu0
  %vm92 = vcmask 1024
  %93 = vst.msk [vmem:[%s5] sm:$0x3] %vm92, %v90
  // Predicated region
  $region22: #{_lambda_.11} parent=0 // pred_check
    _
  $region23: #{_lambda_.11} parent=0 // pred_check_branch
    %95 = sbr.rel (0) target = $region25
  $region24: #{_lambda_.11} parent=0 // pred_region
    _
  $region25: #{_lambda_.11} parent=0 // pred_fallthru
    _
  // Predicated region
  $region26: #{_lambda_.11} parent=0 // pred_check
    _
  $region27: #{_lambda_.11} parent=0 // pred_check_branch
    %97 = sbr.rel (0) target = $region29
  $region28: #{_lambda_.11} parent=0 // pred_region
    _
  $region29: #{_lambda_.11} parent=0 // pred_fallthru
    _

</llo_original>
